<compile_context>
chip_gen: v6e
topology: v6e:2x2x1
jax: 0.10.0
libtpu: 0.0.40
codegen_flags: <defaults>
</compile_context>

<pallas_src>
import functools
import math

import jax
import jax.numpy as jnp
from jax.experimental import pallas as pl
from jax.experimental.pallas import tpu as pltpu


def _cdiv(a, b):
    return -(-a // b)


def _round_up(a, b):
    return _cdiv(a, b) * b


# ----------------------------------------------------------------------------
# Kernel 1: M-tiled GEMM + bias + PReLU  (used for the stride-2 conv0 layers)
# ----------------------------------------------------------------------------
def _gemm_bias_prelu_kernel(p_ref, w_ref, b_ref, a_ref, o_ref):
    acc = jnp.dot(p_ref[...], w_ref[...], preferred_element_type=jnp.float32)
    acc = acc + b_ref[...]
    acc = jnp.where(acc >= 0.0, acc, a_ref[...] * acc)
    o_ref[...] = acc.astype(o_ref.dtype)


def _gemm_bias_prelu(patches, w_mat, bias, alpha):
    """patches: (M, K), w_mat: (K, N).  Returns (M, N) bf16."""
    M, K = patches.shape
    N = w_mat.shape[1]
    TM = 1024
    if M <= TM:
        TM = max(8, _round_up(M, 8))
    Mp = _round_up(M, TM)
    if Mp != M:
        patches = jnp.pad(patches, ((0, Mp - M), (0, 0)))

    flops = 2 * Mp * K * N
    bytes_acc = Mp * K * 2 + K * N * 2 + Mp * N * 2 + 2 * N * 4

    out = pl.pallas_call(
        _gemm_bias_prelu_kernel,
        out_shape=jax.ShapeDtypeStruct((Mp, N), jnp.bfloat16),
        grid=(Mp // TM,),
        in_specs=[
            pl.BlockSpec((TM, K), lambda i: (i, 0)),
            pl.BlockSpec((K, N), lambda i: (0, 0)),
            pl.BlockSpec((1, N), lambda i: (0, 0)),
            pl.BlockSpec((1, N), lambda i: (0, 0)),
        ],
        out_specs=pl.BlockSpec((TM, N), lambda i: (i, 0)),
        compiler_params=pltpu.CompilerParams(
            dimension_semantics=("parallel",),
            vmem_limit_bytes=32 * 1024 * 1024),
        cost_estimate=pl.CostEstimate(flops=flops, transcendentals=0,
                                      bytes_accessed=bytes_acc),
    )(patches.astype(jnp.bfloat16), w_mat.astype(jnp.bfloat16),
      bias.reshape(1, N).astype(jnp.float32),
      alpha.reshape(1, N).astype(jnp.float32))
    return out[:M]


def _im2col(xp, k, stride, hout, wout):
    """xp: padded NHWC input.  Returns (N, hout, wout, k*k*Cin); K order (ki,kj,cin)."""
    cols = []
    for ki in range(k):
        for kj in range(k):
            cols.append(xp[:, ki:ki + stride * hout:stride,
                            kj:kj + stride * wout:stride, :])
    return jnp.concatenate(cols, axis=-1)


def conv3x3_s2(x, w, b, alpha):
    """Stride-2 3x3 conv + PReLU.  x: NHWC, w: torch Conv2d layout (Cout,Cin,3,3)."""
    n, h, wd, cin = x.shape
    cout = w.shape[0]
    stride, pad = 2, 1
    hout = (h + 2 * pad - 3) // stride + 1
    wout = (wd + 2 * pad - 3) // stride + 1
    xp = jnp.pad(x.astype(jnp.bfloat16), ((0, 0), (pad, pad), (pad, pad), (0, 0)))
    patches = _im2col(xp, 3, stride, hout, wout).reshape(n * hout * wout, 9 * cin)
    w_mat = jnp.transpose(w, (2, 3, 1, 0)).reshape(9 * cin, cout)
    out = _gemm_bias_prelu(patches, w_mat, b, alpha)
    return out.reshape(n, hout, wout, cout)


# ----------------------------------------------------------------------------
# Kernel 2: fused stride-1 3x3 conv (+bias +PReLU +residual), input resident in
# VMEM, patches built in-kernel as 9 accumulated MXU dots.
# ----------------------------------------------------------------------------
def _conv3x3_s1_kernel(x_ref, w_ref, b_ref, *rest, to, wout, cin, cout,
                       apply_prelu, add_residual):
    o_ref = rest[-1]
    pos = 0
    a_ref = None
    r_ref = None
    if apply_prelu:
        a_ref = rest[pos]
        pos += 1
    if add_residual:
        r_ref = rest[pos]
        pos += 1

    r0 = pl.program_id(1) * to
    acc = jnp.zeros((to * wout, cout), jnp.float32)
    for ki in range(3):
        for kj in range(3):
            xs = x_ref[pl.ds(r0 + ki, to), pl.ds(kj, wout), :]
            xs = xs.reshape(to * wout, cin)
            acc = acc + jnp.dot(xs, w_ref[ki * 3 + kj],
                                preferred_element_type=jnp.float32)
    acc = acc + b_ref[...]
    if apply_prelu:
        acc = jnp.where(acc >= 0.0, acc, a_ref[...] * acc)
    if add_residual:
        acc = acc + r_ref[...].astype(jnp.float32).reshape(to * wout, cout)
    o_ref[...] = acc.reshape(to, wout, cout).astype(o_ref.dtype)


def conv3x3_s1(x, w3, b, alpha=None, residual=None):
    """Stride-1 3x3 conv, padding 1.  x: NHWC, w3: (3,3,Cin,Cout)."""
    n, h, wd, cin = x.shape
    cout = w3.shape[-1]
    hout, wout = h, wd
    TO = max(1, min(hout, _cdiv(512, wout)))          # ~512 GEMM rows per tile
    n_tiles = _cdiv(hout, TO)
    hpad = n_tiles * TO
    hp, wp = hpad + 2, wout + 2

    xp = jnp.pad(x.astype(jnp.bfloat16),
                 ((0, 0), (1, 1 + hpad - hout), (1, 1), (0, 0)))
    w9 = w3.reshape(9, cin, cout).astype(jnp.bfloat16)

    apply_prelu = alpha is not None
    add_residual = residual is not None

    args = [xp, w9, b.reshape(1, cout).astype(jnp.float32)]
    in_specs = [
        # Full padded image, resident across the row-tile axis (fetched once
        # per batch element) -> no im2col HBM materialization.
        pl.BlockSpec((None, hp, wp, cin), lambda nn, ii: (nn, 0, 0, 0)),
        pl.BlockSpec((9, cin, cout), lambda nn, ii: (0, 0, 0)),
        pl.BlockSpec((1, cout), lambda nn, ii: (0, 0)),
    ]
    if apply_prelu:
        args.append(alpha.reshape(1, cout).astype(jnp.float32))
        in_specs.append(pl.BlockSpec((1, cout), lambda nn, ii: (0, 0)))
    if add_residual:
        rp = jnp.pad(residual.astype(jnp.bfloat16),
                     ((0, 0), (0, hpad - hout), (0, 0), (0, 0)))
        args.append(rp)
        in_specs.append(pl.BlockSpec((None, TO, wout, cout),
                                     lambda nn, ii: (nn, ii, 0, 0)))

    kernel = functools.partial(_conv3x3_s1_kernel, to=TO, wout=wout,
                               cin=cin, cout=cout,
                               apply_prelu=apply_prelu,
                               add_residual=add_residual)

    flops = 2 * n * hpad * wout * 9 * cin * cout
    bytes_acc = (n * hp * wp * cin * 2 + 9 * cin * cout * 2
                 + n * hpad * wout * cout * 2
                 + (n * hpad * wout * cout * 2 if add_residual else 0))

    out = pl.pallas_call(
        kernel,
        out_shape=jax.ShapeDtypeStruct((n, hpad, wout, cout), jnp.bfloat16),
        grid=(n, n_tiles),
        in_specs=in_specs,
        out_specs=pl.BlockSpec((None, TO, wout, cout),
                               lambda nn, ii: (nn, ii, 0, 0)),
        compiler_params=pltpu.CompilerParams(
            dimension_semantics=("parallel", "parallel"),
            vmem_limit_bytes=32 * 1024 * 1024),
        cost_estimate=pl.CostEstimate(flops=flops, transcendentals=0,
                                      bytes_accessed=bytes_acc),
    )(*args)
    return out[:, :hout]


# ----------------------------------------------------------------------------
# ConvTranspose2d(k=4, s=2, p=1) -> equivalent stride-1 3x3 conv with 4 phases
# ----------------------------------------------------------------------------
def _deconv4s2_as_conv3(w_t):
    """w_t: torch ConvTranspose2d weight (Cin, Cout, 4, 4).
    Returns (3, 3, Cin, 2, 2, Cout) stride-1 conv weight (phase-decomposed)."""
    cin, cout = w_t.shape[0], w_t.shape[1]
    w3 = jnp.zeros((3, 3, cin, 2, 2, cout), w_t.dtype)
    taps = {0: ((-1, 3), (0, 1)), 1: ((0, 2), (1, 0))}   # phase -> (dy, ky)
    for r in (0, 1):
        for dy, ky in taps[r]:
            for s in (0, 1):
                for dx, kx in taps[s]:
                    w3 = w3.at[dy + 1, dx + 1, :, r, s, :].set(w_t[:, :, ky, kx])
    return w3


def _pixel_shuffle2(x):
    """(N, H, W, 4*C) with channel order (r, s, c) -> (N, 2H, 2W, C)."""
    n, h, w, c4 = x.shape
    c = c4 // 4
    x = x.reshape(n, h, w, 2, 2, c)
    x = jnp.transpose(x, (0, 1, 3, 2, 4, 5))
    return x.reshape(n, 2 * h, 2 * w, c)


# ----------------------------------------------------------------------------
# Bilinear resize, PyTorch F.interpolate(mode='bilinear', align_corners=False)
# ----------------------------------------------------------------------------
# TODO(synk): kept as plain-JAX gather+lerp glue; not lowered into a Pallas kernel.
def bilinear_resize(x, out_h, out_w):
    n, h, w, c = x.shape
    if out_h == h and out_w == w:
        return x

    def idx(out_size, in_size):
        i = jnp.arange(out_size, dtype=jnp.float32)
        src = (i + 0.5) * (in_size / out_size) - 0.5
        src = jnp.maximum(src, 0.0)
        i0 = jnp.minimum(jnp.floor(src).astype(jnp.int32), in_size - 1)
        i1 = jnp.minimum(i0 + 1, in_size - 1)
        lam = jnp.clip(src - i0.astype(jnp.float32), 0.0, 1.0)
        return i0, i1, lam

    y0, y1, wy = idx(out_h, h)
    x0, x1, wx = idx(out_w, w)
    top = x[:, y0, :, :]
    bot = x[:, y1, :, :]
    v = top * (1.0 - wy)[None, :, None, None] + bot * wy[None, :, None, None]
    left = v[:, :, x0, :]
    right = v[:, :, x1, :]
    return (left * (1.0 - wx)[None, None, :, None]
            + right * wx[None, None, :, None])


# ----------------------------------------------------------------------------
# Deterministic parameter construction (mirrors IFBlock.__init__ shapes)
# ----------------------------------------------------------------------------
def _conv_p(key, cin, cout, k):
    kw_, kb = jax.random.split(key)
    fan_in = cin * k * k
    w = jax.random.normal(kw_, (cout, cin, k, k), jnp.float32) / math.sqrt(fan_in)
    b = 0.01 * jax.random.normal(kb, (cout,), jnp.float32)
    a = jnp.full((cout,), 0.25, jnp.float32)  # PReLU default init
    return w, b, a


def _convT_p(key, cin, cout, k, with_prelu):
    kw_, kb = jax.random.split(key)
    fan_in = cin * k * k
    w = jax.random.normal(kw_, (cin, cout, k, k), jnp.float32) / math.sqrt(fan_in)
    b = 0.01 * jax.random.normal(kb, (cout,), jnp.float32)
    if with_prelu:
        return w, b, jnp.full((cout,), 0.25, jnp.float32)
    return w, b


def init_ifblock_params(key, in_planes, c):
    ks = jax.random.split(key, 16)
    params = {}
    params["conv0"] = (_conv_p(ks[0], in_planes, c // 2, 3),
                       _conv_p(ks[1], c // 2, c, 3))
    params["convblocks"] = []
    for i in range(4):
        params["convblocks"].append((_conv_p(ks[2 + 2 * i], c, c, 3),
                                     _conv_p(ks[3 + 2 * i], c, c, 3)))
    params["conv1"] = (_convT_p(ks[10], c, c // 2, 4, True),
                       _convT_p(ks[11], c // 2, 4, 4, False))
    params["conv2"] = (_convT_p(ks[12], c, c // 2, 4, True),
                       _convT_p(ks[13], c // 2, 1, 4, False))
    return params


# ----------------------------------------------------------------------------
# IFBlock forward
# ----------------------------------------------------------------------------
def ifblock_forward(params, x_nchw, flow_nchw, scale):
    x = jnp.transpose(x_nchw, (0, 2, 3, 1)).astype(jnp.float32)
    flow = jnp.transpose(flow_nchw, (0, 2, 3, 1)).astype(jnp.float32)
    n, h, w, _ = x.shape

    hs = int(math.floor(h * (1.0 / scale)))
    ws = int(math.floor(w * (1.0 / scale)))
    x = bilinear_resize(x, hs, ws)
    flow = bilinear_resize(flow, hs, ws) * (1.0 / scale)

    feat = jnp.concatenate([x, flow], axis=-1).astype(jnp.bfloat16)

    # conv0: two stride-2 conv+PReLU layers (im2col + tiled GEMM kernel)
    (w0, b0, a0), (w1, b1, a1) = params["conv0"]
    feat = conv3x3_s2(feat, w0, b0, a0)
    feat = conv3x3_s2(feat, w1, b1, a1)

    # residual conv blocks: fused stride-1 conv kernel (bias+PReLU+residual)
    for (wA, bA, aA), (wB, bB, aB) in params["convblocks"]:
        wA3 = jnp.transpose(wA, (2, 3, 1, 0))
        wB3 = jnp.transpose(wB, (2, 3, 1, 0))
        t = conv3x3_s1(feat, wA3, bA, aA)
        feat = conv3x3_s1(t, wB3, bB, aB, residual=feat)

    c = feat.shape[-1]
    half = c // 2
    (ft0w, ft0b, ft0a), (ft1w, ft1b) = params["conv1"]
    (mt0w, mt0b, mt0a), (mt1w, mt1b) = params["conv2"]

    # Head stage 1: both first deconvs fused (channel concat), phase-decomposed
    w3_1 = jnp.concatenate([_deconv4s2_as_conv3(ft0w),
                            _deconv4s2_as_conv3(mt0w)], axis=-1)
    w3_1 = w3_1.reshape(3, 3, c, 4 * c)
    b_1 = jnp.tile(jnp.concatenate([ft0b, mt0b]), 4)
    a_1 = jnp.tile(jnp.concatenate([ft0a, mt0a]), 4)
    hidden = _pixel_shuffle2(conv3x3_s1(feat, w3_1, b_1, a_1))   # (N, 2Hf, 2Wf, c)

    # Head stage 2: both second deconvs fused with block-diagonal weights
    w3_2 = jnp.zeros((3, 3, c, 2, 2, 5), jnp.float32)
    w3_2 = w3_2.at[:, :, :half, :, :, :4].set(_deconv4s2_as_conv3(ft1w))
    w3_2 = w3_2.at[:, :, half:, :, :, 4:].set(_deconv4s2_as_conv3(mt1w))
    w3_2 = w3_2.reshape(3, 3, c, 4 * 5)
    b_2 = jnp.tile(jnp.concatenate([ft1b, mt1b]), 4)
    head = _pixel_shuffle2(conv3x3_s1(hidden, w3_2, b_2, alpha=None))  # (N,4Hf,4Wf,5)

    fl = head[..., :4].astype(jnp.float32)
    mk = head[..., 4:5].astype(jnp.float32)

    hf, wf = fl.shape[1], fl.shape[2]
    ho = int(math.floor(hf * scale))
    wo = int(math.floor(wf * scale))
    fl = bilinear_resize(fl, ho, wo) * scale
    mk = bilinear_resize(mk, ho, wo)

    return jnp.transpose(fl, (0, 3, 1, 2)), jnp.transpose(mk, (0, 3, 1, 2))


# ----------------------------------------------------------------------------
if __name__ == "__main__":
    key = jax.random.PRNGKey(0)
    k_param, k_x, k_flow = jax.random.split(key, 3)

    B, CX, CF, H, W = 2, 6, 4, 16, 16        # x channels + flow channels = in_planes
    in_planes, c = CX + CF, 32
    scale = 2.0

    params = init_ifblock_params(k_param, in_planes, c)
    x = jax.random.normal(k_x, (B, CX, H, W), jnp.float32)
    flow = jax.random.normal(k_flow, (B, CF, H, W), jnp.float32)

    fwd = jax.jit(lambda p, xx, ff: ifblock_forward(p, xx, ff, scale))
    flow_out, mask_out = fwd(params, x, flow)
    jax.block_until_ready((flow_out, mask_out))

    assert flow_out.shape == (B, 4, H, W), flow_out.shape
    assert mask_out.shape == (B, 1, H, W), mask_out.shape
    assert bool(jnp.all(jnp.isfinite(flow_out))) and bool(jnp.all(jnp.isfinite(mask_out)))
    print("KERNEL_OK")
</pallas_src>

<mosaic_0001>
module attributes {stable_mosaic.version = 11 : i64} {
  func.func @_gemm_bias_prelu_kernel(%arg0: i32, %arg1: memref<32x90xbf16, #tpu.memory_space<vmem>>, %arg2: memref<90x16xbf16, #tpu.memory_space<vmem>>, %arg3: memref<1x16xf32, #tpu.memory_space<vmem>>, %arg4: memref<1x16xf32, #tpu.memory_space<vmem>>, %arg5: memref<32x16xbf16, #tpu.memory_space<vmem>>) attributes {dimension_semantics = [#tpu.dimension_semantics<parallel>], iteration_bounds = array<i64: 1>, scalar_prefetch = 0 : i64, scratch_operands = 0 : i64, tpu.core_type = #tpu.core_type<tc>, window_params = [{transform_indices = @transform_0, window_bounds = array<i64: 32, 90>}, {pipeline_mode = #tpu.pipeline_mode<synchronous>, transform_indices = @transform_1, window_bounds = array<i64: 90, 16>}, {pipeline_mode = #tpu.pipeline_mode<synchronous>, transform_indices = @transform_2, window_bounds = array<i64: 1, 16>}, {pipeline_mode = #tpu.pipeline_mode<synchronous>, transform_indices = @transform_3, window_bounds = array<i64: 1, 16>}, {transform_indices = @transform_4, window_bounds = array<i64: 32, 16>}]} {
    %c0 = arith.constant 0 : index
    %c0_0 = arith.constant 0 : index
    %0 = vector.load %arg1[%c0, %c0_0] : memref<32x90xbf16, #tpu.memory_space<vmem>>, vector<32x90xbf16>
    %c0_1 = arith.constant 0 : index
    %c0_2 = arith.constant 0 : index
    %1 = vector.load %arg2[%c0_1, %c0_2] : memref<90x16xbf16, #tpu.memory_space<vmem>>, vector<90x16xbf16>
    %cst = arith.constant dense<0.000000e+00> : vector<32x16xf32>
    %2 = tpu.matmul %0, %1, %cst {dimension_numbers = #tpu.dot_dimension_numbers<[1], [0], [0], [1], [0, 0, 1, 1], [], []>} : vector<32x90xbf16>, vector<90x16xbf16>, vector<32x16xf32> -> vector<32x16xf32>
    %c0_3 = arith.constant 0 : index
    %c0_4 = arith.constant 0 : index
    %3 = vector.load %arg3[%c0_3, %c0_4] : memref<1x16xf32, #tpu.memory_space<vmem>>, vector<1x16xf32>
    %4 = vector.broadcast %3 : vector<1x16xf32> to vector<32x16xf32>
    %5 = arith.addf %2, %4 : vector<32x16xf32>
    %cst_5 = arith.constant 0.000000e+00 : f32
    %6 = vector.broadcast %cst_5 : f32 to vector<32x16xf32>
    %7 = arith.cmpf oge, %5, %6 : vector<32x16xf32>
    %c0_6 = arith.constant 0 : index
    %c0_7 = arith.constant 0 : index
    %8 = vector.load %arg4[%c0_6, %c0_7] : memref<1x16xf32, #tpu.memory_space<vmem>>, vector<1x16xf32>
    %9 = vector.broadcast %8 : vector<1x16xf32> to vector<32x16xf32>
    %10 = arith.mulf %9, %5 : vector<32x16xf32>
    %11 = arith.select %7, %5, %10 : vector<32x16xi1>, vector<32x16xf32>
    %12 = arith.truncf %11 : vector<32x16xf32> to vector<32x16xbf16>
    %c0_8 = arith.constant 0 : index
    %c0_9 = arith.constant 0 : index
    %13 = vector.load %arg5[%c0_8, %c0_9] : memref<32x16xbf16, #tpu.memory_space<vmem>>, vector<32x16xbf16>
    tpu.vector_store %arg5[%c0_8, %c0_9], %12 {strides = array<i32>} : memref<32x16xbf16, #tpu.memory_space<vmem>>, vector<32x16xbf16>,
    return
  }
  func.func @transform_0(%arg0: i32) -> (i32, i32) {
    %c0_i32 = arith.constant 0 : i32
    %c0_i32_0 = arith.constant 0 : i32
    return %arg0, %c0_i32 : i32, i32
  }
  func.func @transform_1(%arg0: i32) -> (i32, i32) {
    %c0_i32 = arith.constant 0 : i32
    %c0_i32_0 = arith.constant 0 : i32
    %c0_i32_1 = arith.constant 0 : i32
    return %c0_i32, %c0_i32_0 : i32, i32
  }
  func.func @transform_2(%arg0: i32) -> (i32, i32) {
    %c0_i32 = arith.constant 0 : i32
    %c0_i32_0 = arith.constant 0 : i32
    %c0_i32_1 = arith.constant 0 : i32
    return %c0_i32, %c0_i32_0 : i32, i32
  }
  func.func @transform_3(%arg0: i32) -> (i32, i32) {
    %c0_i32 = arith.constant 0 : i32
    %c0_i32_0 = arith.constant 0 : i32
    %c0_i32_1 = arith.constant 0 : i32
    return %c0_i32, %c0_i32_0 : i32, i32
  }
  func.func @transform_4(%arg0: i32) -> (i32, i32) {
    %c0_i32 = arith.constant 0 : i32
    %c0_i32_0 = arith.constant 0 : i32
    return %arg0, %c0_i32 : i32, i32
  }
}

module attributes {stable_mosaic.version = 11 : i64} {
  func.func @_gemm_bias_prelu_kernel(%arg0: i32, %arg1: memref<8x144xbf16, #tpu.memory_space<vmem>>, %arg2: memref<144x32xbf16, #tpu.memory_space<vmem>>, %arg3: memref<1x32xf32, #tpu.memory_space<vmem>>, %arg4: memref<1x32xf32, #tpu.memory_space<vmem>>, %arg5: memref<8x32xbf16, #tpu.memory_space<vmem>>) attributes {dimension_semantics = [#tpu.dimension_semantics<parallel>], iteration_bounds = array<i64: 1>, scalar_prefetch = 0 : i64, scratch_operands = 0 : i64, tpu.core_type = #tpu.core_type<tc>, window_params = [{transform_indices = @transform_0, window_bounds = array<i64: 8, 144>}, {pipeline_mode = #tpu.pipeline_mode<synchronous>, transform_indices = @transform_1, window_bounds = array<i64: 144, 32>}, {pipeline_mode = #tpu.pipeline_mode<synchronous>, transform_indices = @transform_2, window_bounds = array<i64: 1, 32>}, {pipeline_mode = #tpu.pipeline_mode<synchronous>, transform_indices = @transform_3, window_bounds = array<i64: 1, 32>}, {transform_indices = @transform_4, window_bounds = array<i64: 8, 32>}]} {
    %c0 = arith.constant 0 : index
    %c0_0 = arith.constant 0 : index
    %0 = vector.load %arg1[%c0, %c0_0] : memref<8x144xbf16, #tpu.memory_space<vmem>>, vector<8x144xbf16>
    %c0_1 = arith.constant 0 : index
    %c0_2 = arith.constant 0 : index
    %1 = vector.load %arg2[%c0_1, %c0_2] : memref<144x32xbf16, #tpu.memory_space<vmem>>, vector<144x32xbf16>
    %cst = arith.constant dense<0.000000e+00> : vector<8x32xf32>
    %2 = tpu.matmul %0, %1, %cst {dimension_numbers = #tpu.dot_dimension_numbers<[1], [0], [0], [1], [0, 0, 1, 1], [], []>} : vector<8x144xbf16>, vector<144x32xbf16>, vector<8x32xf32> -> vector<8x32xf32>
    %c0_3 = arith.constant 0 : index
    %c0_4 = arith.constant 0 : index
    %3 = vector.load %arg3[%c0_3, %c0_4] : memref<1x32xf32, #tpu.memory_space<vmem>>, vector<1x32xf32>
    %4 = vector.broadcast %3 : vector<1x32xf32> to vector<8x32xf32>
    %5 = arith.addf %2, %4 : vector<8x32xf32>
    %cst_5 = arith.constant 0.000000e+00 : f32
    %6 = vector.broadcast %cst_5 : f32 to vector<8x32xf32>
    %7 = arith.cmpf oge, %5, %6 : vector<8x32xf32>
    %c0_6 = arith.constant 0 : index
    %c0_7 = arith.constant 0 : index
    %8 = vector.load %arg4[%c0_6, %c0_7] : memref<1x32xf32, #tpu.memory_space<vmem>>, vector<1x32xf32>
    %9 = vector.broadcast %8 : vector<1x32xf32> to vector<8x32xf32>
    %10 = arith.mulf %9, %5 : vector<8x32xf32>
    %11 = arith.select %7, %5, %10 : vector<8x32xi1>, vector<8x32xf32>
    %12 = arith.truncf %11 : vector<8x32xf32> to vector<8x32xbf16>
    %c0_8 = arith.constant 0 : index
    %c0_9 = arith.constant 0 : index
    %13 = vector.load %arg5[%c0_8, %c0_9] : memref<8x32xbf16, #tpu.memory_space<vmem>>, vector<8x32xbf16>
    tpu.vector_store %arg5[%c0_8, %c0_9], %12 {strides = array<i32>} : memref<8x32xbf16, #tpu.memory_space<vmem>>, vector<8x32xbf16>,
    return
  }
  func.func @transform_0(%arg0: i32) -> (i32, i32) {
    %c0_i32 = arith.constant 0 : i32
    %c0_i32_0 = arith.constant 0 : i32
    return %arg0, %c0_i32 : i32, i32
  }
  func.func @transform_1(%arg0: i32) -> (i32, i32) {
    %c0_i32 = arith.constant 0 : i32
    %c0_i32_0 = arith.constant 0 : i32
    %c0_i32_1 = arith.constant 0 : i32
    return %c0_i32, %c0_i32_0 : i32, i32
  }
  func.func @transform_2(%arg0: i32) -> (i32, i32) {
    %c0_i32 = arith.constant 0 : i32
    %c0_i32_0 = arith.constant 0 : i32
    %c0_i32_1 = arith.constant 0 : i32
    return %c0_i32, %c0_i32_0 : i32, i32
  }
  func.func @transform_3(%arg0: i32) -> (i32, i32) {
    %c0_i32 = arith.constant 0 : i32
    %c0_i32_0 = arith.constant 0 : i32
    %c0_i32_1 = arith.constant 0 : i32
    return %c0_i32, %c0_i32_0 : i32, i32
  }
  func.func @transform_4(%arg0: i32) -> (i32, i32) {
    %c0_i32 = arith.constant 0 : i32
    %c0_i32_0 = arith.constant 0 : i32
    return %arg0, %c0_i32 : i32, i32
  }
}

module attributes {stable_mosaic.version = 11 : i64} {
  func.func @_conv3x3_s1_kernel(%arg0: i32, %arg1: i32, %arg2: memref<1x4x4x32xbf16, #tpu.memory_space<vmem>>, %arg3: memref<9x32x32xbf16, #tpu.memory_space<vmem>>, %arg4: memref<1x32xf32, #tpu.memory_space<vmem>>, %arg5: memref<1x32xf32, #tpu.memory_space<vmem>>, %arg6: memref<1x2x2x32xbf16, #tpu.memory_space<vmem>>) attributes {dimension_semantics = [#tpu.dimension_semantics<parallel>, #tpu.dimension_semantics<parallel>], iteration_bounds = array<i64: 2, 1>, scalar_prefetch = 0 : i64, scratch_operands = 0 : i64, tpu.core_type = #tpu.core_type<tc>, window_params = [{transform_indices = @transform_0, window_bounds = array<i64: 1, 4, 4, 32>}, {pipeline_mode = #tpu.pipeline_mode<synchronous>, transform_indices = @transform_1, window_bounds = array<i64: 9, 32, 32>}, {pipeline_mode = #tpu.pipeline_mode<synchronous>, transform_indices = @transform_2, window_bounds = array<i64: 1, 32>}, {pipeline_mode = #tpu.pipeline_mode<synchronous>, transform_indices = @transform_3, window_bounds = array<i64: 1, 32>}, {transform_indices = @transform_4, window_bounds = array<i64: 1, 2, 2, 32>}]} {
    %c2_i32 = arith.constant 2 : i32
    %0 = arith.muli %arg1, %c2_i32 : i32
    %cst = arith.constant 0.000000e+00 : f32
    %1 = vector.broadcast %cst : f32 to vector<4x32xf32>
    %c0_i32 = arith.constant 0 : i32
    %2 = arith.addi %0, %c0_i32 : i32
    %c0 = arith.constant 0 : index
    %3 = arith.index_cast %2 : i32 to index
    %c0_0 = arith.constant 0 : index
    %c0_1 = arith.constant 0 : index
    %4 = vector.load %arg2[%c0, %3, %c0_0, %c0_1] : memref<1x4x4x32xbf16, #tpu.memory_space<vmem>>, vector<1x2x2x32xbf16>
    %5 = vector.shape_cast %4 : vector<1x2x2x32xbf16> to vector<2x2x32xbf16>
    %6 = vector.shape_cast %5 : vector<2x2x32xbf16> to vector<4x32xbf16>
    %c0_2 = arith.constant 0 : index
    %c0_3 = arith.constant 0 : index
    %c0_4 = arith.constant 0 : index
    %7 = vector.load %arg3[%c0_2, %c0_3, %c0_4] : memref<9x32x32xbf16, #tpu.memory_space<vmem>>, vector<1x32x32xbf16>
    %8 = vector.shape_cast %7 : vector<1x32x32xbf16> to vector<32x32xbf16>
    %cst_5 = arith.constant dense<0.000000e+00> : vector<4x32xf32>
    %9 = tpu.matmul %6, %8, %cst_5 {dimension_numbers = #tpu.dot_dimension_numbers<[1], [0], [0], [1], [0, 0, 1, 1], [], []>} : vector<4x32xbf16>, vector<32x32xbf16>, vector<4x32xf32> -> vector<4x32xf32>
    %10 = arith.addf %1, %9 : vector<4x32xf32>
    %c0_i32_6 = arith.constant 0 : i32
    %11 = arith.addi %0, %c0_i32_6 : i32
    %c0_7 = arith.constant 0 : index
    %12 = arith.index_cast %11 : i32 to index
    %c1 = arith.constant 1 : index
    %c0_8 = arith.constant 0 : index
    %13 = vector.load %arg2[%c0_7, %12, %c1, %c0_8] : memref<1x4x4x32xbf16, #tpu.memory_space<vmem>>, vector<1x2x2x32xbf16>
    %14 = vector.shape_cast %13 : vector<1x2x2x32xbf16> to vector<2x2x32xbf16>
    %15 = vector.shape_cast %14 : vector<2x2x32xbf16> to vector<4x32xbf16>
    %c1_9 = arith.constant 1 : index
    %c0_10 = arith.constant 0 : index
    %c0_11 = arith.constant 0 : index
    %16 = vector.load %arg3[%c1_9, %c0_10, %c0_11] : memref<9x32x32xbf16, #tpu.memory_space<vmem>>, vector<1x32x32xbf16>
    %17 = vector.shape_cast %16 : vector<1x32x32xbf16> to vector<32x32xbf16>
    %cst_12 = arith.constant dense<0.000000e+00> : vector<4x32xf32>
    %18 = tpu.matmul %15, %17, %cst_12 {dimension_numbers = #tpu.dot_dimension_numbers<[1], [0], [0], [1], [0, 0, 1, 1], [], []>} : vector<4x32xbf16>, vector<32x32xbf16>, vector<4x32xf32> -> vector<4x32xf32>
    %19 = arith.addf %10, %18 : vector<4x32xf32>
    %c0_i32_13 = arith.constant 0 : i32
    %20 = arith.addi %0, %c0_i32_13 : i32
    %c0_14 = arith.constant 0 : index
    %21 = arith.index_cast %20 : i32 to index
    %c2 = arith.constant 2 : index
    %c0_15 = arith.constant 0 : index
    %22 = vector.load %arg2[%c0_14, %21, %c2, %c0_15] : memref<1x4x4x32xbf16, #tpu.memory_space<vmem>>, vector<1x2x2x32xbf16>
    %23 = vector.shape_cast %22 : vector<1x2x2x32xbf16> to vector<2x2x32xbf16>
    %24 = vector.shape_cast %23 : vector<2x2x32xbf16> to vector<4x32xbf16>
    %c2_16 = arith.constant 2 : index
    %c0_17 = arith.constant 0 : index
    %c0_18 = arith.constant 0 : index
    %25 = vector.load %arg3[%c2_16, %c0_17, %c0_18] : memref<9x32x32xbf16, #tpu.memory_space<vmem>>, vector<1x32x32xbf16>
    %26 = vector.shape_cast %25 : vector<1x32x32xbf16> to vector<32x32xbf16>
    %cst_19 = arith.constant dense<0.000000e+00> : vector<4x32xf32>
    %27 = tpu.matmul %24, %26, %cst_19 {dimension_numbers = #tpu.dot_dimension_numbers<[1], [0], [0], [1], [0, 0, 1, 1], [], []>} : vector<4x32xbf16>, vector<32x32xbf16>, vector<4x32xf32> -> vector<4x32xf32>
    %28 = arith.addf %19, %27 : vector<4x32xf32>
    %c1_i32 = arith.constant 1 : i32
    %29 = arith.addi %0, %c1_i32 : i32
    %c0_20 = arith.constant 0 : index
    %30 = arith.index_cast %29 : i32 to index
    %c0_21 = arith.constant 0 : index
    %c0_22 = arith.constant 0 : index
    %31 = vector.load %arg2[%c0_20, %30, %c0_21, %c0_22] : memref<1x4x4x32xbf16, #tpu.memory_space<vmem>>, vector<1x2x2x32xbf16>
    %32 = vector.shape_cast %31 : vector<1x2x2x32xbf16> to vector<2x2x32xbf16>
    %33 = vector.shape_cast %32 : vector<2x2x32xbf16> to vector<4x32xbf16>
    %c3 = arith.constant 3 : index
    %c0_23 = arith.constant 0 : index
    %c0_24 = arith.constant 0 : index
    %34 = vector.load %arg3[%c3, %c0_23, %c0_24] : memref<9x32x32xbf16, #tpu.memory_space<vmem>>, vector<1x32x32xbf16>
    %35 = vector.shape_cast %34 : vector<1x32x32xbf16> to vector<32x32xbf16>
    %cst_25 = arith.constant dense<0.000000e+00> : vector<4x32xf32>
    %36 = tpu.matmul %33, %35, %cst_25 {dimension_numbers = #tpu.dot_dimension_numbers<[1], [0], [0], [1], [0, 0, 1, 1], [], []>} : vector<4x32xbf16>, vector<32x32xbf16>, vector<4x32xf32> -> vector<4x32xf32>
    %37 = arith.addf %28, %36 : vector<4x32xf32>
    %c1_i32_26 = arith.constant 1 : i32
    %38 = arith.addi %0, %c1_i32_26 : i32
    %c0_27 = arith.constant 0 : index
    %39 = arith.index_cast %38 : i32 to index
    %c1_28 = arith.constant 1 : index
    %c0_29 = arith.constant 0 : index
    %40 = vector.load %arg2[%c0_27, %39, %c1_28, %c0_29] : memref<1x4x4x32xbf16, #tpu.memory_space<vmem>>, vector<1x2x2x32xbf16>
    %41 = vector.shape_cast %40 : vector<1x2x2x32xbf16> to vector<2x2x32xbf16>
    %42 = vector.shape_cast %41 : vector<2x2x32xbf16> to vector<4x32xbf16>
    %c4 = arith.constant 4 : index
    %c0_30 = arith.constant 0 : index
    %c0_31 = arith.constant 0 : index
    %43 = vector.load %arg3[%c4, %c0_30, %c0_31] : memref<9x32x32xbf16, #tpu.memory_space<vmem>>, vector<1x32x32xbf16>
    %44 = vector.shape_cast %43 : vector<1x32x32xbf16> to vector<32x32xbf16>
    %cst_32 = arith.constant dense<0.000000e+00> : vector<4x32xf32>
    %45 = tpu.matmul %42, %44, %cst_32 {dimension_numbers = #tpu.dot_dimension_numbers<[1], [0], [0], [1], [0, 0, 1, 1], [], []>} : vector<4x32xbf16>, vector<32x32xbf16>, vector<4x32xf32> -> vector<4x32xf32>
    %46 = arith.addf %37, %45 : vector<4x32xf32>
    %c1_i32_33 = arith.constant 1 : i32
    %47 = arith.addi %0, %c1_i32_33 : i32
    %c0_34 = arith.constant 0 : index
    %48 = arith.index_cast %47 : i32 to index
    %c2_35 = arith.constant 2 : index
    %c0_36 = arith.constant 0 : index
    %49 = vector.load %arg2[%c0_34, %48, %c2_35, %c0_36] : memref<1x4x4x32xbf16, #tpu.memory_space<vmem>>, vector<1x2x2x32xbf16>
    %50 = vector.shape_cast %49 : vector<1x2x2x32xbf16> to vector<2x2x32xbf16>
    %51 = vector.shape_cast %50 : vector<2x2x32xbf16> to vector<4x32xbf16>
    %c5 = arith.constant 5 : index
    %c0_37 = arith.constant 0 : index
    %c0_38 = arith.constant 0 : index
    %52 = vector.load %arg3[%c5, %c0_37, %c0_38] : memref<9x32x32xbf16, #tpu.memory_space<vmem>>, vector<1x32x32xbf16>
    %53 = vector.shape_cast %52 : vector<1x32x32xbf16> to vector<32x32xbf16>
    %cst_39 = arith.constant dense<0.000000e+00> : vector<4x32xf32>
    %54 = tpu.matmul %51, %53, %cst_39 {dimension_numbers = #tpu.dot_dimension_numbers<[1], [0], [0], [1], [0, 0, 1, 1], [], []>} : vector<4x32xbf16>, vector<32x32xbf16>, vector<4x32xf32> -> vector<4x32xf32>
    %55 = arith.addf %46, %54 : vector<4x32xf32>
    %c2_i32_40 = arith.constant 2 : i32
    %56 = arith.addi %0, %c2_i32_40 : i32
    %c0_41 = arith.constant 0 : index
    %57 = arith.index_cast %56 : i32 to index
    %c0_42 = arith.constant 0 : index
    %c0_43 = arith.constant 0 : index
    %58 = vector.load %arg2[%c0_41, %57, %c0_42, %c0_43] : memref<1x4x4x32xbf16, #tpu.memory_space<vmem>>, vector<1x2x2x32xbf16>
    %59 = vector.shape_cast %58 : vector<1x2x2x32xbf16> to vector<2x2x32xbf16>
    %60 = vector.shape_cast %59 : vector<2x2x32xbf16> to vector<4x32xbf16>
    %c6 = arith.constant 6 : index
    %c0_44 = arith.constant 0 : index
    %c0_45 = arith.constant 0 : index
    %61 = vector.load %arg3[%c6, %c0_44, %c0_45] : memref<9x32x32xbf16, #tpu.memory_space<vmem>>, vector<1x32x32xbf16>
    %62 = vector.shape_cast %61 : vector<1x32x32xbf16> to vector<32x32xbf16>
    %cst_46 = arith.constant dense<0.000000e+00> : vector<4x32xf32>
    %63 = tpu.matmul %60, %62, %cst_46 {dimension_numbers = #tpu.dot_dimension_numbers<[1], [0], [0], [1], [0, 0, 1, 1], [], []>} : vector<4x32xbf16>, vector<32x32xbf16>, vector<4x32xf32> -> vector<4x32xf32>
    %64 = arith.addf %55, %63 : vector<4x32xf32>
    %c2_i32_47 = arith.constant 2 : i32
    %65 = arith.addi %0, %c2_i32_47 : i32
    %c0_48 = arith.constant 0 : index
    %66 = arith.index_cast %65 : i32 to index
    %c1_49 = arith.constant 1 : index
    %c0_50 = arith.constant 0 : index
    %67 = vector.load %arg2[%c0_48, %66, %c1_49, %c0_50] : memref<1x4x4x32xbf16, #tpu.memory_space<vmem>>, vector<1x2x2x32xbf16>
    %68 = vector.shape_cast %67 : vector<1x2x2x32xbf16> to vector<2x2x32xbf16>
    %69 = vector.shape_cast %68 : vector<2x2x32xbf16> to vector<4x32xbf16>
    %c7 = arith.constant 7 : index
    %c0_51 = arith.constant 0 : index
    %c0_52 = arith.constant 0 : index
    %70 = vector.load %arg3[%c7, %c0_51, %c0_52] : memref<9x32x32xbf16, #tpu.memory_space<vmem>>, vector<1x32x32xbf16>
    %71 = vector.shape_cast %70 : vector<1x32x32xbf16> to vector<32x32xbf16>
    %cst_53 = arith.constant dense<0.000000e+00> : vector<4x32xf32>
    %72 = tpu.matmul %69, %71, %cst_53 {dimension_numbers = #tpu.dot_dimension_numbers<[1], [0], [0], [1], [0, 0, 1, 1], [], []>} : vector<4x32xbf16>, vector<32x32xbf16>, vector<4x32xf32> -> vector<4x32xf32>
    %73 = arith.addf %64, %72 : vector<4x32xf32>
    %c2_i32_54 = arith.constant 2 : i32
    %74 = arith.addi %0, %c2_i32_54 : i32
    %c0_55 = arith.constant 0 : index
    %75 = arith.index_cast %74 : i32 to index
    %c2_56 = arith.constant 2 : index
    %c0_57 = arith.constant 0 : index
    %76 = vector.load %arg2[%c0_55, %75, %c2_56, %c0_57] : memref<1x4x4x32xbf16, #tpu.memory_space<vmem>>, vector<1x2x2x32xbf16>
    %77 = vector.shape_cast %76 : vector<1x2x2x32xbf16> to vector<2x2x32xbf16>
    %78 = vector.shape_cast %77 : vector<2x2x32xbf16> to vector<4x32xbf16>
    %c8 = arith.constant 8 : index
    %c0_58 = arith.constant 0 : index
    %c0_59 = arith.constant 0 : index
    %79 = vector.load %arg3[%c8, %c0_58, %c0_59] : memref<9x32x32xbf16, #tpu.memory_space<vmem>>, vector<1x32x32xbf16>
    %80 = vector.shape_cast %79 : vector<1x32x32xbf16> to vector<32x32xbf16>
    %cst_60 = arith.constant dense<0.000000e+00> : vector<4x32xf32>
    %81 = tpu.matmul %78, %80, %cst_60 {dimension_numbers = #tpu.dot_dimension_numbers<[1], [0], [0], [1], [0, 0, 1, 1], [], []>} : vector<4x32xbf16>, vector<32x32xbf16>, vector<4x32xf32> -> vector<4x32xf32>
    %82 = arith.addf %73, %81 : vector<4x32xf32>
    %c0_61 = arith.constant 0 : index
    %c0_62 = arith.constant 0 : index
    %83 = vector.load %arg4[%c0_61, %c0_62] : memref<1x32xf32, #tpu.memory_space<vmem>>, vector<1x32xf32>
    %84 = vector.broadcast %83 : vector<1x32xf32> to vector<4x32xf32>
    %85 = arith.addf %82, %84 : vector<4x32xf32>
    %cst_63 = arith.constant 0.000000e+00 : f32
    %86 = vector.broadcast %cst_63 : f32 to vector<4x32xf32>
    %87 = arith.cmpf oge, %85, %86 : vector<4x32xf32>
    %c0_64 = arith.constant 0 : index
    %c0_65 = arith.constant 0 : index
    %88 = vector.load %arg5[%c0_64, %c0_65] : memref<1x32xf32, #tpu.memory_space<vmem>>, vector<1x32xf32>
    %89 = vector.broadcast %88 : vector<1x32xf32> to vector<4x32xf32>
    %90 = arith.mulf %89, %85 : vector<4x32xf32>
    %91 = arith.select %87, %85, %90 : vector<4x32xi1>, vector<4x32xf32>
    %92 = vector.shape_cast %91 : vector<4x32xf32> to vector<2x2x32xf32>
    %93 = arith.truncf %92 : vector<2x2x32xf32> to vector<2x2x32xbf16>
    %c0_66 = arith.constant 0 : index
    %c0_67 = arith.constant 0 : index
    %c0_68 = arith.constant 0 : index
    %c0_69 = arith.constant 0 : index
    %94 = vector.load %arg6[%c0_66, %c0_67, %c0_68, %c0_69] : memref<1x2x2x32xbf16, #tpu.memory_space<vmem>>, vector<1x2x2x32xbf16>
    %95 = vector.shape_cast %94 : vector<1x2x2x32xbf16> to vector<2x2x32xbf16>
    %96 = vector.shape_cast %93 : vector<2x2x32xbf16> to vector<1x2x2x32xbf16>
    tpu.vector_store %arg6[%c0_66, %c0_67, %c0_68, %c0_69], %96 {strides = array<i32>} : memref<1x2x2x32xbf16, #tpu.memory_space<vmem>>, vector<1x2x2x32xbf16>,
    return
  }
  func.func @transform_0(%arg0: i32, %arg1: i32) -> (i32, i32, i32, i32) {
    %c0_i32 = arith.constant 0 : i32
    %c0_i32_0 = arith.constant 0 : i32
    %c0_i32_1 = arith.constant 0 : i32
    %c0_i32_2 = arith.constant 0 : i32
    return %arg0, %c0_i32, %c0_i32_0, %c0_i32_1 : i32, i32, i32, i32
  }
  func.func @transform_1(%arg0: i32, %arg1: i32) -> (i32, i32, i32) {
    %c0_i32 = arith.constant 0 : i32
    %c0_i32_0 = arith.constant 0 : i32
    %c0_i32_1 = arith.constant 0 : i32
    %c0_i32_2 = arith.constant 0 : i32
    return %c0_i32, %c0_i32_0, %c0_i32_1 : i32, i32, i32
  }
  func.func @transform_2(%arg0: i32, %arg1: i32) -> (i32, i32) {
    %c0_i32 = arith.constant 0 : i32
    %c0_i32_0 = arith.constant 0 : i32
    %c0_i32_1 = arith.constant 0 : i32
    return %c0_i32, %c0_i32_0 : i32, i32
  }
  func.func @transform_3(%arg0: i32, %arg1: i32) -> (i32, i32) {
    %c0_i32 = arith.constant 0 : i32
    %c0_i32_0 = arith.constant 0 : i32
    %c0_i32_1 = arith.constant 0 : i32
    return %c0_i32, %c0_i32_0 : i32, i32
  }
  func.func @transform_4(%arg0: i32, %arg1: i32) -> (i32, i32, i32, i32) {
    %c0_i32 = arith.constant 0 : i32
    %c0_i32_0 = arith.constant 0 : i32
    %c0_i32_1 = arith.constant 0 : i32
    return %arg0, %arg1, %c0_i32, %c0_i32_0 : i32, i32, i32, i32
  }
}

module attributes {stable_mosaic.version = 11 : i64} {
  func.func @_conv3x3_s1_kernel(%arg0: i32, %arg1: i32, %arg2: memref<1x4x4x32xbf16, #tpu.memory_space<vmem>>, %arg3: memref<9x32x32xbf16, #tpu.memory_space<vmem>>, %arg4: memref<1x32xf32, #tpu.memory_space<vmem>>, %arg5: memref<1x32xf32, #tpu.memory_space<vmem>>, %arg6: memref<1x2x2x32xbf16, #tpu.memory_space<vmem>>, %arg7: memref<1x2x2x32xbf16, #tpu.memory_space<vmem>>) attributes {dimension_semantics = [#tpu.dimension_semantics<parallel>, #tpu.dimension_semantics<parallel>], iteration_bounds = array<i64: 2, 1>, scalar_prefetch = 0 : i64, scratch_operands = 0 : i64, tpu.core_type = #tpu.core_type<tc>, window_params = [{transform_indices = @transform_0, window_bounds = array<i64: 1, 4, 4, 32>}, {pipeline_mode = #tpu.pipeline_mode<synchronous>, transform_indices = @transform_1, window_bounds = array<i64: 9, 32, 32>}, {pipeline_mode = #tpu.pipeline_mode<synchronous>, transform_indices = @transform_2, window_bounds = array<i64: 1, 32>}, {pipeline_mode = #tpu.pipeline_mode<synchronous>, transform_indices = @transform_3, window_bounds = array<i64: 1, 32>}, {transform_indices = @transform_4, window_bounds = array<i64: 1, 2, 2, 32>}, {transform_indices = @transform_5, window_bounds = array<i64: 1, 2, 2, 32>}]} {
    %c2_i32 = arith.constant 2 : i32
    %0 = arith.muli %arg1, %c2_i32 : i32
    %cst = arith.constant 0.000000e+00 : f32
    %1 = vector.broadcast %cst : f32 to vector<4x32xf32>
    %c0_i32 = arith.constant 0 : i32
    %2 = arith.addi %0, %c0_i32 : i32
    %c0 = arith.constant 0 : index
    %3 = arith.index_cast %2 : i32 to index
    %c0_0 = arith.constant 0 : index
    %c0_1 = arith.constant 0 : index
    %4 = vector.load %arg2[%c0, %3, %c0_0, %c0_1] : memref<1x4x4x32xbf16, #tpu.memory_space<vmem>>, vector<1x2x2x32xbf16>
    %5 = vector.shape_cast %4 : vector<1x2x2x32xbf16> to vector<2x2x32xbf16>
    %6 = vector.shape_cast %5 : vector<2x2x32xbf16> to vector<4x32xbf16>
    %c0_2 = arith.constant 0 : index
    %c0_3 = arith.constant 0 : index
    %c0_4 = arith.constant 0 : index
    %7 = vector.load %arg3[%c0_2, %c0_3, %c0_4] : memref<9x32x32xbf16, #tpu.memory_space<vmem>>, vector<1x32x32xbf16>
    %8 = vector.shape_cast %7 : vector<1x32x32xbf16> to vector<32x32xbf16>
    %cst_5 = arith.constant dense<0.000000e+00> : vector<4x32xf32>
    %9 = tpu.matmul %6, %8, %cst_5 {dimension_numbers = #tpu.dot_dimension_numbers<[1], [0], [0], [1], [0, 0, 1, 1], [], []>} : vector<4x32xbf16>, vector<32x32xbf16>, vector<4x32xf32> -> vector<4x32xf32>
    %10 = arith.addf %1, %9 : vector<4x32xf32>
    %c0_i32_6 = arith.constant 0 : i32
    %11 = arith.addi %0, %c0_i32_6 : i32
    %c0_7 = arith.constant 0 : index
    %12 = arith.index_cast %11 : i32 to index
    %c1 = arith.constant 1 : index
    %c0_8 = arith.constant 0 : index
    %13 = vector.load %arg2[%c0_7, %12, %c1, %c0_8] : memref<1x4x4x32xbf16, #tpu.memory_space<vmem>>, vector<1x2x2x32xbf16>
    %14 = vector.shape_cast %13 : vector<1x2x2x32xbf16> to vector<2x2x32xbf16>
    %15 = vector.shape_cast %14 : vector<2x2x32xbf16> to vector<4x32xbf16>
    %c1_9 = arith.constant 1 : index
    %c0_10 = arith.constant 0 : index
    %c0_11 = arith.constant 0 : index
    %16 = vector.load %arg3[%c1_9, %c0_10, %c0_11] : memref<9x32x32xbf16, #tpu.memory_space<vmem>>, vector<1x32x32xbf16>
    %17 = vector.shape_cast %16 : vector<1x32x32xbf16> to vector<32x32xbf16>
    %cst_12 = arith.constant dense<0.000000e+00> : vector<4x32xf32>
    %18 = tpu.matmul %15, %17, %cst_12 {dimension_numbers = #tpu.dot_dimension_numbers<[1], [0], [0], [1], [0, 0, 1, 1], [], []>} : vector<4x32xbf16>, vector<32x32xbf16>, vector<4x32xf32> -> vector<4x32xf32>
    %19 = arith.addf %10, %18 : vector<4x32xf32>
    %c0_i32_13 = arith.constant 0 : i32
    %20 = arith.addi %0, %c0_i32_13 : i32
    %c0_14 = arith.constant 0 : index
    %21 = arith.index_cast %20 : i32 to index
    %c2 = arith.constant 2 : index
    %c0_15 = arith.constant 0 : index
    %22 = vector.load %arg2[%c0_14, %21, %c2, %c0_15] : memref<1x4x4x32xbf16, #tpu.memory_space<vmem>>, vector<1x2x2x32xbf16>
    %23 = vector.shape_cast %22 : vector<1x2x2x32xbf16> to vector<2x2x32xbf16>
    %24 = vector.shape_cast %23 : vector<2x2x32xbf16> to vector<4x32xbf16>
    %c2_16 = arith.constant 2 : index
    %c0_17 = arith.constant 0 : index
    %c0_18 = arith.constant 0 : index
    %25 = vector.load %arg3[%c2_16, %c0_17, %c0_18] : memref<9x32x32xbf16, #tpu.memory_space<vmem>>, vector<1x32x32xbf16>
    %26 = vector.shape_cast %25 : vector<1x32x32xbf16> to vector<32x32xbf16>
    %cst_19 = arith.constant dense<0.000000e+00> : vector<4x32xf32>
    %27 = tpu.matmul %24, %26, %cst_19 {dimension_numbers = #tpu.dot_dimension_numbers<[1], [0], [0], [1], [0, 0, 1, 1], [], []>} : vector<4x32xbf16>, vector<32x32xbf16>, vector<4x32xf32> -> vector<4x32xf32>
    %28 = arith.addf %19, %27 : vector<4x32xf32>
    %c1_i32 = arith.constant 1 : i32
    %29 = arith.addi %0, %c1_i32 : i32
    %c0_20 = arith.constant 0 : index
    %30 = arith.index_cast %29 : i32 to index
    %c0_21 = arith.constant 0 : index
    %c0_22 = arith.constant 0 : index
    %31 = vector.load %arg2[%c0_20, %30, %c0_21, %c0_22] : memref<1x4x4x32xbf16, #tpu.memory_space<vmem>>, vector<1x2x2x32xbf16>
    %32 = vector.shape_cast %31 : vector<1x2x2x32xbf16> to vector<2x2x32xbf16>
    %33 = vector.shape_cast %32 : vector<2x2x32xbf16> to vector<4x32xbf16>
    %c3 = arith.constant 3 : index
    %c0_23 = arith.constant 0 : index
    %c0_24 = arith.constant 0 : index
    %34 = vector.load %arg3[%c3, %c0_23, %c0_24] : memref<9x32x32xbf16, #tpu.memory_space<vmem>>, vector<1x32x32xbf16>
    %35 = vector.shape_cast %34 : vector<1x32x32xbf16> to vector<32x32xbf16>
    %cst_25 = arith.constant dense<0.000000e+00> : vector<4x32xf32>
    %36 = tpu.matmul %33, %35, %cst_25 {dimension_numbers = #tpu.dot_dimension_numbers<[1], [0], [0], [1], [0, 0, 1, 1], [], []>} : vector<4x32xbf16>, vector<32x32xbf16>, vector<4x32xf32> -> vector<4x32xf32>
    %37 = arith.addf %28, %36 : vector<4x32xf32>
    %c1_i32_26 = arith.constant 1 : i32
    %38 = arith.addi %0, %c1_i32_26 : i32
    %c0_27 = arith.constant 0 : index
    %39 = arith.index_cast %38 : i32 to index
    %c1_28 = arith.constant 1 : index
    %c0_29 = arith.constant 0 : index
    %40 = vector.load %arg2[%c0_27, %39, %c1_28, %c0_29] : memref<1x4x4x32xbf16, #tpu.memory_space<vmem>>, vector<1x2x2x32xbf16>
    %41 = vector.shape_cast %40 : vector<1x2x2x32xbf16> to vector<2x2x32xbf16>
    %42 = vector.shape_cast %41 : vector<2x2x32xbf16> to vector<4x32xbf16>
    %c4 = arith.constant 4 : index
    %c0_30 = arith.constant 0 : index
    %c0_31 = arith.constant 0 : index
    %43 = vector.load %arg3[%c4, %c0_30, %c0_31] : memref<9x32x32xbf16, #tpu.memory_space<vmem>>, vector<1x32x32xbf16>
    %44 = vector.shape_cast %43 : vector<1x32x32xbf16> to vector<32x32xbf16>
    %cst_32 = arith.constant dense<0.000000e+00> : vector<4x32xf32>
    %45 = tpu.matmul %42, %44, %cst_32 {dimension_numbers = #tpu.dot_dimension_numbers<[1], [0], [0], [1], [0, 0, 1, 1], [], []>} : vector<4x32xbf16>, vector<32x32xbf16>, vector<4x32xf32> -> vector<4x32xf32>
    %46 = arith.addf %37, %45 : vector<4x32xf32>
    %c1_i32_33 = arith.constant 1 : i32
    %47 = arith.addi %0, %c1_i32_33 : i32
    %c0_34 = arith.constant 0 : index
    %48 = arith.index_cast %47 : i32 to index
    %c2_35 = arith.constant 2 : index
    %c0_36 = arith.constant 0 : index
    %49 = vector.load %arg2[%c0_34, %48, %c2_35, %c0_36] : memref<1x4x4x32xbf16, #tpu.memory_space<vmem>>, vector<1x2x2x32xbf16>
    %50 = vector.shape_cast %49 : vector<1x2x2x32xbf16> to vector<2x2x32xbf16>
    %51 = vector.shape_cast %50 : vector<2x2x32xbf16> to vector<4x32xbf16>
    %c5 = arith.constant 5 : index
    %c0_37 = arith.constant 0 : index
    %c0_38 = arith.constant 0 : index
    %52 = vector.load %arg3[%c5, %c0_37, %c0_38] : memref<9x32x32xbf16, #tpu.memory_space<vmem>>, vector<1x32x32xbf16>
    %53 = vector.shape_cast %52 : vector<1x32x32xbf16> to vector<32x32xbf16>
    %cst_39 = arith.constant dense<0.000000e+00> : vector<4x32xf32>
    %54 = tpu.matmul %51, %53, %cst_39 {dimension_numbers = #tpu.dot_dimension_numbers<[1], [0], [0], [1], [0, 0, 1, 1], [], []>} : vector<4x32xbf16>, vector<32x32xbf16>, vector<4x32xf32> -> vector<4x32xf32>
    %55 = arith.addf %46, %54 : vector<4x32xf32>
    %c2_i32_40 = arith.constant 2 : i32
    %56 = arith.addi %0, %c2_i32_40 : i32
    %c0_41 = arith.constant 0 : index
    %57 = arith.index_cast %56 : i32 to index
    %c0_42 = arith.constant 0 : index
    %c0_43 = arith.constant 0 : index
    %58 = vector.load %arg2[%c0_41, %57, %c0_42, %c0_43] : memref<1x4x4x32xbf16, #tpu.memory_space<vmem>>, vector<1x2x2x32xbf16>
    %59 = vector.shape_cast %58 : vector<1x2x2x32xbf16> to vector<2x2x32xbf16>
    %60 = vector.shape_cast %59 : vector<2x2x32xbf16> to vector<4x32xbf16>
    %c6 = arith.constant 6 : index
    %c0_44 = arith.constant 0 : index
    %c0_45 = arith.constant 0 : index
    %61 = vector.load %arg3[%c6, %c0_44, %c0_45] : memref<9x32x32xbf16, #tpu.memory_space<vmem>>, vector<1x32x32xbf16>
    %62 = vector.shape_cast %61 : vector<1x32x32xbf16> to vector<32x32xbf16>
    %cst_46 = arith.constant dense<0.000000e+00> : vector<4x32xf32>
    %63 = tpu.matmul %60, %62, %cst_46 {dimension_numbers = #tpu.dot_dimension_numbers<[1], [0], [0], [1], [0, 0, 1, 1], [], []>} : vector<4x32xbf16>, vector<32x32xbf16>, vector<4x32xf32> -> vector<4x32xf32>
    %64 = arith.addf %55, %63 : vector<4x32xf32>
    %c2_i32_47 = arith.constant 2 : i32
    %65 = arith.addi %0, %c2_i32_47 : i32
    %c0_48 = arith.constant 0 : index
    %66 = arith.index_cast %65 : i32 to index
    %c1_49 = arith.constant 1 : index
    %c0_50 = arith.constant 0 : index
    %67 = vector.load %arg2[%c0_48, %66, %c1_49, %c0_50] : memref<1x4x4x32xbf16, #tpu.memory_space<vmem>>, vector<1x2x2x32xbf16>
    %68 = vector.shape_cast %67 : vector<1x2x2x32xbf16> to vector<2x2x32xbf16>
    %69 = vector.shape_cast %68 : vector<2x2x32xbf16> to vector<4x32xbf16>
    %c7 = arith.constant 7 : index
    %c0_51 = arith.constant 0 : index
    %c0_52 = arith.constant 0 : index
    %70 = vector.load %arg3[%c7, %c0_51, %c0_52] : memref<9x32x32xbf16, #tpu.memory_space<vmem>>, vector<1x32x32xbf16>
    %71 = vector.shape_cast %70 : vector<1x32x32xbf16> to vector<32x32xbf16>
    %cst_53 = arith.constant dense<0.000000e+00> : vector<4x32xf32>
    %72 = tpu.matmul %69, %71, %cst_53 {dimension_numbers = #tpu.dot_dimension_numbers<[1], [0], [0], [1], [0, 0, 1, 1], [], []>} : vector<4x32xbf16>, vector<32x32xbf16>, vector<4x32xf32> -> vector<4x32xf32>
    %73 = arith.addf %64, %72 : vector<4x32xf32>
    %c2_i32_54 = arith.constant 2 : i32
    %74 = arith.addi %0, %c2_i32_54 : i32
    %c0_55 = arith.constant 0 : index
    %75 = arith.index_cast %74 : i32 to index
    %c2_56 = arith.constant 2 : index
    %c0_57 = arith.constant 0 : index
    %76 = vector.load %arg2[%c0_55, %75, %c2_56, %c0_57] : memref<1x4x4x32xbf16, #tpu.memory_space<vmem>>, vector<1x2x2x32xbf16>
    %77 = vector.shape_cast %76 : vector<1x2x2x32xbf16> to vector<2x2x32xbf16>
    %78 = vector.shape_cast %77 : vector<2x2x32xbf16> to vector<4x32xbf16>
    %c8 = arith.constant 8 : index
    %c0_58 = arith.constant 0 : index
    %c0_59 = arith.constant 0 : index
    %79 = vector.load %arg3[%c8, %c0_58, %c0_59] : memref<9x32x32xbf16, #tpu.memory_space<vmem>>, vector<1x32x32xbf16>
    %80 = vector.shape_cast %79 : vector<1x32x32xbf16> to vector<32x32xbf16>
    %cst_60 = arith.constant dense<0.000000e+00> : vector<4x32xf32>
    %81 = tpu.matmul %78, %80, %cst_60 {dimension_numbers = #tpu.dot_dimension_numbers<[1], [0], [0], [1], [0, 0, 1, 1], [], []>} : vector<4x32xbf16>, vector<32x32xbf16>, vector<4x32xf32> -> vector<4x32xf32>
    %82 = arith.addf %73, %81 : vector<4x32xf32>
    %c0_61 = arith.constant 0 : index
    %c0_62 = arith.constant 0 : index
    %83 = vector.load %arg4[%c0_61, %c0_62] : memref<1x32xf32, #tpu.memory_space<vmem>>, vector<1x32xf32>
    %84 = vector.broadcast %83 : vector<1x32xf32> to vector<4x32xf32>
    %85 = arith.addf %82, %84 : vector<4x32xf32>
    %cst_63 = arith.constant 0.000000e+00 : f32
    %86 = vector.broadcast %cst_63 : f32 to vector<4x32xf32>
    %87 = arith.cmpf oge, %85, %86 : vector<4x32xf32>
    %c0_64 = arith.constant 0 : index
    %c0_65 = arith.constant 0 : index
    %88 = vector.load %arg5[%c0_64, %c0_65] : memref<1x32xf32, #tpu.memory_space<vmem>>, vector<1x32xf32>
    %89 = vector.broadcast %88 : vector<1x32xf32> to vector<4x32xf32>
    %90 = arith.mulf %89, %85 : vector<4x32xf32>
    %91 = arith.select %87, %85, %90 : vector<4x32xi1>, vector<4x32xf32>
    %c0_66 = arith.constant 0 : index
    %c0_67 = arith.constant 0 : index
    %c0_68 = arith.constant 0 : index
    %c0_69 = arith.constant 0 : index
    %92 = vector.load %arg6[%c0_66, %c0_67, %c0_68, %c0_69] : memref<1x2x2x32xbf16, #tpu.memory_space<vmem>>, vector<1x2x2x32xbf16>
    %93 = vector.shape_cast %92 : vector<1x2x2x32xbf16> to vector<2x2x32xbf16>
    %94 = arith.extf %93 : vector<2x2x32xbf16> to vector<2x2x32xf32>
    %95 = vector.shape_cast %94 : vector<2x2x32xf32> to vector<4x32xf32>
    %96 = arith.addf %91, %95 : vector<4x32xf32>
    %97 = vector.shape_cast %96 : vector<4x32xf32> to vector<2x2x32xf32>
    %98 = arith.truncf %97 : vector<2x2x32xf32> to vector<2x2x32xbf16>
    %c0_70 = arith.constant 0 : index
    %c0_71 = arith.constant 0 : index
    %c0_72 = arith.constant 0 : index
    %c0_73 = arith.constant 0 : index
    %99 = vector.load %arg7[%c0_70, %c0_71, %c0_72, %c0_73] : memref<1x2x2x32xbf16, #tpu.memory_space<vmem>>, vector<1x2x2x32xbf16>
    %100 = vector.shape_cast %99 : vector<1x2x2x32xbf16> to vector<2x2x32xbf16>
    %101 = vector.shape_cast %98 : vector<2x2x32xbf16> to vector<1x2x2x32xbf16>
    tpu.vector_store %arg7[%c0_70, %c0_71, %c0_72, %c0_73], %101 {strides = array<i32>} : memref<1x2x2x32xbf16, #tpu.memory_space<vmem>>, vector<1x2x2x32xbf16>,
    return
  }
  func.func @transform_0(%arg0: i32, %arg1: i32) -> (i32, i32, i32, i32) {
    %c0_i32 = arith.constant 0 : i32
    %c0_i32_0 = arith.constant 0 : i32
    %c0_i32_1 = arith.constant 0 : i32
    %c0_i32_2 = arith.constant 0 : i32
    return %arg0, %c0_i32, %c0_i32_0, %c0_i32_1 : i32, i32, i32, i32
  }
  func.func @transform_1(%arg0: i32, %arg1: i32) -> (i32, i32, i32) {
    %c0_i32 = arith.constant 0 : i32
    %c0_i32_0 = arith.constant 0 : i32
    %c0_i32_1 = arith.constant 0 : i32
    %c0_i32_2 = arith.constant 0 : i32
    return %c0_i32, %c0_i32_0, %c0_i32_1 : i32, i32, i32
  }
  func.func @transform_2(%arg0: i32, %arg1: i32) -> (i32, i32) {
    %c0_i32 = arith.constant 0 : i32
    %c0_i32_0 = arith.constant 0 : i32
    %c0_i32_1 = arith.constant 0 : i32
    return %c0_i32, %c0_i32_0 : i32, i32
  }
  func.func @transform_3(%arg0: i32, %arg1: i32) -> (i32, i32) {
    %c0_i32 = arith.constant 0 : i32
    %c0_i32_0 = arith.constant 0 : i32
    %c0_i32_1 = arith.constant 0 : i32
    return %c0_i32, %c0_i32_0 : i32, i32
  }
  func.func @transform_4(%arg0: i32, %arg1: i32) -> (i32, i32, i32, i32) {
    %c0_i32 = arith.constant 0 : i32
    %c0_i32_0 = arith.constant 0 : i32
    %c0_i32_1 = arith.constant 0 : i32
    return %arg0, %arg1, %c0_i32, %c0_i32_0 : i32, i32, i32, i32
  }
  func.func @transform_5(%arg0: i32, %arg1: i32) -> (i32, i32, i32, i32) {
    %c0_i32 = arith.constant 0 : i32
    %c0_i32_0 = arith.constant 0 : i32
    %c0_i32_1 = arith.constant 0 : i32
    return %arg0, %arg1, %c0_i32, %c0_i32_0 : i32, i32, i32, i32
  }
}

module attributes {stable_mosaic.version = 11 : i64} {
  func.func @_conv3x3_s1_kernel(%arg0: i32, %arg1: i32, %arg2: memref<1x4x4x32xbf16, #tpu.memory_space<vmem>>, %arg3: memref<9x32x128xbf16, #tpu.memory_space<vmem>>, %arg4: memref<1x128xf32, #tpu.memory_space<vmem>>, %arg5: memref<1x128xf32, #tpu.memory_space<vmem>>, %arg6: memref<1x2x2x128xbf16, #tpu.memory_space<vmem>>) attributes {dimension_semantics = [#tpu.dimension_semantics<parallel>, #tpu.dimension_semantics<parallel>], iteration_bounds = array<i64: 2, 1>, scalar_prefetch = 0 : i64, scratch_operands = 0 : i64, tpu.core_type = #tpu.core_type<tc>, window_params = [{transform_indices = @transform_0, window_bounds = array<i64: 1, 4, 4, 32>}, {pipeline_mode = #tpu.pipeline_mode<synchronous>, transform_indices = @transform_1, window_bounds = array<i64: 9, 32, 128>}, {pipeline_mode = #tpu.pipeline_mode<synchronous>, transform_indices = @transform_2, window_bounds = array<i64: 1, 128>}, {pipeline_mode = #tpu.pipeline_mode<synchronous>, transform_indices = @transform_3, window_bounds = array<i64: 1, 128>}, {transform_indices = @transform_4, window_bounds = array<i64: 1, 2, 2, 128>}]} {
    %c2_i32 = arith.constant 2 : i32
    %0 = arith.muli %arg1, %c2_i32 : i32
    %cst = arith.constant 0.000000e+00 : f32
    %1 = vector.broadcast %cst : f32 to vector<4x128xf32>
    %c0_i32 = arith.constant 0 : i32
    %2 = arith.addi %0, %c0_i32 : i32
    %c0 = arith.constant 0 : index
    %3 = arith.index_cast %2 : i32 to index
    %c0_0 = arith.constant 0 : index
    %c0_1 = arith.constant 0 : index
    %4 = vector.load %arg2[%c0, %3, %c0_0, %c0_1] : memref<1x4x4x32xbf16, #tpu.memory_space<vmem>>, vector<1x2x2x32xbf16>
    %5 = vector.shape_cast %4 : vector<1x2x2x32xbf16> to vector<2x2x32xbf16>
    %6 = vector.shape_cast %5 : vector<2x2x32xbf16> to vector<4x32xbf16>
    %c0_2 = arith.constant 0 : index
    %c0_3 = arith.constant 0 : index
    %c0_4 = arith.constant 0 : index
    %7 = vector.load %arg3[%c0_2, %c0_3, %c0_4] : memref<9x32x128xbf16, #tpu.memory_space<vmem>>, vector<1x32x128xbf16>
    %8 = vector.shape_cast %7 : vector<1x32x128xbf16> to vector<32x128xbf16>
    %cst_5 = arith.constant dense<0.000000e+00> : vector<4x128xf32>
    %9 = tpu.matmul %6, %8, %cst_5 {dimension_numbers = #tpu.dot_dimension_numbers<[1], [0], [0], [1], [0, 0, 1, 1], [], []>} : vector<4x32xbf16>, vector<32x128xbf16>, vector<4x128xf32> -> vector<4x128xf32>
    %10 = arith.addf %1, %9 : vector<4x128xf32>
    %c0_i32_6 = arith.constant 0 : i32
    %11 = arith.addi %0, %c0_i32_6 : i32
    %c0_7 = arith.constant 0 : index
    %12 = arith.index_cast %11 : i32 to index
    %c1 = arith.constant 1 : index
    %c0_8 = arith.constant 0 : index
    %13 = vector.load %arg2[%c0_7, %12, %c1, %c0_8] : memref<1x4x4x32xbf16, #tpu.memory_space<vmem>>, vector<1x2x2x32xbf16>
    %14 = vector.shape_cast %13 : vector<1x2x2x32xbf16> to vector<2x2x32xbf16>
    %15 = vector.shape_cast %14 : vector<2x2x32xbf16> to vector<4x32xbf16>
    %c1_9 = arith.constant 1 : index
    %c0_10 = arith.constant 0 : index
    %c0_11 = arith.constant 0 : index
    %16 = vector.load %arg3[%c1_9, %c0_10, %c0_11] : memref<9x32x128xbf16, #tpu.memory_space<vmem>>, vector<1x32x128xbf16>
    %17 = vector.shape_cast %16 : vector<1x32x128xbf16> to vector<32x128xbf16>
    %cst_12 = arith.constant dense<0.000000e+00> : vector<4x128xf32>
    %18 = tpu.matmul %15, %17, %cst_12 {dimension_numbers = #tpu.dot_dimension_numbers<[1], [0], [0], [1], [0, 0, 1, 1], [], []>} : vector<4x32xbf16>, vector<32x128xbf16>, vector<4x128xf32> -> vector<4x128xf32>
    %19 = arith.addf %10, %18 : vector<4x128xf32>
    %c0_i32_13 = arith.constant 0 : i32
    %20 = arith.addi %0, %c0_i32_13 : i32
    %c0_14 = arith.constant 0 : index
    %21 = arith.index_cast %20 : i32 to index
    %c2 = arith.constant 2 : index
    %c0_15 = arith.constant 0 : index
    %22 = vector.load %arg2[%c0_14, %21, %c2, %c0_15] : memref<1x4x4x32xbf16, #tpu.memory_space<vmem>>, vector<1x2x2x32xbf16>
    %23 = vector.shape_cast %22 : vector<1x2x2x32xbf16> to vector<2x2x32xbf16>
    %24 = vector.shape_cast %23 : vector<2x2x32xbf16> to vector<4x32xbf16>
    %c2_16 = arith.constant 2 : index
    %c0_17 = arith.constant 0 : index
    %c0_18 = arith.constant 0 : index
    %25 = vector.load %arg3[%c2_16, %c0_17, %c0_18] : memref<9x32x128xbf16, #tpu.memory_space<vmem>>, vector<1x32x128xbf16>
    %26 = vector.shape_cast %25 : vector<1x32x128xbf16> to vector<32x128xbf16>
    %cst_19 = arith.constant dense<0.000000e+00> : vector<4x128xf32>
    %27 = tpu.matmul %24, %26, %cst_19 {dimension_numbers = #tpu.dot_dimension_numbers<[1], [0], [0], [1], [0, 0, 1, 1], [], []>} : vector<4x32xbf16>, vector<32x128xbf16>, vector<4x128xf32> -> vector<4x128xf32>
    %28 = arith.addf %19, %27 : vector<4x128xf32>
    %c1_i32 = arith.constant 1 : i32
    %29 = arith.addi %0, %c1_i32 : i32
    %c0_20 = arith.constant 0 : index
    %30 = arith.index_cast %29 : i32 to index
    %c0_21 = arith.constant 0 : index
    %c0_22 = arith.constant 0 : index
    %31 = vector.load %arg2[%c0_20, %30, %c0_21, %c0_22] : memref<1x4x4x32xbf16, #tpu.memory_space<vmem>>, vector<1x2x2x32xbf16>
    %32 = vector.shape_cast %31 : vector<1x2x2x32xbf16> to vector<2x2x32xbf16>
    %33 = vector.shape_cast %32 : vector<2x2x32xbf16> to vector<4x32xbf16>
    %c3 = arith.constant 3 : index
    %c0_23 = arith.constant 0 : index
    %c0_24 = arith.constant 0 : index
    %34 = vector.load %arg3[%c3, %c0_23, %c0_24] : memref<9x32x128xbf16, #tpu.memory_space<vmem>>, vector<1x32x128xbf16>
    %35 = vector.shape_cast %34 : vector<1x32x128xbf16> to vector<32x128xbf16>
    %cst_25 = arith.constant dense<0.000000e+00> : vector<4x128xf32>
    %36 = tpu.matmul %33, %35, %cst_25 {dimension_numbers = #tpu.dot_dimension_numbers<[1], [0], [0], [1], [0, 0, 1, 1], [], []>} : vector<4x32xbf16>, vector<32x128xbf16>, vector<4x128xf32> -> vector<4x128xf32>
    %37 = arith.addf %28, %36 : vector<4x128xf32>
    %c1_i32_26 = arith.constant 1 : i32
    %38 = arith.addi %0, %c1_i32_26 : i32
    %c0_27 = arith.constant 0 : index
    %39 = arith.index_cast %38 : i32 to index
    %c1_28 = arith.constant 1 : index
    %c0_29 = arith.constant 0 : index
    %40 = vector.load %arg2[%c0_27, %39, %c1_28, %c0_29] : memref<1x4x4x32xbf16, #tpu.memory_space<vmem>>, vector<1x2x2x32xbf16>
    %41 = vector.shape_cast %40 : vector<1x2x2x32xbf16> to vector<2x2x32xbf16>
    %42 = vector.shape_cast %41 : vector<2x2x32xbf16> to vector<4x32xbf16>
    %c4 = arith.constant 4 : index
    %c0_30 = arith.constant 0 : index
    %c0_31 = arith.constant 0 : index
    %43 = vector.load %arg3[%c4, %c0_30, %c0_31] : memref<9x32x128xbf16, #tpu.memory_space<vmem>>, vector<1x32x128xbf16>
    %44 = vector.shape_cast %43 : vector<1x32x128xbf16> to vector<32x128xbf16>
    %cst_32 = arith.constant dense<0.000000e+00> : vector<4x128xf32>
    %45 = tpu.matmul %42, %44, %cst_32 {dimension_numbers = #tpu.dot_dimension_numbers<[1], [0], [0], [1], [0, 0, 1, 1], [], []>} : vector<4x32xbf16>, vector<32x128xbf16>, vector<4x128xf32> -> vector<4x128xf32>
    %46 = arith.addf %37, %45 : vector<4x128xf32>
    %c1_i32_33 = arith.constant 1 : i32
    %47 = arith.addi %0, %c1_i32_33 : i32
    %c0_34 = arith.constant 0 : index
    %48 = arith.index_cast %47 : i32 to index
    %c2_35 = arith.constant 2 : index
    %c0_36 = arith.constant 0 : index
    %49 = vector.load %arg2[%c0_34, %48, %c2_35, %c0_36] : memref<1x4x4x32xbf16, #tpu.memory_space<vmem>>, vector<1x2x2x32xbf16>
    %50 = vector.shape_cast %49 : vector<1x2x2x32xbf16> to vector<2x2x32xbf16>
    %51 = vector.shape_cast %50 : vector<2x2x32xbf16> to vector<4x32xbf16>
    %c5 = arith.constant 5 : index
    %c0_37 = arith.constant 0 : index
    %c0_38 = arith.constant 0 : index
    %52 = vector.load %arg3[%c5, %c0_37, %c0_38] : memref<9x32x128xbf16, #tpu.memory_space<vmem>>, vector<1x32x128xbf16>
    %53 = vector.shape_cast %52 : vector<1x32x128xbf16> to vector<32x128xbf16>
    %cst_39 = arith.constant dense<0.000000e+00> : vector<4x128xf32>
    %54 = tpu.matmul %51, %53, %cst_39 {dimension_numbers = #tpu.dot_dimension_numbers<[1], [0], [0], [1], [0, 0, 1, 1], [], []>} : vector<4x32xbf16>, vector<32x128xbf16>, vector<4x128xf32> -> vector<4x128xf32>
    %55 = arith.addf %46, %54 : vector<4x128xf32>
    %c2_i32_40 = arith.constant 2 : i32
    %56 = arith.addi %0, %c2_i32_40 : i32
    %c0_41 = arith.constant 0 : index
    %57 = arith.index_cast %56 : i32 to index
    %c0_42 = arith.constant 0 : index
    %c0_43 = arith.constant 0 : index
    %58 = vector.load %arg2[%c0_41, %57, %c0_42, %c0_43] : memref<1x4x4x32xbf16, #tpu.memory_space<vmem>>, vector<1x2x2x32xbf16>
    %59 = vector.shape_cast %58 : vector<1x2x2x32xbf16> to vector<2x2x32xbf16>
    %60 = vector.shape_cast %59 : vector<2x2x32xbf16> to vector<4x32xbf16>
    %c6 = arith.constant 6 : index
    %c0_44 = arith.constant 0 : index
    %c0_45 = arith.constant 0 : index
    %61 = vector.load %arg3[%c6, %c0_44, %c0_45] : memref<9x32x128xbf16, #tpu.memory_space<vmem>>, vector<1x32x128xbf16>
    %62 = vector.shape_cast %61 : vector<1x32x128xbf16> to vector<32x128xbf16>
    %cst_46 = arith.constant dense<0.000000e+00> : vector<4x128xf32>
    %63 = tpu.matmul %60, %62, %cst_46 {dimension_numbers = #tpu.dot_dimension_numbers<[1], [0], [0], [1], [0, 0, 1, 1], [], []>} : vector<4x32xbf16>, vector<32x128xbf16>, vector<4x128xf32> -> vector<4x128xf32>
    %64 = arith.addf %55, %63 : vector<4x128xf32>
    %c2_i32_47 = arith.constant 2 : i32
    %65 = arith.addi %0, %c2_i32_47 : i32
    %c0_48 = arith.constant 0 : index
    %66 = arith.index_cast %65 : i32 to index
    %c1_49 = arith.constant 1 : index
    %c0_50 = arith.constant 0 : index
    %67 = vector.load %arg2[%c0_48, %66, %c1_49, %c0_50] : memref<1x4x4x32xbf16, #tpu.memory_space<vmem>>, vector<1x2x2x32xbf16>
    %68 = vector.shape_cast %67 : vector<1x2x2x32xbf16> to vector<2x2x32xbf16>
    %69 = vector.shape_cast %68 : vector<2x2x32xbf16> to vector<4x32xbf16>
    %c7 = arith.constant 7 : index
    %c0_51 = arith.constant 0 : index
    %c0_52 = arith.constant 0 : index
    %70 = vector.load %arg3[%c7, %c0_51, %c0_52] : memref<9x32x128xbf16, #tpu.memory_space<vmem>>, vector<1x32x128xbf16>
    %71 = vector.shape_cast %70 : vector<1x32x128xbf16> to vector<32x128xbf16>
    %cst_53 = arith.constant dense<0.000000e+00> : vector<4x128xf32>
    %72 = tpu.matmul %69, %71, %cst_53 {dimension_numbers = #tpu.dot_dimension_numbers<[1], [0], [0], [1], [0, 0, 1, 1], [], []>} : vector<4x32xbf16>, vector<32x128xbf16>, vector<4x128xf32> -> vector<4x128xf32>
    %73 = arith.addf %64, %72 : vector<4x128xf32>
    %c2_i32_54 = arith.constant 2 : i32
    %74 = arith.addi %0, %c2_i32_54 : i32
    %c0_55 = arith.constant 0 : index
    %75 = arith.index_cast %74 : i32 to index
    %c2_56 = arith.constant 2 : index
    %c0_57 = arith.constant 0 : index
    %76 = vector.load %arg2[%c0_55, %75, %c2_56, %c0_57] : memref<1x4x4x32xbf16, #tpu.memory_space<vmem>>, vector<1x2x2x32xbf16>
    %77 = vector.shape_cast %76 : vector<1x2x2x32xbf16> to vector<2x2x32xbf16>
    %78 = vector.shape_cast %77 : vector<2x2x32xbf16> to vector<4x32xbf16>
    %c8 = arith.constant 8 : index
    %c0_58 = arith.constant 0 : index
    %c0_59 = arith.constant 0 : index
    %79 = vector.load %arg3[%c8, %c0_58, %c0_59] : memref<9x32x128xbf16, #tpu.memory_space<vmem>>, vector<1x32x128xbf16>
    %80 = vector.shape_cast %79 : vector<1x32x128xbf16> to vector<32x128xbf16>
    %cst_60 = arith.constant dense<0.000000e+00> : vector<4x128xf32>
    %81 = tpu.matmul %78, %80, %cst_60 {dimension_numbers = #tpu.dot_dimension_numbers<[1], [0], [0], [1], [0, 0, 1, 1], [], []>} : vector<4x32xbf16>, vector<32x128xbf16>, vector<4x128xf32> -> vector<4x128xf32>
    %82 = arith.addf %73, %81 : vector<4x128xf32>
    %c0_61 = arith.constant 0 : index
    %c0_62 = arith.constant 0 : index
    %83 = vector.load %arg4[%c0_61, %c0_62] : memref<1x128xf32, #tpu.memory_space<vmem>>, vector<1x128xf32>
    %84 = vector.broadcast %83 : vector<1x128xf32> to vector<4x128xf32>
    %85 = arith.addf %82, %84 : vector<4x128xf32>
    %cst_63 = arith.constant 0.000000e+00 : f32
    %86 = vector.broadcast %cst_63 : f32 to vector<4x128xf32>
    %87 = arith.cmpf oge, %85, %86 : vector<4x128xf32>
    %c0_64 = arith.constant 0 : index
    %c0_65 = arith.constant 0 : index
    %88 = vector.load %arg5[%c0_64, %c0_65] : memref<1x128xf32, #tpu.memory_space<vmem>>, vector<1x128xf32>
    %89 = vector.broadcast %88 : vector<1x128xf32> to vector<4x128xf32>
    %90 = arith.mulf %89, %85 : vector<4x128xf32>
    %91 = arith.select %87, %85, %90 : vector<4x128xi1>, vector<4x128xf32>
    %92 = vector.shape_cast %91 : vector<4x128xf32> to vector<2x2x128xf32>
    %93 = arith.truncf %92 : vector<2x2x128xf32> to vector<2x2x128xbf16>
    %c0_66 = arith.constant 0 : index
    %c0_67 = arith.constant 0 : index
    %c0_68 = arith.constant 0 : index
    %c0_69 = arith.constant 0 : index
    %94 = vector.load %arg6[%c0_66, %c0_67, %c0_68, %c0_69] : memref<1x2x2x128xbf16, #tpu.memory_space<vmem>>, vector<1x2x2x128xbf16>
    %95 = vector.shape_cast %94 : vector<1x2x2x128xbf16> to vector<2x2x128xbf16>
    %96 = vector.shape_cast %93 : vector<2x2x128xbf16> to vector<1x2x2x128xbf16>
    tpu.vector_store %arg6[%c0_66, %c0_67, %c0_68, %c0_69], %96 {strides = array<i32>} : memref<1x2x2x128xbf16, #tpu.memory_space<vmem>>, vector<1x2x2x128xbf16>,
    return
  }
  func.func @transform_0(%arg0: i32, %arg1: i32) -> (i32, i32, i32, i32) {
    %c0_i32 = arith.constant 0 : i32
    %c0_i32_0 = arith.constant 0 : i32
    %c0_i32_1 = arith.constant 0 : i32
    %c0_i32_2 = arith.constant 0 : i32
    return %arg0, %c0_i32, %c0_i32_0, %c0_i32_1 : i32, i32, i32, i32
  }
  func.func @transform_1(%arg0: i32, %arg1: i32) -> (i32, i32, i32) {
    %c0_i32 = arith.constant 0 : i32
    %c0_i32_0 = arith.constant 0 : i32
    %c0_i32_1 = arith.constant 0 : i32
    %c0_i32_2 = arith.constant 0 : i32
    return %c0_i32, %c0_i32_0, %c0_i32_1 : i32, i32, i32
  }
  func.func @transform_2(%arg0: i32, %arg1: i32) -> (i32, i32) {
    %c0_i32 = arith.constant 0 : i32
    %c0_i32_0 = arith.constant 0 : i32
    %c0_i32_1 = arith.constant 0 : i32
    return %c0_i32, %c0_i32_0 : i32, i32
  }
  func.func @transform_3(%arg0: i32, %arg1: i32) -> (i32, i32) {
    %c0_i32 = arith.constant 0 : i32
    %c0_i32_0 = arith.constant 0 : i32
    %c0_i32_1 = arith.constant 0 : i32
    return %c0_i32, %c0_i32_0 : i32, i32
  }
  func.func @transform_4(%arg0: i32, %arg1: i32) -> (i32, i32, i32, i32) {
    %c0_i32 = arith.constant 0 : i32
    %c0_i32_0 = arith.constant 0 : i32
    %c0_i32_1 = arith.constant 0 : i32
    return %arg0, %arg1, %c0_i32, %c0_i32_0 : i32, i32, i32, i32
  }
}

module attributes {stable_mosaic.version = 11 : i64} {
  func.func @_conv3x3_s1_kernel(%arg0: i32, %arg1: i32, %arg2: memref<1x6x6x32xbf16, #tpu.memory_space<vmem>>, %arg3: memref<9x32x20xbf16, #tpu.memory_space<vmem>>, %arg4: memref<1x20xf32, #tpu.memory_space<vmem>>, %arg5: memref<1x4x4x20xbf16, #tpu.memory_space<vmem>>) attributes {dimension_semantics = [#tpu.dimension_semantics<parallel>, #tpu.dimension_semantics<parallel>], iteration_bounds = array<i64: 2, 1>, scalar_prefetch = 0 : i64, scratch_operands = 0 : i64, tpu.core_type = #tpu.core_type<tc>, window_params = [{transform_indices = @transform_0, window_bounds = array<i64: 1, 6, 6, 32>}, {pipeline_mode = #tpu.pipeline_mode<synchronous>, transform_indices = @transform_1, window_bounds = array<i64: 9, 32, 20>}, {pipeline_mode = #tpu.pipeline_mode<synchronous>, transform_indices = @transform_2, window_bounds = array<i64: 1, 20>}, {transform_indices = @transform_3, window_bounds = array<i64: 1, 4, 4, 20>}]} {
    %c4_i32 = arith.constant 4 : i32
    %0 = arith.muli %arg1, %c4_i32 : i32
    %cst = arith.constant 0.000000e+00 : f32
    %1 = vector.broadcast %cst : f32 to vector<16x20xf32>
    %c0_i32 = arith.constant 0 : i32
    %2 = arith.addi %0, %c0_i32 : i32
    %c0 = arith.constant 0 : index
    %3 = arith.index_cast %2 : i32 to index
    %c0_0 = arith.constant 0 : index
    %c0_1 = arith.constant 0 : index
    %4 = vector.load %arg2[%c0, %3, %c0_0, %c0_1] : memref<1x6x6x32xbf16, #tpu.memory_space<vmem>>, vector<1x4x4x32xbf16>
    %5 = vector.shape_cast %4 : vector<1x4x4x32xbf16> to vector<4x4x32xbf16>
    %6 = vector.shape_cast %5 : vector<4x4x32xbf16> to vector<16x32xbf16>
    %c0_2 = arith.constant 0 : index
    %c0_3 = arith.constant 0 : index
    %c0_4 = arith.constant 0 : index
    %7 = vector.load %arg3[%c0_2, %c0_3, %c0_4] : memref<9x32x20xbf16, #tpu.memory_space<vmem>>, vector<1x32x20xbf16>
    %8 = vector.shape_cast %7 : vector<1x32x20xbf16> to vector<32x20xbf16>
    %cst_5 = arith.constant dense<0.000000e+00> : vector<16x20xf32>
    %9 = tpu.matmul %6, %8, %cst_5 {dimension_numbers = #tpu.dot_dimension_numbers<[1], [0], [0], [1], [0, 0, 1, 1], [], []>} : vector<16x32xbf16>, vector<32x20xbf16>, vector<16x20xf32> -> vector<16x20xf32>
    %10 = arith.addf %1, %9 : vector<16x20xf32>
    %c0_i32_6 = arith.constant 0 : i32
    %11 = arith.addi %0, %c0_i32_6 : i32
    %c0_7 = arith.constant 0 : index
    %12 = arith.index_cast %11 : i32 to index
    %c1 = arith.constant 1 : index
    %c0_8 = arith.constant 0 : index
    %13 = vector.load %arg2[%c0_7, %12, %c1, %c0_8] : memref<1x6x6x32xbf16, #tpu.memory_space<vmem>>, vector<1x4x4x32xbf16>
    %14 = vector.shape_cast %13 : vector<1x4x4x32xbf16> to vector<4x4x32xbf16>
    %15 = vector.shape_cast %14 : vector<4x4x32xbf16> to vector<16x32xbf16>
    %c1_9 = arith.constant 1 : index
    %c0_10 = arith.constant 0 : index
    %c0_11 = arith.constant 0 : index
    %16 = vector.load %arg3[%c1_9, %c0_10, %c0_11] : memref<9x32x20xbf16, #tpu.memory_space<vmem>>, vector<1x32x20xbf16>
    %17 = vector.shape_cast %16 : vector<1x32x20xbf16> to vector<32x20xbf16>
    %cst_12 = arith.constant dense<0.000000e+00> : vector<16x20xf32>
    %18 = tpu.matmul %15, %17, %cst_12 {dimension_numbers = #tpu.dot_dimension_numbers<[1], [0], [0], [1], [0, 0, 1, 1], [], []>} : vector<16x32xbf16>, vector<32x20xbf16>, vector<16x20xf32> -> vector<16x20xf32>
    %19 = arith.addf %10, %18 : vector<16x20xf32>
    %c0_i32_13 = arith.constant 0 : i32
    %20 = arith.addi %0, %c0_i32_13 : i32
    %c0_14 = arith.constant 0 : index
    %21 = arith.index_cast %20 : i32 to index
    %c2 = arith.constant 2 : index
    %c0_15 = arith.constant 0 : index
    %22 = vector.load %arg2[%c0_14, %21, %c2, %c0_15] : memref<1x6x6x32xbf16, #tpu.memory_space<vmem>>, vector<1x4x4x32xbf16>
    %23 = vector.shape_cast %22 : vector<1x4x4x32xbf16> to vector<4x4x32xbf16>
    %24 = vector.shape_cast %23 : vector<4x4x32xbf16> to vector<16x32xbf16>
    %c2_16 = arith.constant 2 : index
    %c0_17 = arith.constant 0 : index
    %c0_18 = arith.constant 0 : index
    %25 = vector.load %arg3[%c2_16, %c0_17, %c0_18] : memref<9x32x20xbf16, #tpu.memory_space<vmem>>, vector<1x32x20xbf16>
    %26 = vector.shape_cast %25 : vector<1x32x20xbf16> to vector<32x20xbf16>
    %cst_19 = arith.constant dense<0.000000e+00> : vector<16x20xf32>
    %27 = tpu.matmul %24, %26, %cst_19 {dimension_numbers = #tpu.dot_dimension_numbers<[1], [0], [0], [1], [0, 0, 1, 1], [], []>} : vector<16x32xbf16>, vector<32x20xbf16>, vector<16x20xf32> -> vector<16x20xf32>
    %28 = arith.addf %19, %27 : vector<16x20xf32>
    %c1_i32 = arith.constant 1 : i32
    %29 = arith.addi %0, %c1_i32 : i32
    %c0_20 = arith.constant 0 : index
    %30 = arith.index_cast %29 : i32 to index
    %c0_21 = arith.constant 0 : index
    %c0_22 = arith.constant 0 : index
    %31 = vector.load %arg2[%c0_20, %30, %c0_21, %c0_22] : memref<1x6x6x32xbf16, #tpu.memory_space<vmem>>, vector<1x4x4x32xbf16>
    %32 = vector.shape_cast %31 : vector<1x4x4x32xbf16> to vector<4x4x32xbf16>
    %33 = vector.shape_cast %32 : vector<4x4x32xbf16> to vector<16x32xbf16>
    %c3 = arith.constant 3 : index
    %c0_23 = arith.constant 0 : index
    %c0_24 = arith.constant 0 : index
    %34 = vector.load %arg3[%c3, %c0_23, %c0_24] : memref<9x32x20xbf16, #tpu.memory_space<vmem>>, vector<1x32x20xbf16>
    %35 = vector.shape_cast %34 : vector<1x32x20xbf16> to vector<32x20xbf16>
    %cst_25 = arith.constant dense<0.000000e+00> : vector<16x20xf32>
    %36 = tpu.matmul %33, %35, %cst_25 {dimension_numbers = #tpu.dot_dimension_numbers<[1], [0], [0], [1], [0, 0, 1, 1], [], []>} : vector<16x32xbf16>, vector<32x20xbf16>, vector<16x20xf32> -> vector<16x20xf32>
    %37 = arith.addf %28, %36 : vector<16x20xf32>
    %c1_i32_26 = arith.constant 1 : i32
    %38 = arith.addi %0, %c1_i32_26 : i32
    %c0_27 = arith.constant 0 : index
    %39 = arith.index_cast %38 : i32 to index
    %c1_28 = arith.constant 1 : index
    %c0_29 = arith.constant 0 : index
    %40 = vector.load %arg2[%c0_27, %39, %c1_28, %c0_29] : memref<1x6x6x32xbf16, #tpu.memory_space<vmem>>, vector<1x4x4x32xbf16>
    %41 = vector.shape_cast %40 : vector<1x4x4x32xbf16> to vector<4x4x32xbf16>
    %42 = vector.shape_cast %41 : vector<4x4x32xbf16> to vector<16x32xbf16>
    %c4 = arith.constant 4 : index
    %c0_30 = arith.constant 0 : index
    %c0_31 = arith.constant 0 : index
    %43 = vector.load %arg3[%c4, %c0_30, %c0_31] : memref<9x32x20xbf16, #tpu.memory_space<vmem>>, vector<1x32x20xbf16>
    %44 = vector.shape_cast %43 : vector<1x32x20xbf16> to vector<32x20xbf16>
    %cst_32 = arith.constant dense<0.000000e+00> : vector<16x20xf32>
    %45 = tpu.matmul %42, %44, %cst_32 {dimension_numbers = #tpu.dot_dimension_numbers<[1], [0], [0], [1], [0, 0, 1, 1], [], []>} : vector<16x32xbf16>, vector<32x20xbf16>, vector<16x20xf32> -> vector<16x20xf32>
    %46 = arith.addf %37, %45 : vector<16x20xf32>
    %c1_i32_33 = arith.constant 1 : i32
    %47 = arith.addi %0, %c1_i32_33 : i32
    %c0_34 = arith.constant 0 : index
    %48 = arith.index_cast %47 : i32 to index
    %c2_35 = arith.constant 2 : index
    %c0_36 = arith.constant 0 : index
    %49 = vector.load %arg2[%c0_34, %48, %c2_35, %c0_36] : memref<1x6x6x32xbf16, #tpu.memory_space<vmem>>, vector<1x4x4x32xbf16>
    %50 = vector.shape_cast %49 : vector<1x4x4x32xbf16> to vector<4x4x32xbf16>
    %51 = vector.shape_cast %50 : vector<4x4x32xbf16> to vector<16x32xbf16>
    %c5 = arith.constant 5 : index
    %c0_37 = arith.constant 0 : index
    %c0_38 = arith.constant 0 : index
    %52 = vector.load %arg3[%c5, %c0_37, %c0_38] : memref<9x32x20xbf16, #tpu.memory_space<vmem>>, vector<1x32x20xbf16>
    %53 = vector.shape_cast %52 : vector<1x32x20xbf16> to vector<32x20xbf16>
    %cst_39 = arith.constant dense<0.000000e+00> : vector<16x20xf32>
    %54 = tpu.matmul %51, %53, %cst_39 {dimension_numbers = #tpu.dot_dimension_numbers<[1], [0], [0], [1], [0, 0, 1, 1], [], []>} : vector<16x32xbf16>, vector<32x20xbf16>, vector<16x20xf32> -> vector<16x20xf32>
    %55 = arith.addf %46, %54 : vector<16x20xf32>
    %c2_i32 = arith.constant 2 : i32
    %56 = arith.addi %0, %c2_i32 : i32
    %c0_40 = arith.constant 0 : index
    %57 = arith.index_cast %56 : i32 to index
    %c0_41 = arith.constant 0 : index
    %c0_42 = arith.constant 0 : index
    %58 = vector.load %arg2[%c0_40, %57, %c0_41, %c0_42] : memref<1x6x6x32xbf16, #tpu.memory_space<vmem>>, vector<1x4x4x32xbf16>
    %59 = vector.shape_cast %58 : vector<1x4x4x32xbf16> to vector<4x4x32xbf16>
    %60 = vector.shape_cast %59 : vector<4x4x32xbf16> to vector<16x32xbf16>
    %c6 = arith.constant 6 : index
    %c0_43 = arith.constant 0 : index
    %c0_44 = arith.constant 0 : index
    %61 = vector.load %arg3[%c6, %c0_43, %c0_44] : memref<9x32x20xbf16, #tpu.memory_space<vmem>>, vector<1x32x20xbf16>
    %62 = vector.shape_cast %61 : vector<1x32x20xbf16> to vector<32x20xbf16>
    %cst_45 = arith.constant dense<0.000000e+00> : vector<16x20xf32>
    %63 = tpu.matmul %60, %62, %cst_45 {dimension_numbers = #tpu.dot_dimension_numbers<[1], [0], [0], [1], [0, 0, 1, 1], [], []>} : vector<16x32xbf16>, vector<32x20xbf16>, vector<16x20xf32> -> vector<16x20xf32>
    %64 = arith.addf %55, %63 : vector<16x20xf32>
    %c2_i32_46 = arith.constant 2 : i32
    %65 = arith.addi %0, %c2_i32_46 : i32
    %c0_47 = arith.constant 0 : index
    %66 = arith.index_cast %65 : i32 to index
    %c1_48 = arith.constant 1 : index
    %c0_49 = arith.constant 0 : index
    %67 = vector.load %arg2[%c0_47, %66, %c1_48, %c0_49] : memref<1x6x6x32xbf16, #tpu.memory_space<vmem>>, vector<1x4x4x32xbf16>
    %68 = vector.shape_cast %67 : vector<1x4x4x32xbf16> to vector<4x4x32xbf16>
    %69 = vector.shape_cast %68 : vector<4x4x32xbf16> to vector<16x32xbf16>
    %c7 = arith.constant 7 : index
    %c0_50 = arith.constant 0 : index
    %c0_51 = arith.constant 0 : index
    %70 = vector.load %arg3[%c7, %c0_50, %c0_51] : memref<9x32x20xbf16, #tpu.memory_space<vmem>>, vector<1x32x20xbf16>
    %71 = vector.shape_cast %70 : vector<1x32x20xbf16> to vector<32x20xbf16>
    %cst_52 = arith.constant dense<0.000000e+00> : vector<16x20xf32>
    %72 = tpu.matmul %69, %71, %cst_52 {dimension_numbers = #tpu.dot_dimension_numbers<[1], [0], [0], [1], [0, 0, 1, 1], [], []>} : vector<16x32xbf16>, vector<32x20xbf16>, vector<16x20xf32> -> vector<16x20xf32>
    %73 = arith.addf %64, %72 : vector<16x20xf32>
    %c2_i32_53 = arith.constant 2 : i32
    %74 = arith.addi %0, %c2_i32_53 : i32
    %c0_54 = arith.constant 0 : index
    %75 = arith.index_cast %74 : i32 to index
    %c2_55 = arith.constant 2 : index
    %c0_56 = arith.constant 0 : index
    %76 = vector.load %arg2[%c0_54, %75, %c2_55, %c0_56] : memref<1x6x6x32xbf16, #tpu.memory_space<vmem>>, vector<1x4x4x32xbf16>
    %77 = vector.shape_cast %76 : vector<1x4x4x32xbf16> to vector<4x4x32xbf16>
    %78 = vector.shape_cast %77 : vector<4x4x32xbf16> to vector<16x32xbf16>
    %c8 = arith.constant 8 : index
    %c0_57 = arith.constant 0 : index
    %c0_58 = arith.constant 0 : index
    %79 = vector.load %arg3[%c8, %c0_57, %c0_58] : memref<9x32x20xbf16, #tpu.memory_space<vmem>>, vector<1x32x20xbf16>
    %80 = vector.shape_cast %79 : vector<1x32x20xbf16> to vector<32x20xbf16>
    %cst_59 = arith.constant dense<0.000000e+00> : vector<16x20xf32>
    %81 = tpu.matmul %78, %80, %cst_59 {dimension_numbers = #tpu.dot_dimension_numbers<[1], [0], [0], [1], [0, 0, 1, 1], [], []>} : vector<16x32xbf16>, vector<32x20xbf16>, vector<16x20xf32> -> vector<16x20xf32>
    %82 = arith.addf %73, %81 : vector<16x20xf32>
    %c0_60 = arith.constant 0 : index
    %c0_61 = arith.constant 0 : index
    %83 = vector.load %arg4[%c0_60, %c0_61] : memref<1x20xf32, #tpu.memory_space<vmem>>, vector<1x20xf32>
    %84 = vector.broadcast %83 : vector<1x20xf32> to vector<16x20xf32>
    %85 = arith.addf %82, %84 : vector<16x20xf32>
    %86 = vector.shape_cast %85 : vector<16x20xf32> to vector<4x4x20xf32>
    %87 = arith.truncf %86 : vector<4x4x20xf32> to vector<4x4x20xbf16>
    %c0_62 = arith.constant 0 : index
    %c0_63 = arith.constant 0 : index
    %c0_64 = arith.constant 0 : index
    %c0_65 = arith.constant 0 : index
    %88 = vector.load %arg5[%c0_62, %c0_63, %c0_64, %c0_65] : memref<1x4x4x20xbf16, #tpu.memory_space<vmem>>, vector<1x4x4x20xbf16>
    %89 = vector.shape_cast %88 : vector<1x4x4x20xbf16> to vector<4x4x20xbf16>
    %90 = vector.shape_cast %87 : vector<4x4x20xbf16> to vector<1x4x4x20xbf16>
    tpu.vector_store %arg5[%c0_62, %c0_63, %c0_64, %c0_65], %90 {strides = array<i32>} : memref<1x4x4x20xbf16, #tpu.memory_space<vmem>>, vector<1x4x4x20xbf16>,
    return
  }
  func.func @transform_0(%arg0: i32, %arg1: i32) -> (i32, i32, i32, i32) {
    %c0_i32 = arith.constant 0 : i32
    %c0_i32_0 = arith.constant 0 : i32
    %c0_i32_1 = arith.constant 0 : i32
    %c0_i32_2 = arith.constant 0 : i32
    return %arg0, %c0_i32, %c0_i32_0, %c0_i32_1 : i32, i32, i32, i32
  }
  func.func @transform_1(%arg0: i32, %arg1: i32) -> (i32, i32, i32) {
    %c0_i32 = arith.constant 0 : i32
    %c0_i32_0 = arith.constant 0 : i32
    %c0_i32_1 = arith.constant 0 : i32
    %c0_i32_2 = arith.constant 0 : i32
    return %c0_i32, %c0_i32_0, %c0_i32_1 : i32, i32, i32
  }
  func.func @transform_2(%arg0: i32, %arg1: i32) -> (i32, i32) {
    %c0_i32 = arith.constant 0 : i32
    %c0_i32_0 = arith.constant 0 : i32
    %c0_i32_1 = arith.constant 0 : i32
    return %c0_i32, %c0_i32_0 : i32, i32
  }
  func.func @transform_3(%arg0: i32, %arg1: i32) -> (i32, i32, i32, i32) {
    %c0_i32 = arith.constant 0 : i32
    %c0_i32_0 = arith.constant 0 : i32
    %c0_i32_1 = arith.constant 0 : i32
    return %arg0, %arg1, %c0_i32, %c0_i32_0 : i32, i32, i32, i32
  }
}

</mosaic_0001>

<llo_original>
// kernel: _lambda_.12
$region0: #{_lambda_.12}
  #allocation0 [shape = 'u32[]', space=smem, size = 0x4, offset = 0x4, fixed_abs, tag = 'smem constant byte address 0x4 - core index']
  #allocation1 [shape = 'u32[144,128]{1,0:T(1,128)}', space=vmem, size = 0x12000, scoped, tag = 'internal scratch']
  %s0 = inlined_call_operand.vmem [shape: bf16[32,90], index: 0, kind: input, shape index: {}]
  %s1 = inlined_call_operand.vmem [shape: bf16[90,16], index: 1, kind: input, shape index: {}]
  %s2 = inlined_call_operand.vmem [shape: f32[1,16], index: 2, kind: input, shape index: {}]
  %s3 = inlined_call_operand.vmem [shape: f32[1,16], index: 3, kind: input, shape index: {}]
  %s4 = inlined_call_operand.vmem [shape: bf16[32,16], index: 4, kind: output, shape index: {}]
  %s5 = sld [smem:[#allocation0]]
  $region26: #{_lambda_.12} parent=0
    _
  %s7 = ssub.s32 1, %s5
  %s8 = scalar_select 0, %s7, %s5
  // Predicated region
  $region2: #{_lambda_.12} parent=0 // pred_check
    _
  $region3: #{_lambda_.12} parent=0 // pred_check_branch
    %10 = sbr.rel (0) target = $region5
  $region4: #{_lambda_.12} parent=0 // pred_region
    _
  $region5: #{_lambda_.12} parent=0 // pred_fallthru
    _
  // Predicated region
  $region6: #{_lambda_.12} parent=0 // pred_check
    _
  $region7: #{_lambda_.12} parent=0 // pred_check_branch
    %12 = sbr.rel (0) target = $region9
  $region8: #{_lambda_.12} parent=0 // pred_region
    _
  $region9: #{_lambda_.12} parent=0 // pred_fallthru
    _
  // Predicated region
  $region10: #{_lambda_.12} parent=0 // pred_check
    _
  $region11: #{_lambda_.12} parent=0 // pred_check_branch
    %14 = sbr.rel (0) target = $region13
  $region12: #{_lambda_.12} parent=0 // pred_region
    _
  $region13: #{_lambda_.12} parent=0 // pred_fallthru
    _
  // Predicated region
  $region14: #{_lambda_.12} parent=0 // pred_check
    _
  $region15: #{_lambda_.12} parent=0 // pred_check_branch
    %16 = sbr.rel (0) target = $region17
  $region16: #{_lambda_.12} parent=0 // pred_region
    _
  $region17: #{_lambda_.12} parent=0 // pred_fallthru
    _
  %v18 = vld [vmem:[%s0] sm:$0xf]
  %v19 = vld [vmem:[%s0 + $0x4] sm:$0xf]
  %v20 = vld [vmem:[%s0 + $0x8] sm:$0xf]
  %v21 = vld [vmem:[%s0 + $0xc] sm:$0xf]
  %v22 = vld [vmem:[%s1] sm:$0xf]
  %v23 = vld [vmem:[%s1 + $0x4] sm:$0xf]
  %v24 = vld [vmem:[%s1 + $0x8] sm:$0xf]
  %v25 = vld [vmem:[%s1 + $0xc] sm:$0xf]
  %v26 = vld [vmem:[%s1 + $0x10] sm:$0xf]
  %v27 = vld [vmem:[%s1 + $0x14] sm:$0xf]
  %v28 = vld [vmem:[%s1 + $0x18] sm:$0xf]
  %v29 = vld [vmem:[%s1 + $0x1c] sm:$0xf]
  %v30 = vld [vmem:[%s1 + $0x20] sm:$0xf]
  %v31 = vld [vmem:[%s1 + $0x24] sm:$0xf]
  %v32 = vld [vmem:[%s1 + $0x28] sm:$0xf]
  %v33 = vld [vmem:[%s1 + $0x2c] sm:$0x1]
  %v34 = vld [vmem:[%s2] sm:$0x1]
  %v36 = vlaneseq
  %v37 = vshrl.u32 %v36, 7
  %v38 = vsub.s32 0, %v37
  %v39 = vrot.slane %v34, %v38
  %v45 = vunpack.c.l.b16 %v18
  %v46 = vunpack.c.l.b16 %v19
  %v47 = vunpack.c.l.b16 %v20
  %v48 = vunpack.c.l.b16 %v21
  %v49 = vpack.c.b16 %v46, %v45
  %v50 = vpack.c.b16 %v48, %v47
  %v63 = vunpack.c.l.b16 %v22
  %v64 = vunpack.c.l.b16 %v23
  %v65 = vunpack.c.l.b16 %v24
  %v66 = vunpack.c.l.b16 %v25
  %v67 = vunpack.c.l.b16 %v26
  %v68 = vunpack.c.l.b16 %v27
  %v69 = vunpack.c.l.b16 %v28
  %v70 = vunpack.c.l.b16 %v29
  %v71 = vunpack.c.l.b16 %v30
  %v72 = vunpack.c.l.b16 %v31
  %v73 = vunpack.c.l.b16 %v32
  %v74 = vunpack.c.l.b16 %v33
  %v75 = vpack.c.b16 %v64, %v63
  %v76 = vpack.c.b16 %v66, %v65
  %v77 = vpack.c.b16 %v68, %v67
  %v78 = vpack.c.b16 %v70, %v69
  %v79 = vpack.c.b16 %v72, %v71
  %v80 = vpack.c.b16 %v74, %v73
  %vm86 = vcmask 736256
  %v88 = vsel %vm86, %v49, 0
  %v91 = vsel %vm86, %v50, 0
  %vm93 = vcmask 1044480
  %v95 = vsel %vm93, %v80, 0
  %97 = vmatprep.subr.bf16.mxu0 0
  %98 = vmatpush1.bf16.msra.mxu0 0
  %99 = vmatprep.subr.bf16.mxu0 0
  %100 = vmatpush1.bf16.msra.mxu0 0
  %101 = vmatprep.subr.bf16.mxu0 0
  %102 = vmatpush1.bf16.msra.mxu0 %v95
  %103 = vmatprep.subr.bf16.mxu0 0
  %104 = vmatpush1.bf16.msra.mxu0 %v79
  %105 = vmatprep.subr.bf16.mxu0 0
  %106 = vmatpush1.bf16.msra.mxu0 %v78
  %107 = vmatprep.subr.bf16.mxu0 0
  %108 = vmatpush1.bf16.msra.mxu0 %v77
  %109 = vmatprep.subr.bf16.mxu0 0
  %110 = vmatpush1.bf16.msra.mxu0 %v76
  %111 = vmatprep.subr.bf16.mxu0 0
  %112 = vmatpush1.bf16.msra.mxu0 %v75
  %113 = vmatprep.subr.bf16.mxu0 0
  %114 = vmatpush2.bf16.msra.mxu0 0
  %115 = vmatprep.subr.bf16.mxu0 0
  %116 = vmatpush2.bf16.msra.mxu0 0
  %117 = vmatprep.subr.bf16.mxu0 0
  %118 = vmatpush2.bf16.msra.mxu0 0
  %119 = vmatprep.subr.bf16.mxu0 0
  %120 = vmatpush2.bf16.msra.mxu0 0
  %121 = vmatprep.subr.bf16.mxu0 0
  %122 = vmatpush2.bf16.msra.mxu0 0
  %123 = vmatprep.subr.bf16.mxu0 0
  %124 = vmatpush2.bf16.msra.mxu0 0
  %125 = vmatprep.subr.bf16.mxu0 0
  %126 = vmatpush2.bf16.msra.mxu0 0
  %127 = vmatprep.subr.bf16.mxu0 0
  %128 = vmatpush2.bf16.msra.mxu0 0
  %129 = vmatprep.mubr.bf16.mxu0 0
  %130 = vmatmul.mubr.bf16.gmra.mxu0 %v88
  %v131 = vpop.f32.mrf.mxu0
  %v132 = vadd.f32 %v39, %v131
  %v133 = vpop.f32.mrf.mxu0
  %v134 = vpop.f32.mrf.mxu0
  %v135 = vadd.f32 %v39, %v134
  %v136 = vpop.f32.mrf.mxu0
  %137 = vmatprep.mubr.bf16.mxu0 0
  %138 = vmatmul.mubr.bf16.gmra.mxu0 %v91
  %v139 = vpop.f32.mrf.mxu0
  %v140 = vadd.f32 %v39, %v139
  %v141 = vpop.f32.mrf.mxu0
  %v142 = vpop.f32.mrf.mxu0
  %v143 = vadd.f32 %v39, %v142
  %v144 = vpop.f32.mrf.mxu0
  %145 = vdwg.mxu0
  %vm146 = vcmp.ge.f32.partialorder %v132, 0.0
  %vm147 = vcmp.ge.f32.partialorder %v135, 0.0
  %vm148 = vcmp.ge.f32.partialorder %v140, 0.0
  %vm149 = vcmp.ge.f32.partialorder %v143, 0.0
  %v150 = vld [vmem:[%s3] sm:$0x1]
  %v152 = vlaneseq
  %v153 = vshrl.u32 %v152, 7
  %v154 = vsub.s32 0, %v153
  %v155 = vrot.slane %v150, %v154
  %v157 = vmul.f32 %v155, %v132
  %v158 = vmul.f32 %v155, %v135
  %v159 = vmul.f32 %v155, %v140
  %v160 = vmul.f32 %v155, %v143
  %v161 = vsel %vm146, %v132, %v157
  %v162 = vsel %vm147, %v135, %v158
  %v163 = vsel %vm148, %v140, %v159
  %v164 = vsel %vm149, %v143, %v160
  %v165 = vpack.c.bf16 %v162, %v161
  %v166 = vpack.c.bf16 %v164, %v163
  %v169 = vunpack.c.l.b16 %v165
  %v170 = vunpack.c.h.b16 %v165
  %v171 = vunpack.c.l.b16 %v166
  %v172 = vunpack.c.h.b16 %v166
  %v173 = vpack.c.b16 %v169, %v169
  %v174 = vpack.c.b16 %v170, %v170
  %v175 = vpack.c.b16 %v171, %v171
  %v176 = vpack.c.b16 %v172, %v172
  %vm181 = vcmask 125952
  %182 = vst.msk [vmem:[%s4] sm:$0xf] %vm181, %v173
  %183 = vst.msk [vmem:[%s4 + $0x4] sm:$0xf] %vm181, %v174
  %184 = vst.msk [vmem:[%s4 + $0x8] sm:$0xf] %vm181, %v175
  %185 = vst.msk [vmem:[%s4 + $0xc] sm:$0xf] %vm181, %v176
  // Predicated region
  $region18: #{_lambda_.12} parent=0 // pred_check
    _
  $region19: #{_lambda_.12} parent=0 // pred_check_branch
    %187 = sbr.rel (0) target = $region21
  $region20: #{_lambda_.12} parent=0 // pred_region
    _
  $region21: #{_lambda_.12} parent=0 // pred_fallthru
    _
  // Predicated region
  $region22: #{_lambda_.12} parent=0 // pred_check
    _
  $region23: #{_lambda_.12} parent=0 // pred_check_branch
    %189 = sbr.rel (0) target = $region25
  $region24: #{_lambda_.12} parent=0 // pred_region
    _
  $region25: #{_lambda_.12} parent=0 // pred_fallthru
    _

// kernel: tile.18
$region0: #{tile.18}
  #allocation0 [shape = 's32[1]{0}', space=sflag, size = 0x4, scoped, tag = 'scoped memory for tile.18']
  %s0 = inlined_call_operand.vmem [shape: f32[32], index: 0, kind: input, shape index: {}]
  %s1 = inlined_call_operand.vmem [shape: f32[4,32], index: 1, kind: output, shape index: {}]
  // Predicated region
  $region2: #{tile.18} parent=0 // pred_check
    _
  $region3: #{tile.18} parent=0 // pred_check_branch
    %3 = sbr.rel (0) target = $region5
  $region4: #{tile.18} parent=0 // pred_region
    _
  $region5: #{tile.18} parent=0 // pred_fallthru
    _
  %v4 = vld [vmem:[%s0] ss:$0 sm:$0xff]
  %5 = vst [vmem:[%s1] sm:$0xf] %v4

// kernel: tile.23
$region0: #{tile.23}
  %s0 = inlined_call_operand.vmem [shape: f32[4,32], index: 0, kind: input, shape index: {}]
  %s1 = inlined_call_operand.vmem [shape: f32[1,128], index: 1, kind: output, shape index: {}]
  $region1: #{tile.23} parent=0
    #allocation0 [shape = 'u8[4096]{0}', space=vmem, size = 0x1000, scoped, tag = 'scoped mem for output reshape']
    #allocation1 [shape = 'u8[4096]{0}', space=vmem, size = 0x1000, scoped, tag = 'scoped mem for input reshape']
    %s3 = sshll.u32 1, 4
    %s4 = ssub.s32 %s3, 1
    %v5 = vld [vmem:[%s0] sm:%s4]
    %6 = vst [vmem:[#allocation1] sm:%s4] %v5
    %v7 = vld [vmem:[#allocation1] sm:$0x1]
    %vm8 = vcmask 261120
    %9 = vst.msk [vmem:[#allocation0] sm:$0x1] %vm8, %v7
    %s10 = scalar_lea.vmem [#allocation1], 3
    %v11 = vld [vmem:[%s10] sm:$0x1]
    %12 = vrot.lane.b32.xlu0 %v11, 96
    %v13 = vpop.permute.xlu0 %12
    %vm14 = vcmask 1048320
    %15 = vst.msk [vmem:[#allocation0] sm:$0x1] %vm14, %v13
    %s16 = scalar_lea.vmem [#allocation1], 2
    %v17 = vld [vmem:[%s16] sm:$0x1]
    %18 = vrot.lane.b32.xlu0 %v17, 64
    %v19 = vpop.permute.xlu0 %18
    %vm20 = vcmask 785920
    %21 = vst.msk [vmem:[#allocation0] sm:$0x1] %vm20, %v19
    %s22 = scalar_lea.vmem [#allocation1], 1
    %v23 = vld [vmem:[%s22] sm:$0x1]
    %24 = vrot.lane.b32.xlu0 %v23, 32
    %v25 = vpop.permute.xlu0 %24
    %vm26 = vcmask 523520
    %27 = vst.msk [vmem:[#allocation0] sm:$0x1] %vm26, %v25
    %s29 = sshll.u32 1, 1
    %s30 = ssub.s32 %s29, 1
    %v32 = vld [vmem:[#allocation0] sm:%s30]
    %s33 = sshll.u32 1, 1
    %s34 = ssub.s32 %s33, 1
    %35 = vst [vmem:[%s1] sm:%s34] %v32

// kernel: _lambda_.13
$region0: #{_lambda_.13}
  #allocation0 [shape = 'u32[]', space=smem, size = 0x4, offset = 0x4, fixed_abs, tag = 'smem constant byte address 0x4 - core index']
  #allocation1 [shape = 'u32[144,128]{1,0:T(1,128)}', space=vmem, size = 0x12000, scoped, tag = 'internal scratch']
  %s0 = inlined_call_operand.vmem [shape: bf16[8,144], index: 0, kind: input, shape index: {}]
  %s1 = inlined_call_operand.vmem [shape: bf16[144,32], index: 1, kind: input, shape index: {}]
  %s2 = inlined_call_operand.vmem [shape: f32[1,32], index: 2, kind: input, shape index: {}]
  %s3 = inlined_call_operand.vmem [shape: f32[1,32], index: 3, kind: input, shape index: {}]
  %s4 = inlined_call_operand.vmem [shape: bf16[8,32], index: 4, kind: output, shape index: {}]
  %s5 = sld [smem:[#allocation0]]
  $region26: #{_lambda_.13} parent=0
    _
  %s7 = ssub.s32 1, %s5
  %s8 = scalar_select 0, %s7, %s5
  // Predicated region
  $region2: #{_lambda_.13} parent=0 // pred_check
    _
  $region3: #{_lambda_.13} parent=0 // pred_check_branch
    %10 = sbr.rel (0) target = $region5
  $region4: #{_lambda_.13} parent=0 // pred_region
    _
  $region5: #{_lambda_.13} parent=0 // pred_fallthru
    _
  // Predicated region
  $region6: #{_lambda_.13} parent=0 // pred_check
    _
  $region7: #{_lambda_.13} parent=0 // pred_check_branch
    %12 = sbr.rel (0) target = $region9
  $region8: #{_lambda_.13} parent=0 // pred_region
    _
  $region9: #{_lambda_.13} parent=0 // pred_fallthru
    _
  // Predicated region
  $region10: #{_lambda_.13} parent=0 // pred_check
    _
  $region11: #{_lambda_.13} parent=0 // pred_check_branch
    %14 = sbr.rel (0) target = $region13
  $region12: #{_lambda_.13} parent=0 // pred_region
    _
  $region13: #{_lambda_.13} parent=0 // pred_fallthru
    _
  // Predicated region
  $region14: #{_lambda_.13} parent=0 // pred_check
    _
  $region15: #{_lambda_.13} parent=0 // pred_check_branch
    %16 = sbr.rel (0) target = $region17
  $region16: #{_lambda_.13} parent=0 // pred_region
    _
  $region17: #{_lambda_.13} parent=0 // pred_fallthru
    _
  %v18 = vld [vmem:[%s0] sm:$0xff]
  %v19 = vld [vmem:[%s1] sm:$0xf]
  %v20 = vld [vmem:[%s1 + $0x4] sm:$0xf]
  %v21 = vld [vmem:[%s1 + $0x8] sm:$0xf]
  %v22 = vld [vmem:[%s1 + $0xc] sm:$0xf]
  %v23 = vld [vmem:[%s1 + $0x10] sm:$0xf]
  %v24 = vld [vmem:[%s1 + $0x14] sm:$0xf]
  %v25 = vld [vmem:[%s1 + $0x18] sm:$0xf]
  %v26 = vld [vmem:[%s1 + $0x1c] sm:$0xf]
  %v27 = vld [vmem:[%s1 + $0x20] sm:$0xf]
  %v28 = vld [vmem:[%s1 + $0x24] sm:$0xf]
  %v29 = vld [vmem:[%s1 + $0x28] sm:$0xf]
  %v30 = vld [vmem:[%s1 + $0x2c] sm:$0xf]
  %v31 = vld [vmem:[%s1 + $0x30] sm:$0xf]
  %v32 = vld [vmem:[%s1 + $0x34] sm:$0xf]
  %v33 = vld [vmem:[%s1 + $0x38] sm:$0xf]
  %v34 = vld [vmem:[%s1 + $0x3c] sm:$0xf]
  %v35 = vld [vmem:[%s1 + $0x40] sm:$0xf]
  %v36 = vld [vmem:[%s1 + $0x44] sm:$0xf]
  %v37 = vld [vmem:[%s2] sm:$0x1]
  %v39 = vlaneseq
  %v40 = vshrl.u32 %v39, 7
  %v41 = vsub.s32 0, %v40
  %v42 = vrot.slane %v37, %v41
  %v45 = vunpack.c.l.b16 %v18
  %v46 = vunpack.c.h.b16 %v18
  %v47 = vpack.c.b16 %v45, %v45
  %v48 = vpack.c.b16 %v46, %v46
  %v68 = vunpack.c.l.b16 %v19
  %v69 = vunpack.c.l.b16 %v20
  %v70 = vunpack.c.l.b16 %v21
  %v71 = vunpack.c.l.b16 %v22
  %v72 = vunpack.c.l.b16 %v23
  %v73 = vunpack.c.l.b16 %v24
  %v74 = vunpack.c.l.b16 %v25
  %v75 = vunpack.c.l.b16 %v26
  %v76 = vunpack.c.l.b16 %v27
  %v77 = vunpack.c.l.b16 %v28
  %v78 = vunpack.c.l.b16 %v29
  %v79 = vunpack.c.l.b16 %v30
  %v80 = vunpack.c.l.b16 %v31
  %v81 = vunpack.c.l.b16 %v32
  %v82 = vunpack.c.l.b16 %v33
  %v83 = vunpack.c.l.b16 %v34
  %v84 = vunpack.c.l.b16 %v35
  %v85 = vunpack.c.l.b16 %v36
  %v86 = vpack.c.b16 %v69, %v68
  %v87 = vpack.c.b16 %v71, %v70
  %v88 = vpack.c.b16 %v73, %v72
  %v89 = vpack.c.b16 %v75, %v74
  %v90 = vpack.c.b16 %v77, %v76
  %v91 = vpack.c.b16 %v79, %v78
  %v92 = vpack.c.b16 %v81, %v80
  %v93 = vpack.c.b16 %v83, %v82
  %v94 = vpack.c.b16 %v85, %v84
  %vm104 = vcmask 130048
  %v106 = vsel %vm104, %v48, 0
  %108 = vmatprep.subr.bf16.mxu0 0
  %109 = vmatpush1.bf16.msra.mxu0 %v93
  %110 = vmatprep.subr.bf16.mxu0 0
  %111 = vmatpush1.bf16.msra.mxu0 %v92
  %112 = vmatprep.subr.bf16.mxu0 0
  %113 = vmatpush1.bf16.msra.mxu0 %v91
  %114 = vmatprep.subr.bf16.mxu0 0
  %115 = vmatpush1.bf16.msra.mxu0 %v90
  %116 = vmatprep.subr.bf16.mxu0 0
  %117 = vmatpush1.bf16.msra.mxu0 %v89
  %118 = vmatprep.subr.bf16.mxu0 0
  %119 = vmatpush1.bf16.msra.mxu0 %v88
  %120 = vmatprep.subr.bf16.mxu0 0
  %121 = vmatpush1.bf16.msra.mxu0 %v87
  %122 = vmatprep.subr.bf16.mxu0 0
  %123 = vmatpush1.bf16.msra.mxu0 %v86
  %124 = vmatprep.subr.bf16.mxu0 0
  %125 = vmatpush2.bf16.msra.mxu0 0
  %126 = vmatprep.subr.bf16.mxu0 0
  %127 = vmatpush2.bf16.msra.mxu0 0
  %128 = vmatprep.subr.bf16.mxu0 0
  %129 = vmatpush2.bf16.msra.mxu0 0
  %130 = vmatprep.subr.bf16.mxu0 0
  %131 = vmatpush2.bf16.msra.mxu0 0
  %132 = vmatprep.subr.bf16.mxu0 0
  %133 = vmatpush2.bf16.msra.mxu0 0
  %134 = vmatprep.subr.bf16.mxu0 0
  %135 = vmatpush2.bf16.msra.mxu0 0
  %136 = vmatprep.subr.bf16.mxu0 0
  %137 = vmatpush2.bf16.msra.mxu0 0
  %138 = vmatprep.subr.bf16.mxu0 0
  %139 = vmatpush2.bf16.msra.mxu0 %v94
  %140 = vmatprep.mubr.bf16.mxu0 %v106
  %141 = vmatmul.mubr.bf16.gmra.mxu0 %v47
  %v142 = vpop.f32.mrf.mxu0
  %v143 = vadd.f32 %v42, %v142
  %v144 = vpop.f32.mrf.mxu0
  %v145 = vpop.f32.mrf.mxu0
  %v146 = vpop.f32.mrf.mxu0
  %147 = vdwg.mxu0
  %vm148 = vcmp.ge.f32.partialorder %v143, 0.0
  %v149 = vld [vmem:[%s3] sm:$0x1]
  %v151 = vlaneseq
  %v152 = vshrl.u32 %v151, 7
  %v153 = vsub.s32 0, %v152
  %v154 = vrot.slane %v149, %v153
  %v156 = vmul.f32 %v154, %v143
  %v157 = vsel %vm148, %v143, %v156
  %v158 = vpack.c.bf16 %v157, %v157
  %vm159 = vcmask 257024
  %160 = vst.msk [vmem:[%s4] sm:$0xf] %vm159, %v158
  // Predicated region
  $region18: #{_lambda_.13} parent=0 // pred_check
    _
  $region19: #{_lambda_.13} parent=0 // pred_check_branch
    %162 = sbr.rel (0) target = $region21
  $region20: #{_lambda_.13} parent=0 // pred_region
    _
  $region21: #{_lambda_.13} parent=0 // pred_fallthru
    _
  // Predicated region
  $region22: #{_lambda_.13} parent=0 // pred_check
    _
  $region23: #{_lambda_.13} parent=0 // pred_check_branch
    %164 = sbr.rel (0) target = $region25
  $region24: #{_lambda_.13} parent=0 // pred_region
    _
  $region25: #{_lambda_.13} parent=0 // pred_fallthru
    _

// kernel: _lambda_.14
$region0: #{_lambda_.14}
  #allocation0 [shape = 'u32[]', space=smem, size = 0x4, offset = 0x4, fixed_abs, tag = 'smem constant byte address 0x4 - core index']
  #allocation1 [shape = 'u32[144,128]{1,0:T(1,128)}', space=vmem, size = 0x12000, scoped, tag = 'internal scratch']
  %s0 = inlined_call_operand.vmem [shape: bf16[2,4,4,32], index: 0, kind: input, shape index: {}]
  %s1 = inlined_call_operand.vmem [shape: bf16[9,32,32], index: 1, kind: input, shape index: {}]
  %s2 = inlined_call_operand.vmem [shape: f32[1,32], index: 2, kind: input, shape index: {}]
  %s3 = inlined_call_operand.vmem [shape: f32[1,32], index: 3, kind: input, shape index: {}]
  %s4 = inlined_call_operand.vmem [shape: bf16[2,2,2,32], index: 4, kind: output, shape index: {}]
  %s5 = sld [smem:[#allocation0]]
  $region49: #{_lambda_.14} parent=0
    _
  %s7 = ssub.s32 1, %s5
  %s8 = scalar_select 0, %s7, %s5
  loop: start=0, step=1, limit=4
  $region2: #{_lambda_.14} parent=0 // loop_pre_header
    _
  $region3: #{_lambda_.14} parent=0 // loop_header
    %s10 = sphi 0, %s14
    %p11 = scmp.ge.s32.totalorder %s10, 4
    %s17 = sphi 0, %s29
    %s18 = sphi 0, %s25
    %s19 = sphi 0, %s17
    %s20 = sphi 0, %s18
    %s21 = sphi 0, %s19
    %s22 = sphi 0, %s20
    %s32 = sphi 0, %s34
    %s35 = sphi 0, %s32
    %s36 = sphi 0, %s35
    %s52 = sphi 0, %s36
    %s56 = sphi 0, %s56
    %s58 = sphi 0, %s56
    %s59 = sphi 0, %s58
    %s73 = sphi 0, %s59
    %s77 = sphi 0, %s77
    %s79 = sphi 0, %s77
    %s80 = sphi 0, %s79
    %s94 = sphi 0, %s80
    %s98 = sphi 0, %s98
    %s100 = sphi 0, %s98
    %s101 = sphi 0, %s100
    %s115 = sphi 0, %s101
    %s123 = sphi 0, %s125
    %s126 = sphi 0, %s123
    %s127 = sphi 0, %s126
    %s143 = sphi 0, %s127
  $region4: #{_lambda_.14} parent=0 // loop_header_branch
    %13 = sbr.rel (%p11) target = $region8
  $region5: #{_lambda_.14} parent=0 // loop_body
    %s15 = ssub.s32 %s10, 1
    %s16 = ssub.s32 %s10, 2
    %s23 = sadd.s32 1, %s18
    %p24 = scmp.ge.s32.totalorder %s23, 1
    %s25 = scalar_select %p24, 0, %s23
    %s26 = sadd.s32 1, %s17
    %s27 = scalar_select %p24, %s26, %s17
    %p28 = scmp.ge.s32.totalorder %s27, 2
    %s29 = scalar_select %p28, 0, %s27
    %s30 = ssub.s32 %s17, %s29
    %p31 = scmp.eq.s32.totalorder %s30, 0
    %s33 = sadd.s32 %s32, 1
    %s34 = scalar_select %p31, %s32, %s33
    %p37 = pneg %p31
    %p38 = scmp.eq.s32.totalorder %s10, 1
    %p39 = por %p37, %p38
    %p40 = scmp.ne.s32.totalorder %s32, %s35
    %p41 = scmp.eq.s32.totalorder %s10, 0
    %p42 = por %p40, %p41
    %p43 = scmp.ne.s32.totalorder %s32, %s35
    %p44 = scmp.eq.s32.totalorder %s15, 1
    %p45 = por %p43, %p44
    %p46 = scmp.ne.s32.totalorder %s35, %s36
    %p47 = scmp.eq.s32.totalorder %s15, 0
    %p48 = por %p46, %p47
    %p49 = scmp.ne.s32.totalorder %s35, %s36
    %p50 = scmp.eq.s32.totalorder %s16, 1
    %p51 = por %p49, %p50
    %p53 = scmp.ne.s32.totalorder %s36, %s52
    %p54 = scmp.eq.s32.totalorder %s16, 0
    %p55 = por %p53, %p54
    %s57 = sadd.s32 %s56, 1
    %p60 = scmp.eq.s32.totalorder %s10, 1
    %p61 = scmp.ne.s32.totalorder %s56, %s58
    %p62 = scmp.eq.s32.totalorder %s10, 0
    %p63 = por %p61, %p62
    %p64 = scmp.ne.s32.totalorder %s56, %s58
    %p65 = scmp.eq.s32.totalorder %s15, 1
    %p66 = por %p64, %p65
    %p67 = scmp.ne.s32.totalorder %s58, %s59
    %p68 = scmp.eq.s32.totalorder %s15, 0
    %p69 = por %p67, %p68
    %p70 = scmp.ne.s32.totalorder %s58, %s59
    %p71 = scmp.eq.s32.totalorder %s16, 1
    %p72 = por %p70, %p71
    %p74 = scmp.ne.s32.totalorder %s59, %s73
    %p75 = scmp.eq.s32.totalorder %s16, 0
    %p76 = por %p74, %p75
    %s78 = sadd.s32 %s77, 1
    %p81 = scmp.eq.s32.totalorder %s10, 1
    %p82 = scmp.ne.s32.totalorder %s77, %s79
    %p83 = scmp.eq.s32.totalorder %s10, 0
    %p84 = por %p82, %p83
    %p85 = scmp.ne.s32.totalorder %s77, %s79
    %p86 = scmp.eq.s32.totalorder %s15, 1
    %p87 = por %p85, %p86
    %p88 = scmp.ne.s32.totalorder %s79, %s80
    %p89 = scmp.eq.s32.totalorder %s15, 0
    %p90 = por %p88, %p89
    %p91 = scmp.ne.s32.totalorder %s79, %s80
    %p92 = scmp.eq.s32.totalorder %s16, 1
    %p93 = por %p91, %p92
    %p95 = scmp.ne.s32.totalorder %s80, %s94
    %p96 = scmp.eq.s32.totalorder %s16, 0
    %p97 = por %p95, %p96
    %s99 = sadd.s32 %s98, 1
    %p102 = scmp.eq.s32.totalorder %s10, 1
    %p103 = scmp.ne.s32.totalorder %s98, %s100
    %p104 = scmp.eq.s32.totalorder %s10, 0
    %p105 = por %p103, %p104
    %p106 = scmp.ne.s32.totalorder %s98, %s100
    %p107 = scmp.eq.s32.totalorder %s15, 1
    %p108 = por %p106, %p107
    %p109 = scmp.ne.s32.totalorder %s100, %s101
    %p110 = scmp.eq.s32.totalorder %s15, 0
    %p111 = por %p109, %p110
    %p112 = scmp.ne.s32.totalorder %s100, %s101
    %p113 = scmp.eq.s32.totalorder %s16, 1
    %p114 = por %p112, %p113
    %p116 = scmp.ne.s32.totalorder %s101, %s115
    %p117 = scmp.eq.s32.totalorder %s16, 0
    %p118 = por %p116, %p117
    %s119 = ssub.s32 %s17, %s29
    %s120 = ssub.s32 %s18, %s25
    %s121 = sor.u32 %s119, %s120
    %p122 = scmp.eq.s32.totalorder %s121, 0
    %s124 = sadd.s32 %s123, 1
    %s125 = scalar_select %p122, %s123, %s124
    %p128 = pneg %p122
    %p129 = scmp.eq.s32.totalorder %s10, 1
    %p130 = por %p128, %p129
    %p131 = scmp.ne.s32.totalorder %s123, %s126
    %p132 = scmp.eq.s32.totalorder %s10, 0
    %p133 = por %p131, %p132
    %p134 = scmp.ne.s32.totalorder %s123, %s126
    %p135 = scmp.eq.s32.totalorder %s15, 1
    %p136 = por %p134, %p135
    %p137 = scmp.ne.s32.totalorder %s126, %s127
    %p138 = scmp.eq.s32.totalorder %s15, 0
    %p139 = por %p137, %p138
    %p140 = scmp.ne.s32.totalorder %s126, %s127
    %p141 = scmp.eq.s32.totalorder %s16, 1
    %p142 = por %p140, %p141
    %p144 = scmp.ne.s32.totalorder %s127, %s143
    %p145 = scmp.eq.s32.totalorder %s16, 0
    %p146 = por %p144, %p145
    %p147 = scmp.le.s32.totalorder 1, %s10
    %p148 = scmp.lt.s32.totalorder %s10, 3
    %p149 = pnand %p147, %p148
    %p150 = pneg %p149
    // Predicated region
    $region9: #{_lambda_.14} parent=5 // pred_check
      _
    $region10: #{_lambda_.14} parent=5 // pred_check_branch
      %152 = sbr.rel (%p149) target = $region12
    $region11: #{_lambda_.14} parent=5 // pred_region
      %s153 = ssub.s32 %s10, 1
      // Predicated region
      $region13: #{_lambda_.14} parent=11 // pred_check
        %p154 = pneg %p69
      $region14: #{_lambda_.14} parent=11 // pred_check_branch
        %156 = sbr.rel (%p154) target = $region16
      $region15: #{_lambda_.14} parent=11 // pred_region
        _
      $region16: #{_lambda_.14} parent=11 // pred_fallthru
        _
      // Predicated region
      $region17: #{_lambda_.14} parent=11 // pred_check
        %p157 = pneg %p90
      $region18: #{_lambda_.14} parent=11 // pred_check_branch
        %159 = sbr.rel (%p157) target = $region20
      $region19: #{_lambda_.14} parent=11 // pred_region
        _
      $region20: #{_lambda_.14} parent=11 // pred_fallthru
        _
      // Predicated region
      $region21: #{_lambda_.14} parent=11 // pred_check
        %p160 = pneg %p111
      $region22: #{_lambda_.14} parent=11 // pred_check_branch
        %162 = sbr.rel (%p160) target = $region24
      $region23: #{_lambda_.14} parent=11 // pred_region
        _
      $region24: #{_lambda_.14} parent=11 // pred_fallthru
        _
    $region12: #{_lambda_.14} parent=5 // pred_fallthru
      _
    %p163 = scmp.lt.s32.totalorder %s10, 2
    // Predicated region
    $region25: #{_lambda_.14} parent=5 // pred_check
      %p164 = pneg %p163
    $region26: #{_lambda_.14} parent=5 // pred_check_branch
      %166 = sbr.rel (%p164) target = $region28
    $region27: #{_lambda_.14} parent=5 // pred_region
      // Predicated region
      $region29: #{_lambda_.14} parent=27 // pred_check
        %p167 = pneg %p42
      $region30: #{_lambda_.14} parent=27 // pred_check_branch
        %169 = sbr.rel (%p167) target = $region32
      $region31: #{_lambda_.14} parent=27 // pred_region
        %p170 = scmp.lt.s32.totalorder %s17, 1
        %s171 = scalar_select %p170, %s17, 1
        %s172 = smul.addr %s171, 4
        %s173 = smul.addr %s172, 2
        %s174 = scalar_lea.vmem %s0, %s173
      $region32: #{_lambda_.14} parent=27 // pred_fallthru
        _
    $region28: #{_lambda_.14} parent=5 // pred_fallthru
      _
    %p175 = scmp.le.s32.totalorder 1, %s10
    %p176 = scmp.lt.s32.totalorder %s10, 3
    %p177 = pnand %p175, %p176
    %p178 = pneg %p177
    // Predicated region
    $region33: #{_lambda_.14} parent=5 // pred_check
      _
    $region34: #{_lambda_.14} parent=5 // pred_check_branch
      %180 = sbr.rel (%p177) target = $region36
    $region35: #{_lambda_.14} parent=5 // pred_region
      %s181 = ssub.s32 %s10, 1
      %p182 = scmp.lt.s32.totalorder %s19, 1
      %s183 = scalar_select %p182, %s19, 1
      %s184 = smul.addr %s183, 4
      %s185 = smul.addr %s184, 2
      %s186 = scalar_lea.vmem %s0, %s185
      %p187 = pneg %p48
      %p188 = pneg %p45
      %p189 = pneg %p69
      %p190 = pneg %p66
      %p191 = pneg %p90
      %p192 = pneg %p87
      %p193 = pneg %p111
      %p194 = pneg %p108
      %p195 = pneg %p139
      %p196 = pneg %p136
      %s197 = smul.u32 2, %s20
      %p198 = scmp.lt.s32.totalorder %s19, 1
      %s199 = scalar_select %p198, %s19, 1
      %p200 = scmp.lt.s32.totalorder %s197, 1
      %s201 = scalar_select %p200, %s197, 1
      %s202 = smul.addr %s199, 2
      %s203 = sadd.s32 %s201, %s202
      %s204 = scalar_lea.vmem %s4, %s203
      %p205 = scmp.lt.s32.totalorder %s19, 1
      %s206 = scalar_select %p205, %s19, 1
      %s207 = smul.addr %s206, 4
      %s208 = smul.addr %s207, 2
      %s209 = scalar_lea.vmem %s0, %s208
      %s210 = smul.u32 2, %s20
      %p211 = scmp.lt.s32.totalorder %s19, 1
      %s212 = scalar_select %p211, %s19, 1
      %p213 = scmp.lt.s32.totalorder %s210, 1
      %s214 = scalar_select %p213, %s210, 1
      %s215 = smul.addr %s212, 2
      %s216 = sadd.s32 %s214, %s215
      %s217 = scalar_lea.vmem %s4, %s216
      %s218 = smul.u32 2, %s20
      %s220 = smul.u32 %s20, 2
      %s221 = smul.addr %s220, 2
      %s222 = scalar_lea.vmem %s209, %s221
      %v223 = vld [vmem:[%s222] sm:$0x1]
      %v224 = vld [vmem:[%s222 + $0x2] sm:$0x1]
      %v225 = vld [vmem:[%s1] sm:$0xf]
      %v226 = vld [vmem:[%s1 + $0x4] sm:$0xf]
      %v227 = vld [vmem:[%s1 + $0x8] sm:$0xf]
      %v228 = vld [vmem:[%s1 + $0xc] sm:$0xf]
      %v229 = vld [vmem:[%s222] sm:$0x3]
      %v230 = vld [vmem:[%s222 + $0x2] sm:$0x3]
      %v234 = vunpack.c.l.s4 1966171168
      %v235 = vunpack.c.0.s8 %v234
      %v236 = vlaneseq
      %v237 = vshrl.u32 %v236, 7
      %v238 = vsub.s32 %v235, %v237
      %v239 = vrot.slane %v229, %v238
      %v240 = vcombine.high %v239, %v239
      %v242 = vunpack.c.l.s4 1966171168
      %v243 = vunpack.c.0.s8 %v242
      %v244 = vlaneseq
      %v245 = vshrl.u32 %v244, 7
      %v246 = vsub.s32 %v243, %v245
      %v247 = vrot.slane %v230, %v246
      %v248 = vcombine.high %v247, %v247
      %vm249 = vsmask.f32 256
      %vm250 = vsmask.f32 1284
      %vm251 = vmor %vm249, %vm250
      %vm252 = vsmask.f32 2312
      %vm253 = vmor %vm251, %vm252
      %vm254 = vsmask.f32 3340
      %vm255 = vmor %vm253, %vm254
      %vm256 = vsmask.f32 4368
      %vm257 = vmor %vm255, %vm256
      %vm258 = vsmask.f32 5396
      %vm259 = vmor %vm257, %vm258
      %vm260 = vsmask.f32 6424
      %vm261 = vmor %vm259, %vm260
      %vm262 = vsmask.f32 7452
      %vm263 = vmor %vm261, %vm262
      %v265 = vshrl.u32 %v239, 16
      %v267 = vrot.slane %v265, 7
      %v268 = vrot.slane %v267, 1
      %v270 = vshll.u32 %v240, 16
      %v272 = vsel %vm263, %v268, %v270
      %v274 = vshrl.u32 %v247, 16
      %v276 = vrot.slane %v274, 7
      %v277 = vrot.slane %v276, 1
      %v279 = vshll.u32 %v248, 16
      %v281 = vsel %vm263, %v277, %v279
      %s282 = scalar_lea.vmem %s1, 16
      %v283 = vld [vmem:[%s282] sm:$0xf]
      %v284 = vld [vmem:[%s282 + $0x4] sm:$0xf]
      %v285 = vld [vmem:[%s282 + $0x8] sm:$0xf]
      %v286 = vld [vmem:[%s282 + $0xc] sm:$0xf]
      %v287 = vcombine.low %v272, %v281
      %v289 = vunpack.c.l.s4 1966171168
      %v290 = vunpack.c.0.s8 %v289
      %v291 = vlaneseq
      %v292 = vshrl.u32 %v291, 7
      %v293 = vsub.s32 %v290, %v292
      %v294 = vrot.slane %v287, %v293
      %v296 = vunpack.c.l.s4 1966171168
      %v297 = vunpack.c.0.s8 %v296
      %v298 = vlaneseq
      %v299 = vshrl.u32 %v298, 7
      %v300 = vsub.s32 %v297, %v299
      %v301 = vrot.slane %v294, %v300
      %v306 = vunpack.c.l.b16 %v283
      %v307 = vunpack.c.l.b16 %v284
      %v308 = vunpack.c.l.b16 %v285
      %v309 = vunpack.c.l.b16 %v286
      %v310 = vpack.c.b16 %v307, %v306
      %v311 = vpack.c.b16 %v309, %v308
      %vm314 = vcmask 261120
      %v316 = vsel %vm314, %v301, 0
      %318 = vmatprep.subr.bf16.mxu0 0
      %319 = vmatpush1.bf16.msra.mxu0 0
      %320 = vmatprep.subr.bf16.mxu0 0
      %321 = vmatpush1.bf16.msra.mxu0 0
      %322 = vmatprep.subr.bf16.mxu0 0
      %323 = vmatpush1.bf16.msra.mxu0 0
      %324 = vmatprep.subr.bf16.mxu0 0
      %325 = vmatpush1.bf16.msra.mxu0 0
      %326 = vmatprep.subr.bf16.mxu0 0
      %327 = vmatpush1.bf16.msra.mxu0 0
      %328 = vmatprep.subr.bf16.mxu0 0
      %329 = vmatpush1.bf16.msra.mxu0 0
      %330 = vmatprep.subr.bf16.mxu0 0
      %331 = vmatpush1.bf16.msra.mxu0 %v311
      %332 = vmatprep.subr.bf16.mxu0 0
      %333 = vmatpush1.bf16.msra.mxu0 %v310
      %334 = vmatprep.subr.bf16.mxu0 0
      %335 = vmatpush2.bf16.msra.mxu0 0
      %336 = vmatprep.subr.bf16.mxu0 0
      %337 = vmatpush2.bf16.msra.mxu0 0
      %338 = vmatprep.subr.bf16.mxu0 0
      %339 = vmatpush2.bf16.msra.mxu0 0
      %340 = vmatprep.subr.bf16.mxu0 0
      %341 = vmatpush2.bf16.msra.mxu0 0
      %342 = vmatprep.subr.bf16.mxu0 0
      %343 = vmatpush2.bf16.msra.mxu0 0
      %344 = vmatprep.subr.bf16.mxu0 0
      %345 = vmatpush2.bf16.msra.mxu0 0
      %346 = vmatprep.subr.bf16.mxu0 0
      %347 = vmatpush2.bf16.msra.mxu0 0
      %348 = vmatprep.subr.bf16.mxu0 0
      %349 = vmatpush2.bf16.msra.mxu0 0
      %350 = vmatprep.mubr.bf16.mxu0 0
      %351 = vmatmul.mubr.bf16.gmra.mxu0 %v316
      %v352 = vpop.f32.mrf.mxu0
      %v353 = vadd.f32 0.0, %v352
      %v354 = vpop.f32.mrf.mxu0
      %v355 = vpop.f32.mrf.mxu0
      %v356 = vpop.f32.mrf.mxu0
      %357 = vdwg.mxu0
      %v360 = vcombine.low %v223, %v224
      %v362 = vunpack.c.l.s4 1966171168
      %v363 = vunpack.c.0.s8 %v362
      %v364 = vlaneseq
      %v365 = vshrl.u32 %v364, 7
      %v366 = vsub.s32 %v363, %v365
      %v367 = vrot.slane %v360, %v366
      %v369 = vunpack.c.l.s4 1966171168
      %v370 = vunpack.c.0.s8 %v369
      %v371 = vlaneseq
      %v372 = vshrl.u32 %v371, 7
      %v373 = vsub.s32 %v370, %v372
      %v374 = vrot.slane %v367, %v373
      %v379 = vunpack.c.l.b16 %v225
      %v380 = vunpack.c.l.b16 %v226
      %v381 = vunpack.c.l.b16 %v227
      %v382 = vunpack.c.l.b16 %v228
      %v383 = vpack.c.b16 %v380, %v379
      %v384 = vpack.c.b16 %v382, %v381
      %v388 = vsel %vm314, %v374, 0
      %390 = vmatprep.subr.bf16.mxu0 0
      %391 = vmatpush1.bf16.msra.mxu0 0
      %392 = vmatprep.subr.bf16.mxu0 0
      %393 = vmatpush1.bf16.msra.mxu0 0
      %394 = vmatprep.subr.bf16.mxu0 0
      %395 = vmatpush1.bf16.msra.mxu0 0
      %396 = vmatprep.subr.bf16.mxu0 0
      %397 = vmatpush1.bf16.msra.mxu0 0
      %398 = vmatprep.subr.bf16.mxu0 0
      %399 = vmatpush1.bf16.msra.mxu0 0
      %400 = vmatprep.subr.bf16.mxu0 0
      %401 = vmatpush1.bf16.msra.mxu0 0
      %402 = vmatprep.subr.bf16.mxu0 0
      %403 = vmatpush1.bf16.msra.mxu0 %v384
      %404 = vmatprep.subr.bf16.mxu0 0
      %405 = vmatpush1.bf16.msra.mxu0 %v383
      %406 = vmatprep.subr.bf16.mxu0 0
      %407 = vmatpush2.bf16.msra.mxu0 0
      %408 = vmatprep.subr.bf16.mxu0 0
      %409 = vmatpush2.bf16.msra.mxu0 0
      %410 = vmatprep.subr.bf16.mxu0 0
      %411 = vmatpush2.bf16.msra.mxu0 0
      %412 = vmatprep.subr.bf16.mxu0 0
      %413 = vmatpush2.bf16.msra.mxu0 0
      %414 = vmatprep.subr.bf16.mxu0 0
      %415 = vmatpush2.bf16.msra.mxu0 0
      %416 = vmatprep.subr.bf16.mxu0 0
      %417 = vmatpush2.bf16.msra.mxu0 0
      %418 = vmatprep.subr.bf16.mxu0 0
      %419 = vmatpush2.bf16.msra.mxu0 0
      %420 = vmatprep.subr.bf16.mxu0 0
      %421 = vmatpush2.bf16.msra.mxu0 0
      %422 = vmatprep.mubr.bf16.mxu0 0
      %423 = vmatmul.mubr.bf16.gmra.mxu0 %v388
      %v424 = vpop.f32.mrf.mxu0
      %v425 = vadd.f32 %v353, %v424
      %v426 = vpop.f32.mrf.mxu0
      %v427 = vpop.f32.mrf.mxu0
      %v428 = vpop.f32.mrf.mxu0
      %429 = vdwg.mxu0
      %v430 = vld [vmem:[%s222] sm:$0x2]
      %v431 = vld [vmem:[%s222 + $0x2] sm:$0x2]
      %v435 = vunpack.c.l.s4 1966171168
      %v436 = vunpack.c.0.s8 %v435
      %v437 = vlaneseq
      %v438 = vshrl.u32 %v437, 7
      %v439 = vsub.s32 %v436, %v438
      %v440 = vrot.slane %v430, %v439
      %v441 = vcombine.high %v440, %v440
      %v443 = vunpack.c.l.s4 1966171168
      %v444 = vunpack.c.0.s8 %v443
      %v445 = vlaneseq
      %v446 = vshrl.u32 %v445, 7
      %v447 = vsub.s32 %v444, %v446
      %v448 = vrot.slane %v431, %v447
      %v449 = vcombine.high %v448, %v448
      %s450 = scalar_lea.vmem %s1, 32
      %v451 = vld [vmem:[%s450] sm:$0xf]
      %v452 = vld [vmem:[%s450 + $0x4] sm:$0xf]
      %v453 = vld [vmem:[%s450 + $0x8] sm:$0xf]
      %v454 = vld [vmem:[%s450 + $0xc] sm:$0xf]
      %v455 = vcombine.low %v441, %v449
      %v457 = vunpack.c.l.s4 1966171168
      %v458 = vunpack.c.0.s8 %v457
      %v459 = vlaneseq
      %v460 = vshrl.u32 %v459, 7
      %v461 = vsub.s32 %v458, %v460
      %v462 = vrot.slane %v455, %v461
      %v464 = vunpack.c.l.s4 1966171168
      %v465 = vunpack.c.0.s8 %v464
      %v466 = vlaneseq
      %v467 = vshrl.u32 %v466, 7
      %v468 = vsub.s32 %v465, %v467
      %v469 = vrot.slane %v462, %v468
      %v474 = vunpack.c.l.b16 %v451
      %v475 = vunpack.c.l.b16 %v452
      %v476 = vunpack.c.l.b16 %v453
      %v477 = vunpack.c.l.b16 %v454
      %v478 = vpack.c.b16 %v475, %v474
      %v479 = vpack.c.b16 %v477, %v476
      %v483 = vsel %vm314, %v469, 0
      %485 = vmatprep.subr.bf16.mxu0 0
      %486 = vmatpush1.bf16.msra.mxu0 0
      %487 = vmatprep.subr.bf16.mxu0 0
      %488 = vmatpush1.bf16.msra.mxu0 0
      %489 = vmatprep.subr.bf16.mxu0 0
      %490 = vmatpush1.bf16.msra.mxu0 0
      %491 = vmatprep.subr.bf16.mxu0 0
      %492 = vmatpush1.bf16.msra.mxu0 0
      %493 = vmatprep.subr.bf16.mxu0 0
      %494 = vmatpush1.bf16.msra.mxu0 0
      %495 = vmatprep.subr.bf16.mxu0 0
      %496 = vmatpush1.bf16.msra.mxu0 0
      %497 = vmatprep.subr.bf16.mxu0 0
      %498 = vmatpush1.bf16.msra.mxu0 %v479
      %499 = vmatprep.subr.bf16.mxu0 0
      %500 = vmatpush1.bf16.msra.mxu0 %v478
      %501 = vmatprep.subr.bf16.mxu0 0
      %502 = vmatpush2.bf16.msra.mxu0 0
      %503 = vmatprep.subr.bf16.mxu0 0
      %504 = vmatpush2.bf16.msra.mxu0 0
      %505 = vmatprep.subr.bf16.mxu0 0
      %506 = vmatpush2.bf16.msra.mxu0 0
      %507 = vmatprep.subr.bf16.mxu0 0
      %508 = vmatpush2.bf16.msra.mxu0 0
      %509 = vmatprep.subr.bf16.mxu0 0
      %510 = vmatpush2.bf16.msra.mxu0 0
      %511 = vmatprep.subr.bf16.mxu0 0
      %512 = vmatpush2.bf16.msra.mxu0 0
      %513 = vmatprep.subr.bf16.mxu0 0
      %514 = vmatpush2.bf16.msra.mxu0 0
      %515 = vmatprep.subr.bf16.mxu0 0
      %516 = vmatpush2.bf16.msra.mxu0 0
      %517 = vmatprep.mubr.bf16.mxu0 0
      %518 = vmatmul.mubr.bf16.gmra.mxu0 %v483
      %v519 = vpop.f32.mrf.mxu0
      %v520 = vadd.f32 0.0, %v519
      %v521 = vpop.f32.mrf.mxu0
      %v522 = vpop.f32.mrf.mxu0
      %v523 = vpop.f32.mrf.mxu0
      %524 = vdwg.mxu0
      %v525 = vadd.f32 %v425, %v520
      %s526 = sadd.s32 %s220, 1
      %s527 = smul.addr %s526, 2
      %s528 = scalar_lea.vmem %s209, %s527
      %v529 = vld [vmem:[%s528] sm:$0x1]
      %v530 = vld [vmem:[%s528 + $0x2] sm:$0x1]
      %s531 = scalar_lea.vmem %s1, 48
      %v532 = vld [vmem:[%s531] sm:$0xf]
      %v533 = vld [vmem:[%s531 + $0x4] sm:$0xf]
      %v534 = vld [vmem:[%s531 + $0x8] sm:$0xf]
      %v535 = vld [vmem:[%s531 + $0xc] sm:$0xf]
      %v538 = vcombine.low %v529, %v530
      %v540 = vunpack.c.l.s4 1966171168
      %v541 = vunpack.c.0.s8 %v540
      %v542 = vlaneseq
      %v543 = vshrl.u32 %v542, 7
      %v544 = vsub.s32 %v541, %v543
      %v545 = vrot.slane %v538, %v544
      %v547 = vunpack.c.l.s4 1966171168
      %v548 = vunpack.c.0.s8 %v547
      %v549 = vlaneseq
      %v550 = vshrl.u32 %v549, 7
      %v551 = vsub.s32 %v548, %v550
      %v552 = vrot.slane %v545, %v551
      %v557 = vunpack.c.l.b16 %v532
      %v558 = vunpack.c.l.b16 %v533
      %v559 = vunpack.c.l.b16 %v534
      %v560 = vunpack.c.l.b16 %v535
      %v561 = vpack.c.b16 %v558, %v557
      %v562 = vpack.c.b16 %v560, %v559
      %v566 = vsel %vm314, %v552, 0
      %568 = vmatprep.subr.bf16.mxu0 0
      %569 = vmatpush1.bf16.msra.mxu0 0
      %570 = vmatprep.subr.bf16.mxu0 0
      %571 = vmatpush1.bf16.msra.mxu0 0
      %572 = vmatprep.subr.bf16.mxu0 0
      %573 = vmatpush1.bf16.msra.mxu0 0
      %574 = vmatprep.subr.bf16.mxu0 0
      %575 = vmatpush1.bf16.msra.mxu0 0
      %576 = vmatprep.subr.bf16.mxu0 0
      %577 = vmatpush1.bf16.msra.mxu0 0
      %578 = vmatprep.subr.bf16.mxu0 0
      %579 = vmatpush1.bf16.msra.mxu0 0
      %580 = vmatprep.subr.bf16.mxu0 0
      %581 = vmatpush1.bf16.msra.mxu0 %v562
      %582 = vmatprep.subr.bf16.mxu0 0
      %583 = vmatpush1.bf16.msra.mxu0 %v561
      %584 = vmatprep.subr.bf16.mxu0 0
      %585 = vmatpush2.bf16.msra.mxu0 0
      %586 = vmatprep.subr.bf16.mxu0 0
      %587 = vmatpush2.bf16.msra.mxu0 0
      %588 = vmatprep.subr.bf16.mxu0 0
      %589 = vmatpush2.bf16.msra.mxu0 0
      %590 = vmatprep.subr.bf16.mxu0 0
      %591 = vmatpush2.bf16.msra.mxu0 0
      %592 = vmatprep.subr.bf16.mxu0 0
      %593 = vmatpush2.bf16.msra.mxu0 0
      %594 = vmatprep.subr.bf16.mxu0 0
      %595 = vmatpush2.bf16.msra.mxu0 0
      %596 = vmatprep.subr.bf16.mxu0 0
      %597 = vmatpush2.bf16.msra.mxu0 0
      %598 = vmatprep.subr.bf16.mxu0 0
      %599 = vmatpush2.bf16.msra.mxu0 0
      %600 = vmatprep.mubr.bf16.mxu0 0
      %601 = vmatmul.mubr.bf16.gmra.mxu0 %v566
      %v602 = vpop.f32.mrf.mxu0
      %v603 = vadd.f32 0.0, %v602
      %v604 = vpop.f32.mrf.mxu0
      %v605 = vpop.f32.mrf.mxu0
      %v606 = vpop.f32.mrf.mxu0
      %607 = vdwg.mxu0
      %v608 = vadd.f32 %v525, %v603
      %v609 = vld [vmem:[%s528] sm:$0x3]
      %v610 = vld [vmem:[%s528 + $0x2] sm:$0x3]
      %v614 = vunpack.c.l.s4 1966171168
      %v615 = vunpack.c.0.s8 %v614
      %v616 = vlaneseq
      %v617 = vshrl.u32 %v616, 7
      %v618 = vsub.s32 %v615, %v617
      %v619 = vrot.slane %v609, %v618
      %v620 = vcombine.high %v619, %v619
      %v622 = vunpack.c.l.s4 1966171168
      %v623 = vunpack.c.0.s8 %v622
      %v624 = vlaneseq
      %v625 = vshrl.u32 %v624, 7
      %v626 = vsub.s32 %v623, %v625
      %v627 = vrot.slane %v610, %v626
      %v628 = vcombine.high %v627, %v627
      %v630 = vshrl.u32 %v619, 16
      %v632 = vrot.slane %v630, 7
      %v633 = vrot.slane %v632, 1
      %v635 = vshll.u32 %v620, 16
      %v637 = vsel %vm263, %v633, %v635
      %v639 = vshrl.u32 %v627, 16
      %v641 = vrot.slane %v639, 7
      %v642 = vrot.slane %v641, 1
      %v644 = vshll.u32 %v628, 16
      %v646 = vsel %vm263, %v642, %v644
      %s647 = scalar_lea.vmem %s1, 64
      %v648 = vld [vmem:[%s647] sm:$0xf]
      %v649 = vld [vmem:[%s647 + $0x4] sm:$0xf]
      %v650 = vld [vmem:[%s647 + $0x8] sm:$0xf]
      %v651 = vld [vmem:[%s647 + $0xc] sm:$0xf]
      %v652 = vcombine.low %v637, %v646
      %v654 = vunpack.c.l.s4 1966171168
      %v655 = vunpack.c.0.s8 %v654
      %v656 = vlaneseq
      %v657 = vshrl.u32 %v656, 7
      %v658 = vsub.s32 %v655, %v657
      %v659 = vrot.slane %v652, %v658
      %v661 = vunpack.c.l.s4 1966171168
      %v662 = vunpack.c.0.s8 %v661
      %v663 = vlaneseq
      %v664 = vshrl.u32 %v663, 7
      %v665 = vsub.s32 %v662, %v664
      %v666 = vrot.slane %v659, %v665
      %v671 = vunpack.c.l.b16 %v648
      %v672 = vunpack.c.l.b16 %v649
      %v673 = vunpack.c.l.b16 %v650
      %v674 = vunpack.c.l.b16 %v651
      %v675 = vpack.c.b16 %v672, %v671
      %v676 = vpack.c.b16 %v674, %v673
      %v680 = vsel %vm314, %v666, 0
      %682 = vmatprep.subr.bf16.mxu0 0
      %683 = vmatpush1.bf16.msra.mxu0 0
      %684 = vmatprep.subr.bf16.mxu0 0
      %685 = vmatpush1.bf16.msra.mxu0 0
      %686 = vmatprep.subr.bf16.mxu0 0
      %687 = vmatpush1.bf16.msra.mxu0 0
      %688 = vmatprep.subr.bf16.mxu0 0
      %689 = vmatpush1.bf16.msra.mxu0 0
      %690 = vmatprep.subr.bf16.mxu0 0
      %691 = vmatpush1.bf16.msra.mxu0 0
      %692 = vmatprep.subr.bf16.mxu0 0
      %693 = vmatpush1.bf16.msra.mxu0 0
      %694 = vmatprep.subr.bf16.mxu0 0
      %695 = vmatpush1.bf16.msra.mxu0 %v676
      %696 = vmatprep.subr.bf16.mxu0 0
      %697 = vmatpush1.bf16.msra.mxu0 %v675
      %698 = vmatprep.subr.bf16.mxu0 0
      %699 = vmatpush2.bf16.msra.mxu0 0
      %700 = vmatprep.subr.bf16.mxu0 0
      %701 = vmatpush2.bf16.msra.mxu0 0
      %702 = vmatprep.subr.bf16.mxu0 0
      %703 = vmatpush2.bf16.msra.mxu0 0
      %704 = vmatprep.subr.bf16.mxu0 0
      %705 = vmatpush2.bf16.msra.mxu0 0
      %706 = vmatprep.subr.bf16.mxu0 0
      %707 = vmatpush2.bf16.msra.mxu0 0
      %708 = vmatprep.subr.bf16.mxu0 0
      %709 = vmatpush2.bf16.msra.mxu0 0
      %710 = vmatprep.subr.bf16.mxu0 0
      %711 = vmatpush2.bf16.msra.mxu0 0
      %712 = vmatprep.subr.bf16.mxu0 0
      %713 = vmatpush2.bf16.msra.mxu0 0
      %714 = vmatprep.mubr.bf16.mxu0 0
      %715 = vmatmul.mubr.bf16.gmra.mxu0 %v680
      %v716 = vpop.f32.mrf.mxu0
      %v717 = vadd.f32 0.0, %v716
      %v718 = vpop.f32.mrf.mxu0
      %v719 = vpop.f32.mrf.mxu0
      %v720 = vpop.f32.mrf.mxu0
      %721 = vdwg.mxu0
      %v722 = vadd.f32 %v608, %v717
      %v723 = vld [vmem:[%s528] sm:$0x2]
      %v724 = vld [vmem:[%s528 + $0x2] sm:$0x2]
      %v728 = vunpack.c.l.s4 1966171168
      %v729 = vunpack.c.0.s8 %v728
      %v730 = vlaneseq
      %v731 = vshrl.u32 %v730, 7
      %v732 = vsub.s32 %v729, %v731
      %v733 = vrot.slane %v723, %v732
      %v734 = vcombine.high %v733, %v733
      %v736 = vunpack.c.l.s4 1966171168
      %v737 = vunpack.c.0.s8 %v736
      %v738 = vlaneseq
      %v739 = vshrl.u32 %v738, 7
      %v740 = vsub.s32 %v737, %v739
      %v741 = vrot.slane %v724, %v740
      %v742 = vcombine.high %v741, %v741
      %s743 = scalar_lea.vmem %s1, 80
      %v744 = vld [vmem:[%s743] sm:$0xf]
      %v745 = vld [vmem:[%s743 + $0x4] sm:$0xf]
      %v746 = vld [vmem:[%s743 + $0x8] sm:$0xf]
      %v747 = vld [vmem:[%s743 + $0xc] sm:$0xf]
      %v748 = vcombine.low %v734, %v742
      %v750 = vunpack.c.l.s4 1966171168
      %v751 = vunpack.c.0.s8 %v750
      %v752 = vlaneseq
      %v753 = vshrl.u32 %v752, 7
      %v754 = vsub.s32 %v751, %v753
      %v755 = vrot.slane %v748, %v754
      %v757 = vunpack.c.l.s4 1966171168
      %v758 = vunpack.c.0.s8 %v757
      %v759 = vlaneseq
      %v760 = vshrl.u32 %v759, 7
      %v761 = vsub.s32 %v758, %v760
      %v762 = vrot.slane %v755, %v761
      %v767 = vunpack.c.l.b16 %v744
      %v768 = vunpack.c.l.b16 %v745
      %v769 = vunpack.c.l.b16 %v746
      %v770 = vunpack.c.l.b16 %v747
      %v771 = vpack.c.b16 %v768, %v767
      %v772 = vpack.c.b16 %v770, %v769
      %v776 = vsel %vm314, %v762, 0
      %778 = vmatprep.subr.bf16.mxu0 0
      %779 = vmatpush1.bf16.msra.mxu0 0
      %780 = vmatprep.subr.bf16.mxu0 0
      %781 = vmatpush1.bf16.msra.mxu0 0
      %782 = vmatprep.subr.bf16.mxu0 0
      %783 = vmatpush1.bf16.msra.mxu0 0
      %784 = vmatprep.subr.bf16.mxu0 0
      %785 = vmatpush1.bf16.msra.mxu0 0
      %786 = vmatprep.subr.bf16.mxu0 0
      %787 = vmatpush1.bf16.msra.mxu0 0
      %788 = vmatprep.subr.bf16.mxu0 0
      %789 = vmatpush1.bf16.msra.mxu0 0
      %790 = vmatprep.subr.bf16.mxu0 0
      %791 = vmatpush1.bf16.msra.mxu0 %v772
      %792 = vmatprep.subr.bf16.mxu0 0
      %793 = vmatpush1.bf16.msra.mxu0 %v771
      %794 = vmatprep.subr.bf16.mxu0 0
      %795 = vmatpush2.bf16.msra.mxu0 0
      %796 = vmatprep.subr.bf16.mxu0 0
      %797 = vmatpush2.bf16.msra.mxu0 0
      %798 = vmatprep.subr.bf16.mxu0 0
      %799 = vmatpush2.bf16.msra.mxu0 0
      %800 = vmatprep.subr.bf16.mxu0 0
      %801 = vmatpush2.bf16.msra.mxu0 0
      %802 = vmatprep.subr.bf16.mxu0 0
      %803 = vmatpush2.bf16.msra.mxu0 0
      %804 = vmatprep.subr.bf16.mxu0 0
      %805 = vmatpush2.bf16.msra.mxu0 0
      %806 = vmatprep.subr.bf16.mxu0 0
      %807 = vmatpush2.bf16.msra.mxu0 0
      %808 = vmatprep.subr.bf16.mxu0 0
      %809 = vmatpush2.bf16.msra.mxu0 0
      %810 = vmatprep.mubr.bf16.mxu0 0
      %811 = vmatmul.mubr.bf16.gmra.mxu0 %v776
      %v812 = vpop.f32.mrf.mxu0
      %v813 = vadd.f32 0.0, %v812
      %v814 = vpop.f32.mrf.mxu0
      %v815 = vpop.f32.mrf.mxu0
      %v816 = vpop.f32.mrf.mxu0
      %817 = vdwg.mxu0
      %v818 = vadd.f32 %v722, %v813
      %s819 = sadd.s32 %s220, 2
      %s820 = smul.addr %s819, 2
      %s821 = scalar_lea.vmem %s209, %s820
      %v822 = vld [vmem:[%s821] sm:$0x1]
      %v823 = vld [vmem:[%s821 + $0x2] sm:$0x1]
      %s824 = scalar_lea.vmem %s1, 96
      %v825 = vld [vmem:[%s824] sm:$0xf]
      %v826 = vld [vmem:[%s824 + $0x4] sm:$0xf]
      %v827 = vld [vmem:[%s824 + $0x8] sm:$0xf]
      %v828 = vld [vmem:[%s824 + $0xc] sm:$0xf]
      %v831 = vcombine.low %v822, %v823
      %v833 = vunpack.c.l.s4 1966171168
      %v834 = vunpack.c.0.s8 %v833
      %v835 = vlaneseq
      %v836 = vshrl.u32 %v835, 7
      %v837 = vsub.s32 %v834, %v836
      %v838 = vrot.slane %v831, %v837
      %v840 = vunpack.c.l.s4 1966171168
      %v841 = vunpack.c.0.s8 %v840
      %v842 = vlaneseq
      %v843 = vshrl.u32 %v842, 7
      %v844 = vsub.s32 %v841, %v843
      %v845 = vrot.slane %v838, %v844
      %v850 = vunpack.c.l.b16 %v825
      %v851 = vunpack.c.l.b16 %v826
      %v852 = vunpack.c.l.b16 %v827
      %v853 = vunpack.c.l.b16 %v828
      %v854 = vpack.c.b16 %v851, %v850
      %v855 = vpack.c.b16 %v853, %v852
      %v859 = vsel %vm314, %v845, 0
      %861 = vmatprep.subr.bf16.mxu0 0
      %862 = vmatpush1.bf16.msra.mxu0 0
      %863 = vmatprep.subr.bf16.mxu0 0
      %864 = vmatpush1.bf16.msra.mxu0 0
      %865 = vmatprep.subr.bf16.mxu0 0
      %866 = vmatpush1.bf16.msra.mxu0 0
      %867 = vmatprep.subr.bf16.mxu0 0
      %868 = vmatpush1.bf16.msra.mxu0 0
      %869 = vmatprep.subr.bf16.mxu0 0
      %870 = vmatpush1.bf16.msra.mxu0 0
      %871 = vmatprep.subr.bf16.mxu0 0
      %872 = vmatpush1.bf16.msra.mxu0 0
      %873 = vmatprep.subr.bf16.mxu0 0
      %874 = vmatpush1.bf16.msra.mxu0 %v855
      %875 = vmatprep.subr.bf16.mxu0 0
      %876 = vmatpush1.bf16.msra.mxu0 %v854
      %877 = vmatprep.subr.bf16.mxu0 0
      %878 = vmatpush2.bf16.msra.mxu0 0
      %879 = vmatprep.subr.bf16.mxu0 0
      %880 = vmatpush2.bf16.msra.mxu0 0
      %881 = vmatprep.subr.bf16.mxu0 0
      %882 = vmatpush2.bf16.msra.mxu0 0
      %883 = vmatprep.subr.bf16.mxu0 0
      %884 = vmatpush2.bf16.msra.mxu0 0
      %885 = vmatprep.subr.bf16.mxu0 0
      %886 = vmatpush2.bf16.msra.mxu0 0
      %887 = vmatprep.subr.bf16.mxu0 0
      %888 = vmatpush2.bf16.msra.mxu0 0
      %889 = vmatprep.subr.bf16.mxu0 0
      %890 = vmatpush2.bf16.msra.mxu0 0
      %891 = vmatprep.subr.bf16.mxu0 0
      %892 = vmatpush2.bf16.msra.mxu0 0
      %893 = vmatprep.mubr.bf16.mxu0 0
      %894 = vmatmul.mubr.bf16.gmra.mxu0 %v859
      %v895 = vpop.f32.mrf.mxu0
      %v896 = vadd.f32 0.0, %v895
      %v897 = vpop.f32.mrf.mxu0
      %v898 = vpop.f32.mrf.mxu0
      %v899 = vpop.f32.mrf.mxu0
      %900 = vdwg.mxu0
      %v901 = vadd.f32 %v818, %v896
      %v902 = vld [vmem:[%s821] sm:$0x3]
      %v903 = vld [vmem:[%s821 + $0x2] sm:$0x3]
      %v907 = vunpack.c.l.s4 1966171168
      %v908 = vunpack.c.0.s8 %v907
      %v909 = vlaneseq
      %v910 = vshrl.u32 %v909, 7
      %v911 = vsub.s32 %v908, %v910
      %v912 = vrot.slane %v902, %v911
      %v913 = vcombine.high %v912, %v912
      %v915 = vunpack.c.l.s4 1966171168
      %v916 = vunpack.c.0.s8 %v915
      %v917 = vlaneseq
      %v918 = vshrl.u32 %v917, 7
      %v919 = vsub.s32 %v916, %v918
      %v920 = vrot.slane %v903, %v919
      %v921 = vcombine.high %v920, %v920
      %v923 = vshrl.u32 %v912, 16
      %v925 = vrot.slane %v923, 7
      %v926 = vrot.slane %v925, 1
      %v928 = vshll.u32 %v913, 16
      %v930 = vsel %vm263, %v926, %v928
      %v932 = vshrl.u32 %v920, 16
      %v934 = vrot.slane %v932, 7
      %v935 = vrot.slane %v934, 1
      %v937 = vshll.u32 %v921, 16
      %v939 = vsel %vm263, %v935, %v937
      %s940 = scalar_lea.vmem %s1, 112
      %v941 = vld [vmem:[%s940] sm:$0xf]
      %v942 = vld [vmem:[%s940 + $0x4] sm:$0xf]
      %v943 = vld [vmem:[%s940 + $0x8] sm:$0xf]
      %v944 = vld [vmem:[%s940 + $0xc] sm:$0xf]
      %v945 = vcombine.low %v930, %v939
      %v947 = vunpack.c.l.s4 1966171168
      %v948 = vunpack.c.0.s8 %v947
      %v949 = vlaneseq
      %v950 = vshrl.u32 %v949, 7
      %v951 = vsub.s32 %v948, %v950
      %v952 = vrot.slane %v945, %v951
      %v954 = vunpack.c.l.s4 1966171168
      %v955 = vunpack.c.0.s8 %v954
      %v956 = vlaneseq
      %v957 = vshrl.u32 %v956, 7
      %v958 = vsub.s32 %v955, %v957
      %v959 = vrot.slane %v952, %v958
      %v964 = vunpack.c.l.b16 %v941
      %v965 = vunpack.c.l.b16 %v942
      %v966 = vunpack.c.l.b16 %v943
      %v967 = vunpack.c.l.b16 %v944
      %v968 = vpack.c.b16 %v965, %v964
      %v969 = vpack.c.b16 %v967, %v966
      %v973 = vsel %vm314, %v959, 0
      %975 = vmatprep.subr.bf16.mxu0 0
      %976 = vmatpush1.bf16.msra.mxu0 0
      %977 = vmatprep.subr.bf16.mxu0 0
      %978 = vmatpush1.bf16.msra.mxu0 0
      %979 = vmatprep.subr.bf16.mxu0 0
      %980 = vmatpush1.bf16.msra.mxu0 0
      %981 = vmatprep.subr.bf16.mxu0 0
      %982 = vmatpush1.bf16.msra.mxu0 0
      %983 = vmatprep.subr.bf16.mxu0 0
      %984 = vmatpush1.bf16.msra.mxu0 0
      %985 = vmatprep.subr.bf16.mxu0 0
      %986 = vmatpush1.bf16.msra.mxu0 0
      %987 = vmatprep.subr.bf16.mxu0 0
      %988 = vmatpush1.bf16.msra.mxu0 %v969
      %989 = vmatprep.subr.bf16.mxu0 0
      %990 = vmatpush1.bf16.msra.mxu0 %v968
      %991 = vmatprep.subr.bf16.mxu0 0
      %992 = vmatpush2.bf16.msra.mxu0 0
      %993 = vmatprep.subr.bf16.mxu0 0
      %994 = vmatpush2.bf16.msra.mxu0 0
      %995 = vmatprep.subr.bf16.mxu0 0
      %996 = vmatpush2.bf16.msra.mxu0 0
      %997 = vmatprep.subr.bf16.mxu0 0
      %998 = vmatpush2.bf16.msra.mxu0 0
      %999 = vmatprep.subr.bf16.mxu0 0
      %1000 = vmatpush2.bf16.msra.mxu0 0
      %1001 = vmatprep.subr.bf16.mxu0 0
      %1002 = vmatpush2.bf16.msra.mxu0 0
      %1003 = vmatprep.subr.bf16.mxu0 0
      %1004 = vmatpush2.bf16.msra.mxu0 0
      %1005 = vmatprep.subr.bf16.mxu0 0
      %1006 = vmatpush2.bf16.msra.mxu0 0
      %1007 = vmatprep.mubr.bf16.mxu0 0
      %1008 = vmatmul.mubr.bf16.gmra.mxu0 %v973
      %v1009 = vpop.f32.mrf.mxu0
      %v1010 = vadd.f32 0.0, %v1009
      %v1011 = vpop.f32.mrf.mxu0
      %v1012 = vpop.f32.mrf.mxu0
      %v1013 = vpop.f32.mrf.mxu0
      %1014 = vdwg.mxu0
      %v1015 = vadd.f32 %v901, %v1010
      %v1016 = vld [vmem:[%s821] sm:$0x2]
      %v1017 = vld [vmem:[%s821 + $0x2] sm:$0x2]
      %v1021 = vunpack.c.l.s4 1966171168
      %v1022 = vunpack.c.0.s8 %v1021
      %v1023 = vlaneseq
      %v1024 = vshrl.u32 %v1023, 7
      %v1025 = vsub.s32 %v1022, %v1024
      %v1026 = vrot.slane %v1016, %v1025
      %v1027 = vcombine.high %v1026, %v1026
      %v1029 = vunpack.c.l.s4 1966171168
      %v1030 = vunpack.c.0.s8 %v1029
      %v1031 = vlaneseq
      %v1032 = vshrl.u32 %v1031, 7
      %v1033 = vsub.s32 %v1030, %v1032
      %v1034 = vrot.slane %v1017, %v1033
      %v1035 = vcombine.high %v1034, %v1034
      %s1036 = scalar_lea.vmem %s1, 128
      %v1037 = vld [vmem:[%s1036] sm:$0xf]
      %v1038 = vld [vmem:[%s1036 + $0x4] sm:$0xf]
      %v1039 = vld [vmem:[%s1036 + $0x8] sm:$0xf]
      %v1040 = vld [vmem:[%s1036 + $0xc] sm:$0xf]
      %v1041 = vcombine.low %v1027, %v1035
      %v1043 = vunpack.c.l.s4 1966171168
      %v1044 = vunpack.c.0.s8 %v1043
      %v1045 = vlaneseq
      %v1046 = vshrl.u32 %v1045, 7
      %v1047 = vsub.s32 %v1044, %v1046
      %v1048 = vrot.slane %v1041, %v1047
      %v1050 = vunpack.c.l.s4 1966171168
      %v1051 = vunpack.c.0.s8 %v1050
      %v1052 = vlaneseq
      %v1053 = vshrl.u32 %v1052, 7
      %v1054 = vsub.s32 %v1051, %v1053
      %v1055 = vrot.slane %v1048, %v1054
      %v1060 = vunpack.c.l.b16 %v1037
      %v1061 = vunpack.c.l.b16 %v1038
      %v1062 = vunpack.c.l.b16 %v1039
      %v1063 = vunpack.c.l.b16 %v1040
      %v1064 = vpack.c.b16 %v1061, %v1060
      %v1065 = vpack.c.b16 %v1063, %v1062
      %v1069 = vsel %vm314, %v1055, 0
      %1071 = vmatprep.subr.bf16.mxu0 0
      %1072 = vmatpush1.bf16.msra.mxu0 0
      %1073 = vmatprep.subr.bf16.mxu0 0
      %1074 = vmatpush1.bf16.msra.mxu0 0
      %1075 = vmatprep.subr.bf16.mxu0 0
      %1076 = vmatpush1.bf16.msra.mxu0 0
      %1077 = vmatprep.subr.bf16.mxu0 0
      %1078 = vmatpush1.bf16.msra.mxu0 0
      %1079 = vmatprep.subr.bf16.mxu0 0
      %1080 = vmatpush1.bf16.msra.mxu0 0
      %1081 = vmatprep.subr.bf16.mxu0 0
      %1082 = vmatpush1.bf16.msra.mxu0 0
      %1083 = vmatprep.subr.bf16.mxu0 0
      %1084 = vmatpush1.bf16.msra.mxu0 %v1065
      %1085 = vmatprep.subr.bf16.mxu0 0
      %1086 = vmatpush1.bf16.msra.mxu0 %v1064
      %1087 = vmatprep.subr.bf16.mxu0 0
      %1088 = vmatpush2.bf16.msra.mxu0 0
      %1089 = vmatprep.subr.bf16.mxu0 0
      %1090 = vmatpush2.bf16.msra.mxu0 0
      %1091 = vmatprep.subr.bf16.mxu0 0
      %1092 = vmatpush2.bf16.msra.mxu0 0
      %1093 = vmatprep.subr.bf16.mxu0 0
      %1094 = vmatpush2.bf16.msra.mxu0 0
      %1095 = vmatprep.subr.bf16.mxu0 0
      %1096 = vmatpush2.bf16.msra.mxu0 0
      %1097 = vmatprep.subr.bf16.mxu0 0
      %1098 = vmatpush2.bf16.msra.mxu0 0
      %1099 = vmatprep.subr.bf16.mxu0 0
      %1100 = vmatpush2.bf16.msra.mxu0 0
      %1101 = vmatprep.subr.bf16.mxu0 0
      %1102 = vmatpush2.bf16.msra.mxu0 0
      %1103 = vmatprep.mubr.bf16.mxu0 0
      %1104 = vmatmul.mubr.bf16.gmra.mxu0 %v1069
      %v1105 = vpop.f32.mrf.mxu0
      %v1106 = vadd.f32 0.0, %v1105
      %v1107 = vpop.f32.mrf.mxu0
      %v1108 = vpop.f32.mrf.mxu0
      %v1109 = vpop.f32.mrf.mxu0
      %1110 = vdwg.mxu0
      %v1111 = vadd.f32 %v1015, %v1106
      %v1112 = vld [vmem:[%s2] sm:$0x1]
      %v1114 = vlaneseq
      %v1115 = vshrl.u32 %v1114, 7
      %v1116 = vsub.s32 0, %v1115
      %v1117 = vrot.slane %v1112, %v1116
      %v1119 = vadd.f32 %v1111, %v1117
      %vm1120 = vcmp.ge.f32.partialorder %v1119, 0.0
      %v1121 = vld [vmem:[%s3] sm:$0x1]
      %v1123 = vlaneseq
      %v1124 = vshrl.u32 %v1123, 7
      %v1125 = vsub.s32 0, %v1124
      %v1126 = vrot.slane %v1121, %v1125
      %v1128 = vmul.f32 %v1126, %v1119
      %v1129 = vsel %vm1120, %v1119, %v1128
      %v1132 = vunpack.c.l.s4 1983009808
      %v1133 = vunpack.c.0.s8 %v1132
      %v1134 = vlaneseq
      %v1135 = vshrl.u32 %v1134, 7
      %v1136 = vsub.s32 %v1133, %v1135
      %v1137 = vrot.slane %v1129, %v1136
      %v1138 = vcombine.high %v1137, %v1137
      %v1141 = vpack.c.bf16 %v1137, %v1137
      %v1142 = vpack.c.bf16 %v1138, %v1138
      %vm1143 = vcmask 253952
      %1144 = vst.msk [vmem:[%s217] sm:$0x1] %vm1143, %v1141
      %1145 = vst.msk [vmem:[%s217 + $0x1] sm:$0x1] %vm1143, %v1142
      %s1146 = smul.u32 2, %s20
      %p1147 = scmp.lt.s32.totalorder %s19, 1
      %s1148 = scalar_select %p1147, %s19, 1
      %p1149 = scmp.lt.s32.totalorder %s1146, 1
      %s1150 = scalar_select %p1149, %s1146, 1
      %s1151 = smul.addr %s1148, 2
      %s1152 = sadd.s32 %s1150, %s1151
      %s1153 = scalar_lea.vmem %s4, %s1152
      // Predicated region
      $region37: #{_lambda_.14} parent=35 // pred_check
        %p1154 = pneg %p136
      $region38: #{_lambda_.14} parent=35 // pred_check_branch
        %1156 = sbr.rel (%p1154) target = $region40
      $region39: #{_lambda_.14} parent=35 // pred_region
        %s1157 = smul.u32 2, %s20
      $region40: #{_lambda_.14} parent=35 // pred_fallthru
        _
    $region36: #{_lambda_.14} parent=5 // pred_fallthru
      _
    %p1158 = scmp.le.s32.totalorder 2, %s10
    // Predicated region
    $region41: #{_lambda_.14} parent=5 // pred_check
      %p1159 = pneg %p1158
    $region42: #{_lambda_.14} parent=5 // pred_check_branch
      %1161 = sbr.rel (%p1159) target = $region44
    $region43: #{_lambda_.14} parent=5 // pred_region
      %s1162 = ssub.s32 %s10, 2
      // Predicated region
      $region45: #{_lambda_.14} parent=43 // pred_check
        %p1163 = pneg %p142
      $region46: #{_lambda_.14} parent=43 // pred_check_branch
        %1165 = sbr.rel (%p1163) target = $region48
      $region47: #{_lambda_.14} parent=43 // pred_region
        %s1166 = smul.u32 2, %s22
        %p1167 = scmp.lt.s32.totalorder %s21, 1
        %s1168 = scalar_select %p1167, %s21, 1
        %p1169 = scmp.lt.s32.totalorder %s1166, 1
        %s1170 = scalar_select %p1169, %s1166, 1
        %s1171 = smul.addr %s1168, 2
        %s1172 = sadd.s32 %s1170, %s1171
        %s1173 = scalar_lea.vmem %s4, %s1172
      $region48: #{_lambda_.14} parent=43 // pred_fallthru
        _
    $region44: #{_lambda_.14} parent=5 // pred_fallthru
      _
  $region6: #{_lambda_.14} parent=0 // loop_footer
    %s14 = sadd.s32 1, %s10
  $region7: #{_lambda_.14} parent=0 // loop_footer_branch
    %9 = sbr.rel target = $region3
  $region8: #{_lambda_.14} parent=0 // loop_exit
    _

// kernel: _lambda_.15
$region0: #{_lambda_.15}
  #allocation0 [shape = 'u32[]', space=smem, size = 0x4, offset = 0x4, fixed_abs, tag = 'smem constant byte address 0x4 - core index']
  #allocation1 [shape = 'u32[144,128]{1,0:T(1,128)}', space=vmem, size = 0x12000, scoped, tag = 'internal scratch']
  %s0 = inlined_call_operand.vmem [shape: bf16[2,4,4,32], index: 0, kind: input, shape index: {}]
  %s1 = inlined_call_operand.vmem [shape: bf16[9,32,32], index: 1, kind: input, shape index: {}]
  %s2 = inlined_call_operand.vmem [shape: f32[1,32], index: 2, kind: input, shape index: {}]
  %s3 = inlined_call_operand.vmem [shape: f32[1,32], index: 3, kind: input, shape index: {}]
  %s4 = inlined_call_operand.vmem [shape: bf16[2,2,2,32], index: 4, kind: input, shape index: {}]
  %s5 = inlined_call_operand.vmem [shape: bf16[2,2,2,32], index: 5, kind: output, shape index: {}]
  %s6 = sld [smem:[#allocation0]]
  $region53: #{_lambda_.15} parent=0
    _
  %s8 = ssub.s32 1, %s6
  %s9 = scalar_select 0, %s8, %s6
  loop: start=0, step=1, limit=4
  $region2: #{_lambda_.15} parent=0 // loop_pre_header
    _
  $region3: #{_lambda_.15} parent=0 // loop_header
    %s11 = sphi 0, %s15
    %p12 = scmp.ge.s32.totalorder %s11, 4
    %s18 = sphi 0, %s30
    %s19 = sphi 0, %s26
    %s20 = sphi 0, %s18
    %s21 = sphi 0, %s19
    %s22 = sphi 0, %s20
    %s23 = sphi 0, %s21
    %s33 = sphi 0, %s35
    %s36 = sphi 0, %s33
    %s37 = sphi 0, %s36
    %s53 = sphi 0, %s37
    %s57 = sphi 0, %s57
    %s59 = sphi 0, %s57
    %s60 = sphi 0, %s59
    %s74 = sphi 0, %s60
    %s78 = sphi 0, %s78
    %s80 = sphi 0, %s78
    %s81 = sphi 0, %s80
    %s95 = sphi 0, %s81
    %s99 = sphi 0, %s99
    %s101 = sphi 0, %s99
    %s102 = sphi 0, %s101
    %s116 = sphi 0, %s102
    %s124 = sphi 0, %s126
    %s127 = sphi 0, %s124
    %s128 = sphi 0, %s127
    %s144 = sphi 0, %s128
    %s152 = sphi 0, %s154
    %s155 = sphi 0, %s152
    %s156 = sphi 0, %s155
    %s172 = sphi 0, %s156
  $region4: #{_lambda_.15} parent=0 // loop_header_branch
    %14 = sbr.rel (%p12) target = $region8
  $region5: #{_lambda_.15} parent=0 // loop_body
    %s16 = ssub.s32 %s11, 1
    %s17 = ssub.s32 %s11, 2
    %s24 = sadd.s32 1, %s19
    %p25 = scmp.ge.s32.totalorder %s24, 1
    %s26 = scalar_select %p25, 0, %s24
    %s27 = sadd.s32 1, %s18
    %s28 = scalar_select %p25, %s27, %s18
    %p29 = scmp.ge.s32.totalorder %s28, 2
    %s30 = scalar_select %p29, 0, %s28
    %s31 = ssub.s32 %s18, %s30
    %p32 = scmp.eq.s32.totalorder %s31, 0
    %s34 = sadd.s32 %s33, 1
    %s35 = scalar_select %p32, %s33, %s34
    %p38 = pneg %p32
    %p39 = scmp.eq.s32.totalorder %s11, 1
    %p40 = por %p38, %p39
    %p41 = scmp.ne.s32.totalorder %s33, %s36
    %p42 = scmp.eq.s32.totalorder %s11, 0
    %p43 = por %p41, %p42
    %p44 = scmp.ne.s32.totalorder %s33, %s36
    %p45 = scmp.eq.s32.totalorder %s16, 1
    %p46 = por %p44, %p45
    %p47 = scmp.ne.s32.totalorder %s36, %s37
    %p48 = scmp.eq.s32.totalorder %s16, 0
    %p49 = por %p47, %p48
    %p50 = scmp.ne.s32.totalorder %s36, %s37
    %p51 = scmp.eq.s32.totalorder %s17, 1
    %p52 = por %p50, %p51
    %p54 = scmp.ne.s32.totalorder %s37, %s53
    %p55 = scmp.eq.s32.totalorder %s17, 0
    %p56 = por %p54, %p55
    %s58 = sadd.s32 %s57, 1
    %p61 = scmp.eq.s32.totalorder %s11, 1
    %p62 = scmp.ne.s32.totalorder %s57, %s59
    %p63 = scmp.eq.s32.totalorder %s11, 0
    %p64 = por %p62, %p63
    %p65 = scmp.ne.s32.totalorder %s57, %s59
    %p66 = scmp.eq.s32.totalorder %s16, 1
    %p67 = por %p65, %p66
    %p68 = scmp.ne.s32.totalorder %s59, %s60
    %p69 = scmp.eq.s32.totalorder %s16, 0
    %p70 = por %p68, %p69
    %p71 = scmp.ne.s32.totalorder %s59, %s60
    %p72 = scmp.eq.s32.totalorder %s17, 1
    %p73 = por %p71, %p72
    %p75 = scmp.ne.s32.totalorder %s60, %s74
    %p76 = scmp.eq.s32.totalorder %s17, 0
    %p77 = por %p75, %p76
    %s79 = sadd.s32 %s78, 1
    %p82 = scmp.eq.s32.totalorder %s11, 1
    %p83 = scmp.ne.s32.totalorder %s78, %s80
    %p84 = scmp.eq.s32.totalorder %s11, 0
    %p85 = por %p83, %p84
    %p86 = scmp.ne.s32.totalorder %s78, %s80
    %p87 = scmp.eq.s32.totalorder %s16, 1
    %p88 = por %p86, %p87
    %p89 = scmp.ne.s32.totalorder %s80, %s81
    %p90 = scmp.eq.s32.totalorder %s16, 0
    %p91 = por %p89, %p90
    %p92 = scmp.ne.s32.totalorder %s80, %s81
    %p93 = scmp.eq.s32.totalorder %s17, 1
    %p94 = por %p92, %p93
    %p96 = scmp.ne.s32.totalorder %s81, %s95
    %p97 = scmp.eq.s32.totalorder %s17, 0
    %p98 = por %p96, %p97
    %s100 = sadd.s32 %s99, 1
    %p103 = scmp.eq.s32.totalorder %s11, 1
    %p104 = scmp.ne.s32.totalorder %s99, %s101
    %p105 = scmp.eq.s32.totalorder %s11, 0
    %p106 = por %p104, %p105
    %p107 = scmp.ne.s32.totalorder %s99, %s101
    %p108 = scmp.eq.s32.totalorder %s16, 1
    %p109 = por %p107, %p108
    %p110 = scmp.ne.s32.totalorder %s101, %s102
    %p111 = scmp.eq.s32.totalorder %s16, 0
    %p112 = por %p110, %p111
    %p113 = scmp.ne.s32.totalorder %s101, %s102
    %p114 = scmp.eq.s32.totalorder %s17, 1
    %p115 = por %p113, %p114
    %p117 = scmp.ne.s32.totalorder %s102, %s116
    %p118 = scmp.eq.s32.totalorder %s17, 0
    %p119 = por %p117, %p118
    %s120 = ssub.s32 %s18, %s30
    %s121 = ssub.s32 %s19, %s26
    %s122 = sor.u32 %s120, %s121
    %p123 = scmp.eq.s32.totalorder %s122, 0
    %s125 = sadd.s32 %s124, 1
    %s126 = scalar_select %p123, %s124, %s125
    %p129 = pneg %p123
    %p130 = scmp.eq.s32.totalorder %s11, 1
    %p131 = por %p129, %p130
    %p132 = scmp.ne.s32.totalorder %s124, %s127
    %p133 = scmp.eq.s32.totalorder %s11, 0
    %p134 = por %p132, %p133
    %p135 = scmp.ne.s32.totalorder %s124, %s127
    %p136 = scmp.eq.s32.totalorder %s16, 1
    %p137 = por %p135, %p136
    %p138 = scmp.ne.s32.totalorder %s127, %s128
    %p139 = scmp.eq.s32.totalorder %s16, 0
    %p140 = por %p138, %p139
    %p141 = scmp.ne.s32.totalorder %s127, %s128
    %p142 = scmp.eq.s32.totalorder %s17, 1
    %p143 = por %p141, %p142
    %p145 = scmp.ne.s32.totalorder %s128, %s144
    %p146 = scmp.eq.s32.totalorder %s17, 0
    %p147 = por %p145, %p146
    %s148 = ssub.s32 %s18, %s30
    %s149 = ssub.s32 %s19, %s26
    %s150 = sor.u32 %s148, %s149
    %p151 = scmp.eq.s32.totalorder %s150, 0
    %s153 = sadd.s32 %s152, 1
    %s154 = scalar_select %p151, %s152, %s153
    %p157 = pneg %p151
    %p158 = scmp.eq.s32.totalorder %s11, 1
    %p159 = por %p157, %p158
    %p160 = scmp.ne.s32.totalorder %s152, %s155
    %p161 = scmp.eq.s32.totalorder %s11, 0
    %p162 = por %p160, %p161
    %p163 = scmp.ne.s32.totalorder %s152, %s155
    %p164 = scmp.eq.s32.totalorder %s16, 1
    %p165 = por %p163, %p164
    %p166 = scmp.ne.s32.totalorder %s155, %s156
    %p167 = scmp.eq.s32.totalorder %s16, 0
    %p168 = por %p166, %p167
    %p169 = scmp.ne.s32.totalorder %s155, %s156
    %p170 = scmp.eq.s32.totalorder %s17, 1
    %p171 = por %p169, %p170
    %p173 = scmp.ne.s32.totalorder %s156, %s172
    %p174 = scmp.eq.s32.totalorder %s17, 0
    %p175 = por %p173, %p174
    %p176 = scmp.le.s32.totalorder 1, %s11
    %p177 = scmp.lt.s32.totalorder %s11, 3
    %p178 = pnand %p176, %p177
    %p179 = pneg %p178
    // Predicated region
    $region9: #{_lambda_.15} parent=5 // pred_check
      _
    $region10: #{_lambda_.15} parent=5 // pred_check_branch
      %181 = sbr.rel (%p178) target = $region12
    $region11: #{_lambda_.15} parent=5 // pred_region
      %s182 = ssub.s32 %s11, 1
      // Predicated region
      $region13: #{_lambda_.15} parent=11 // pred_check
        %p183 = pneg %p70
      $region14: #{_lambda_.15} parent=11 // pred_check_branch
        %185 = sbr.rel (%p183) target = $region16
      $region15: #{_lambda_.15} parent=11 // pred_region
        _
      $region16: #{_lambda_.15} parent=11 // pred_fallthru
        _
      // Predicated region
      $region17: #{_lambda_.15} parent=11 // pred_check
        %p186 = pneg %p91
      $region18: #{_lambda_.15} parent=11 // pred_check_branch
        %188 = sbr.rel (%p186) target = $region20
      $region19: #{_lambda_.15} parent=11 // pred_region
        _
      $region20: #{_lambda_.15} parent=11 // pred_fallthru
        _
      // Predicated region
      $region21: #{_lambda_.15} parent=11 // pred_check
        %p189 = pneg %p112
      $region22: #{_lambda_.15} parent=11 // pred_check_branch
        %191 = sbr.rel (%p189) target = $region24
      $region23: #{_lambda_.15} parent=11 // pred_region
        _
      $region24: #{_lambda_.15} parent=11 // pred_fallthru
        _
    $region12: #{_lambda_.15} parent=5 // pred_fallthru
      _
    %p192 = scmp.lt.s32.totalorder %s11, 2
    // Predicated region
    $region25: #{_lambda_.15} parent=5 // pred_check
      %p193 = pneg %p192
    $region26: #{_lambda_.15} parent=5 // pred_check_branch
      %195 = sbr.rel (%p193) target = $region28
    $region27: #{_lambda_.15} parent=5 // pred_region
      // Predicated region
      $region29: #{_lambda_.15} parent=27 // pred_check
        %p196 = pneg %p43
      $region30: #{_lambda_.15} parent=27 // pred_check_branch
        %198 = sbr.rel (%p196) target = $region32
      $region31: #{_lambda_.15} parent=27 // pred_region
        %p199 = scmp.lt.s32.totalorder %s18, 1
        %s200 = scalar_select %p199, %s18, 1
        %s201 = smul.addr %s200, 4
        %s202 = smul.addr %s201, 2
        %s203 = scalar_lea.vmem %s0, %s202
      $region32: #{_lambda_.15} parent=27 // pred_fallthru
        _
      // Predicated region
      $region33: #{_lambda_.15} parent=27 // pred_check
        %p204 = pneg %p134
      $region34: #{_lambda_.15} parent=27 // pred_check_branch
        %206 = sbr.rel (%p204) target = $region36
      $region35: #{_lambda_.15} parent=27 // pred_region
        %s207 = smul.u32 2, %s19
        %p208 = scmp.lt.s32.totalorder %s18, 1
        %s209 = scalar_select %p208, %s18, 1
        %p210 = scmp.lt.s32.totalorder %s207, 1
        %s211 = scalar_select %p210, %s207, 1
        %s212 = smul.addr %s209, 2
        %s213 = sadd.s32 %s211, %s212
        %s214 = scalar_lea.vmem %s4, %s213
        %s215 = smul.u32 2, %s19
      $region36: #{_lambda_.15} parent=27 // pred_fallthru
        _
    $region28: #{_lambda_.15} parent=5 // pred_fallthru
      _
    %p216 = scmp.le.s32.totalorder 1, %s11
    %p217 = scmp.lt.s32.totalorder %s11, 3
    %p218 = pnand %p216, %p217
    %p219 = pneg %p218
    // Predicated region
    $region37: #{_lambda_.15} parent=5 // pred_check
      _
    $region38: #{_lambda_.15} parent=5 // pred_check_branch
      %221 = sbr.rel (%p218) target = $region40
    $region39: #{_lambda_.15} parent=5 // pred_region
      %s222 = ssub.s32 %s11, 1
      %p223 = scmp.lt.s32.totalorder %s20, 1
      %s224 = scalar_select %p223, %s20, 1
      %s225 = smul.addr %s224, 4
      %s226 = smul.addr %s225, 2
      %s227 = scalar_lea.vmem %s0, %s226
      %p228 = pneg %p49
      %p229 = pneg %p46
      %p230 = pneg %p70
      %p231 = pneg %p67
      %p232 = pneg %p91
      %p233 = pneg %p88
      %p234 = pneg %p112
      %p235 = pneg %p109
      %s236 = smul.u32 2, %s21
      %p237 = scmp.lt.s32.totalorder %s20, 1
      %s238 = scalar_select %p237, %s20, 1
      %p239 = scmp.lt.s32.totalorder %s236, 1
      %s240 = scalar_select %p239, %s236, 1
      %s241 = smul.addr %s238, 2
      %s242 = sadd.s32 %s240, %s241
      %s243 = scalar_lea.vmem %s4, %s242
      %p244 = pneg %p140
      %p245 = pneg %p137
      %p246 = pneg %p168
      %p247 = pneg %p165
      %s248 = smul.u32 2, %s21
      %p249 = scmp.lt.s32.totalorder %s20, 1
      %s250 = scalar_select %p249, %s20, 1
      %p251 = scmp.lt.s32.totalorder %s248, 1
      %s252 = scalar_select %p251, %s248, 1
      %s253 = smul.addr %s250, 2
      %s254 = sadd.s32 %s252, %s253
      %s255 = scalar_lea.vmem %s5, %s254
      %p256 = scmp.lt.s32.totalorder %s20, 1
      %s257 = scalar_select %p256, %s20, 1
      %s258 = smul.addr %s257, 4
      %s259 = smul.addr %s258, 2
      %s260 = scalar_lea.vmem %s0, %s259
      %s261 = smul.u32 2, %s21
      %p262 = scmp.lt.s32.totalorder %s20, 1
      %s263 = scalar_select %p262, %s20, 1
      %p264 = scmp.lt.s32.totalorder %s261, 1
      %s265 = scalar_select %p264, %s261, 1
      %s266 = smul.addr %s263, 2
      %s267 = sadd.s32 %s265, %s266
      %s268 = scalar_lea.vmem %s4, %s267
      %s269 = smul.u32 2, %s21
      %s270 = smul.u32 2, %s21
      %p271 = scmp.lt.s32.totalorder %s20, 1
      %s272 = scalar_select %p271, %s20, 1
      %p273 = scmp.lt.s32.totalorder %s270, 1
      %s274 = scalar_select %p273, %s270, 1
      %s275 = smul.addr %s272, 2
      %s276 = sadd.s32 %s274, %s275
      %s277 = scalar_lea.vmem %s5, %s276
      %s278 = smul.u32 2, %s21
      %s280 = smul.u32 %s21, 2
      %s281 = smul.addr %s280, 2
      %s282 = scalar_lea.vmem %s260, %s281
      %v283 = vld [vmem:[%s282] sm:$0x1]
      %v284 = vld [vmem:[%s282 + $0x2] sm:$0x1]
      %v285 = vld [vmem:[%s1] sm:$0xf]
      %v286 = vld [vmem:[%s1 + $0x4] sm:$0xf]
      %v287 = vld [vmem:[%s1 + $0x8] sm:$0xf]
      %v288 = vld [vmem:[%s1 + $0xc] sm:$0xf]
      %v289 = vld [vmem:[%s282] sm:$0x3]
      %v290 = vld [vmem:[%s282 + $0x2] sm:$0x3]
      %v294 = vunpack.c.l.s4 1966171168
      %v295 = vunpack.c.0.s8 %v294
      %v296 = vlaneseq
      %v297 = vshrl.u32 %v296, 7
      %v298 = vsub.s32 %v295, %v297
      %v299 = vrot.slane %v289, %v298
      %v300 = vcombine.high %v299, %v299
      %v302 = vunpack.c.l.s4 1966171168
      %v303 = vunpack.c.0.s8 %v302
      %v304 = vlaneseq
      %v305 = vshrl.u32 %v304, 7
      %v306 = vsub.s32 %v303, %v305
      %v307 = vrot.slane %v290, %v306
      %v308 = vcombine.high %v307, %v307
      %vm309 = vsmask.f32 256
      %vm310 = vsmask.f32 1284
      %vm311 = vmor %vm309, %vm310
      %vm312 = vsmask.f32 2312
      %vm313 = vmor %vm311, %vm312
      %vm314 = vsmask.f32 3340
      %vm315 = vmor %vm313, %vm314
      %vm316 = vsmask.f32 4368
      %vm317 = vmor %vm315, %vm316
      %vm318 = vsmask.f32 5396
      %vm319 = vmor %vm317, %vm318
      %vm320 = vsmask.f32 6424
      %vm321 = vmor %vm319, %vm320
      %vm322 = vsmask.f32 7452
      %vm323 = vmor %vm321, %vm322
      %v325 = vshrl.u32 %v299, 16
      %v327 = vrot.slane %v325, 7
      %v328 = vrot.slane %v327, 1
      %v330 = vshll.u32 %v300, 16
      %v332 = vsel %vm323, %v328, %v330
      %v334 = vshrl.u32 %v307, 16
      %v336 = vrot.slane %v334, 7
      %v337 = vrot.slane %v336, 1
      %v339 = vshll.u32 %v308, 16
      %v341 = vsel %vm323, %v337, %v339
      %s342 = scalar_lea.vmem %s1, 16
      %v343 = vld [vmem:[%s342] sm:$0xf]
      %v344 = vld [vmem:[%s342 + $0x4] sm:$0xf]
      %v345 = vld [vmem:[%s342 + $0x8] sm:$0xf]
      %v346 = vld [vmem:[%s342 + $0xc] sm:$0xf]
      %v347 = vcombine.low %v332, %v341
      %v349 = vunpack.c.l.s4 1966171168
      %v350 = vunpack.c.0.s8 %v349
      %v351 = vlaneseq
      %v352 = vshrl.u32 %v351, 7
      %v353 = vsub.s32 %v350, %v352
      %v354 = vrot.slane %v347, %v353
      %v356 = vunpack.c.l.s4 1966171168
      %v357 = vunpack.c.0.s8 %v356
      %v358 = vlaneseq
      %v359 = vshrl.u32 %v358, 7
      %v360 = vsub.s32 %v357, %v359
      %v361 = vrot.slane %v354, %v360
      %v366 = vunpack.c.l.b16 %v343
      %v367 = vunpack.c.l.b16 %v344
      %v368 = vunpack.c.l.b16 %v345
      %v369 = vunpack.c.l.b16 %v346
      %v370 = vpack.c.b16 %v367, %v366
      %v371 = vpack.c.b16 %v369, %v368
      %vm374 = vcmask 261120
      %v376 = vsel %vm374, %v361, 0
      %378 = vmatprep.subr.bf16.mxu0 0
      %379 = vmatpush1.bf16.msra.mxu0 0
      %380 = vmatprep.subr.bf16.mxu0 0
      %381 = vmatpush1.bf16.msra.mxu0 0
      %382 = vmatprep.subr.bf16.mxu0 0
      %383 = vmatpush1.bf16.msra.mxu0 0
      %384 = vmatprep.subr.bf16.mxu0 0
      %385 = vmatpush1.bf16.msra.mxu0 0
      %386 = vmatprep.subr.bf16.mxu0 0
      %387 = vmatpush1.bf16.msra.mxu0 0
      %388 = vmatprep.subr.bf16.mxu0 0
      %389 = vmatpush1.bf16.msra.mxu0 0
      %390 = vmatprep.subr.bf16.mxu0 0
      %391 = vmatpush1.bf16.msra.mxu0 %v371
      %392 = vmatprep.subr.bf16.mxu0 0
      %393 = vmatpush1.bf16.msra.mxu0 %v370
      %394 = vmatprep.subr.bf16.mxu0 0
      %395 = vmatpush2.bf16.msra.mxu0 0
      %396 = vmatprep.subr.bf16.mxu0 0
      %397 = vmatpush2.bf16.msra.mxu0 0
      %398 = vmatprep.subr.bf16.mxu0 0
      %399 = vmatpush2.bf16.msra.mxu0 0
      %400 = vmatprep.subr.bf16.mxu0 0
      %401 = vmatpush2.bf16.msra.mxu0 0
      %402 = vmatprep.subr.bf16.mxu0 0
      %403 = vmatpush2.bf16.msra.mxu0 0
      %404 = vmatprep.subr.bf16.mxu0 0
      %405 = vmatpush2.bf16.msra.mxu0 0
      %406 = vmatprep.subr.bf16.mxu0 0
      %407 = vmatpush2.bf16.msra.mxu0 0
      %408 = vmatprep.subr.bf16.mxu0 0
      %409 = vmatpush2.bf16.msra.mxu0 0
      %410 = vmatprep.mubr.bf16.mxu0 0
      %411 = vmatmul.mubr.bf16.gmra.mxu0 %v376
      %v412 = vpop.f32.mrf.mxu0
      %v413 = vadd.f32 0.0, %v412
      %v414 = vpop.f32.mrf.mxu0
      %v415 = vpop.f32.mrf.mxu0
      %v416 = vpop.f32.mrf.mxu0
      %417 = vdwg.mxu0
      %v420 = vcombine.low %v283, %v284
      %v422 = vunpack.c.l.s4 1966171168
      %v423 = vunpack.c.0.s8 %v422
      %v424 = vlaneseq
      %v425 = vshrl.u32 %v424, 7
      %v426 = vsub.s32 %v423, %v425
      %v427 = vrot.slane %v420, %v426
      %v429 = vunpack.c.l.s4 1966171168
      %v430 = vunpack.c.0.s8 %v429
      %v431 = vlaneseq
      %v432 = vshrl.u32 %v431, 7
      %v433 = vsub.s32 %v430, %v432
      %v434 = vrot.slane %v427, %v433
      %v439 = vunpack.c.l.b16 %v285
      %v440 = vunpack.c.l.b16 %v286
      %v441 = vunpack.c.l.b16 %v287
      %v442 = vunpack.c.l.b16 %v288
      %v443 = vpack.c.b16 %v440, %v439
      %v444 = vpack.c.b16 %v442, %v441
      %v448 = vsel %vm374, %v434, 0
      %450 = vmatprep.subr.bf16.mxu0 0
      %451 = vmatpush1.bf16.msra.mxu0 0
      %452 = vmatprep.subr.bf16.mxu0 0
      %453 = vmatpush1.bf16.msra.mxu0 0
      %454 = vmatprep.subr.bf16.mxu0 0
      %455 = vmatpush1.bf16.msra.mxu0 0
      %456 = vmatprep.subr.bf16.mxu0 0
      %457 = vmatpush1.bf16.msra.mxu0 0
      %458 = vmatprep.subr.bf16.mxu0 0
      %459 = vmatpush1.bf16.msra.mxu0 0
      %460 = vmatprep.subr.bf16.mxu0 0
      %461 = vmatpush1.bf16.msra.mxu0 0
      %462 = vmatprep.subr.bf16.mxu0 0
      %463 = vmatpush1.bf16.msra.mxu0 %v444
      %464 = vmatprep.subr.bf16.mxu0 0
      %465 = vmatpush1.bf16.msra.mxu0 %v443
      %466 = vmatprep.subr.bf16.mxu0 0
      %467 = vmatpush2.bf16.msra.mxu0 0
      %468 = vmatprep.subr.bf16.mxu0 0
      %469 = vmatpush2.bf16.msra.mxu0 0
      %470 = vmatprep.subr.bf16.mxu0 0
      %471 = vmatpush2.bf16.msra.mxu0 0
      %472 = vmatprep.subr.bf16.mxu0 0
      %473 = vmatpush2.bf16.msra.mxu0 0
      %474 = vmatprep.subr.bf16.mxu0 0
      %475 = vmatpush2.bf16.msra.mxu0 0
      %476 = vmatprep.subr.bf16.mxu0 0
      %477 = vmatpush2.bf16.msra.mxu0 0
      %478 = vmatprep.subr.bf16.mxu0 0
      %479 = vmatpush2.bf16.msra.mxu0 0
      %480 = vmatprep.subr.bf16.mxu0 0
      %481 = vmatpush2.bf16.msra.mxu0 0
      %482 = vmatprep.mubr.bf16.mxu0 0
      %483 = vmatmul.mubr.bf16.gmra.mxu0 %v448
      %v484 = vpop.f32.mrf.mxu0
      %v485 = vadd.f32 %v413, %v484
      %v486 = vpop.f32.mrf.mxu0
      %v487 = vpop.f32.mrf.mxu0
      %v488 = vpop.f32.mrf.mxu0
      %489 = vdwg.mxu0
      %v490 = vld [vmem:[%s282] sm:$0x2]
      %v491 = vld [vmem:[%s282 + $0x2] sm:$0x2]
      %v495 = vunpack.c.l.s4 1966171168
      %v496 = vunpack.c.0.s8 %v495
      %v497 = vlaneseq
      %v498 = vshrl.u32 %v497, 7
      %v499 = vsub.s32 %v496, %v498
      %v500 = vrot.slane %v490, %v499
      %v501 = vcombine.high %v500, %v500
      %v503 = vunpack.c.l.s4 1966171168
      %v504 = vunpack.c.0.s8 %v503
      %v505 = vlaneseq
      %v506 = vshrl.u32 %v505, 7
      %v507 = vsub.s32 %v504, %v506
      %v508 = vrot.slane %v491, %v507
      %v509 = vcombine.high %v508, %v508
      %s510 = scalar_lea.vmem %s1, 32
      %v511 = vld [vmem:[%s510] sm:$0xf]
      %v512 = vld [vmem:[%s510 + $0x4] sm:$0xf]
      %v513 = vld [vmem:[%s510 + $0x8] sm:$0xf]
      %v514 = vld [vmem:[%s510 + $0xc] sm:$0xf]
      %v515 = vcombine.low %v501, %v509
      %v517 = vunpack.c.l.s4 1966171168
      %v518 = vunpack.c.0.s8 %v517
      %v519 = vlaneseq
      %v520 = vshrl.u32 %v519, 7
      %v521 = vsub.s32 %v518, %v520
      %v522 = vrot.slane %v515, %v521
      %v524 = vunpack.c.l.s4 1966171168
      %v525 = vunpack.c.0.s8 %v524
      %v526 = vlaneseq
      %v527 = vshrl.u32 %v526, 7
      %v528 = vsub.s32 %v525, %v527
      %v529 = vrot.slane %v522, %v528
      %v534 = vunpack.c.l.b16 %v511
      %v535 = vunpack.c.l.b16 %v512
      %v536 = vunpack.c.l.b16 %v513
      %v537 = vunpack.c.l.b16 %v514
      %v538 = vpack.c.b16 %v535, %v534
      %v539 = vpack.c.b16 %v537, %v536
      %v543 = vsel %vm374, %v529, 0
      %545 = vmatprep.subr.bf16.mxu0 0
      %546 = vmatpush1.bf16.msra.mxu0 0
      %547 = vmatprep.subr.bf16.mxu0 0
      %548 = vmatpush1.bf16.msra.mxu0 0
      %549 = vmatprep.subr.bf16.mxu0 0
      %550 = vmatpush1.bf16.msra.mxu0 0
      %551 = vmatprep.subr.bf16.mxu0 0
      %552 = vmatpush1.bf16.msra.mxu0 0
      %553 = vmatprep.subr.bf16.mxu0 0
      %554 = vmatpush1.bf16.msra.mxu0 0
      %555 = vmatprep.subr.bf16.mxu0 0
      %556 = vmatpush1.bf16.msra.mxu0 0
      %557 = vmatprep.subr.bf16.mxu0 0
      %558 = vmatpush1.bf16.msra.mxu0 %v539
      %559 = vmatprep.subr.bf16.mxu0 0
      %560 = vmatpush1.bf16.msra.mxu0 %v538
      %561 = vmatprep.subr.bf16.mxu0 0
      %562 = vmatpush2.bf16.msra.mxu0 0
      %563 = vmatprep.subr.bf16.mxu0 0
      %564 = vmatpush2.bf16.msra.mxu0 0
      %565 = vmatprep.subr.bf16.mxu0 0
      %566 = vmatpush2.bf16.msra.mxu0 0
      %567 = vmatprep.subr.bf16.mxu0 0
      %568 = vmatpush2.bf16.msra.mxu0 0
      %569 = vmatprep.subr.bf16.mxu0 0
      %570 = vmatpush2.bf16.msra.mxu0 0
      %571 = vmatprep.subr.bf16.mxu0 0
      %572 = vmatpush2.bf16.msra.mxu0 0
      %573 = vmatprep.subr.bf16.mxu0 0
      %574 = vmatpush2.bf16.msra.mxu0 0
      %575 = vmatprep.subr.bf16.mxu0 0
      %576 = vmatpush2.bf16.msra.mxu0 0
      %577 = vmatprep.mubr.bf16.mxu0 0
      %578 = vmatmul.mubr.bf16.gmra.mxu0 %v543
      %v579 = vpop.f32.mrf.mxu0
      %v580 = vadd.f32 0.0, %v579
      %v581 = vpop.f32.mrf.mxu0
      %v582 = vpop.f32.mrf.mxu0
      %v583 = vpop.f32.mrf.mxu0
      %584 = vdwg.mxu0
      %v585 = vadd.f32 %v485, %v580
      %s586 = sadd.s32 %s280, 1
      %s587 = smul.addr %s586, 2
      %s588 = scalar_lea.vmem %s260, %s587
      %v589 = vld [vmem:[%s588] sm:$0x1]
      %v590 = vld [vmem:[%s588 + $0x2] sm:$0x1]
      %s591 = scalar_lea.vmem %s1, 48
      %v592 = vld [vmem:[%s591] sm:$0xf]
      %v593 = vld [vmem:[%s591 + $0x4] sm:$0xf]
      %v594 = vld [vmem:[%s591 + $0x8] sm:$0xf]
      %v595 = vld [vmem:[%s591 + $0xc] sm:$0xf]
      %v598 = vcombine.low %v589, %v590
      %v600 = vunpack.c.l.s4 1966171168
      %v601 = vunpack.c.0.s8 %v600
      %v602 = vlaneseq
      %v603 = vshrl.u32 %v602, 7
      %v604 = vsub.s32 %v601, %v603
      %v605 = vrot.slane %v598, %v604
      %v607 = vunpack.c.l.s4 1966171168
      %v608 = vunpack.c.0.s8 %v607
      %v609 = vlaneseq
      %v610 = vshrl.u32 %v609, 7
      %v611 = vsub.s32 %v608, %v610
      %v612 = vrot.slane %v605, %v611
      %v617 = vunpack.c.l.b16 %v592
      %v618 = vunpack.c.l.b16 %v593
      %v619 = vunpack.c.l.b16 %v594
      %v620 = vunpack.c.l.b16 %v595
      %v621 = vpack.c.b16 %v618, %v617
      %v622 = vpack.c.b16 %v620, %v619
      %v626 = vsel %vm374, %v612, 0
      %628 = vmatprep.subr.bf16.mxu0 0
      %629 = vmatpush1.bf16.msra.mxu0 0
      %630 = vmatprep.subr.bf16.mxu0 0
      %631 = vmatpush1.bf16.msra.mxu0 0
      %632 = vmatprep.subr.bf16.mxu0 0
      %633 = vmatpush1.bf16.msra.mxu0 0
      %634 = vmatprep.subr.bf16.mxu0 0
      %635 = vmatpush1.bf16.msra.mxu0 0
      %636 = vmatprep.subr.bf16.mxu0 0
      %637 = vmatpush1.bf16.msra.mxu0 0
      %638 = vmatprep.subr.bf16.mxu0 0
      %639 = vmatpush1.bf16.msra.mxu0 0
      %640 = vmatprep.subr.bf16.mxu0 0
      %641 = vmatpush1.bf16.msra.mxu0 %v622
      %642 = vmatprep.subr.bf16.mxu0 0
      %643 = vmatpush1.bf16.msra.mxu0 %v621
      %644 = vmatprep.subr.bf16.mxu0 0
      %645 = vmatpush2.bf16.msra.mxu0 0
      %646 = vmatprep.subr.bf16.mxu0 0
      %647 = vmatpush2.bf16.msra.mxu0 0
      %648 = vmatprep.subr.bf16.mxu0 0
      %649 = vmatpush2.bf16.msra.mxu0 0
      %650 = vmatprep.subr.bf16.mxu0 0
      %651 = vmatpush2.bf16.msra.mxu0 0
      %652 = vmatprep.subr.bf16.mxu0 0
      %653 = vmatpush2.bf16.msra.mxu0 0
      %654 = vmatprep.subr.bf16.mxu0 0
      %655 = vmatpush2.bf16.msra.mxu0 0
      %656 = vmatprep.subr.bf16.mxu0 0
      %657 = vmatpush2.bf16.msra.mxu0 0
      %658 = vmatprep.subr.bf16.mxu0 0
      %659 = vmatpush2.bf16.msra.mxu0 0
      %660 = vmatprep.mubr.bf16.mxu0 0
      %661 = vmatmul.mubr.bf16.gmra.mxu0 %v626
      %v662 = vpop.f32.mrf.mxu0
      %v663 = vadd.f32 0.0, %v662
      %v664 = vpop.f32.mrf.mxu0
      %v665 = vpop.f32.mrf.mxu0
      %v666 = vpop.f32.mrf.mxu0
      %667 = vdwg.mxu0
      %v668 = vadd.f32 %v585, %v663
      %v669 = vld [vmem:[%s588] sm:$0x3]
      %v670 = vld [vmem:[%s588 + $0x2] sm:$0x3]
      %v674 = vunpack.c.l.s4 1966171168
      %v675 = vunpack.c.0.s8 %v674
      %v676 = vlaneseq
      %v677 = vshrl.u32 %v676, 7
      %v678 = vsub.s32 %v675, %v677
      %v679 = vrot.slane %v669, %v678
      %v680 = vcombine.high %v679, %v679
      %v682 = vunpack.c.l.s4 1966171168
      %v683 = vunpack.c.0.s8 %v682
      %v684 = vlaneseq
      %v685 = vshrl.u32 %v684, 7
      %v686 = vsub.s32 %v683, %v685
      %v687 = vrot.slane %v670, %v686
      %v688 = vcombine.high %v687, %v687
      %v690 = vshrl.u32 %v679, 16
      %v692 = vrot.slane %v690, 7
      %v693 = vrot.slane %v692, 1
      %v695 = vshll.u32 %v680, 16
      %v697 = vsel %vm323, %v693, %v695
      %v699 = vshrl.u32 %v687, 16
      %v701 = vrot.slane %v699, 7
      %v702 = vrot.slane %v701, 1
      %v704 = vshll.u32 %v688, 16
      %v706 = vsel %vm323, %v702, %v704
      %s707 = scalar_lea.vmem %s1, 64
      %v708 = vld [vmem:[%s707] sm:$0xf]
      %v709 = vld [vmem:[%s707 + $0x4] sm:$0xf]
      %v710 = vld [vmem:[%s707 + $0x8] sm:$0xf]
      %v711 = vld [vmem:[%s707 + $0xc] sm:$0xf]
      %v712 = vcombine.low %v697, %v706
      %v714 = vunpack.c.l.s4 1966171168
      %v715 = vunpack.c.0.s8 %v714
      %v716 = vlaneseq
      %v717 = vshrl.u32 %v716, 7
      %v718 = vsub.s32 %v715, %v717
      %v719 = vrot.slane %v712, %v718
      %v721 = vunpack.c.l.s4 1966171168
      %v722 = vunpack.c.0.s8 %v721
      %v723 = vlaneseq
      %v724 = vshrl.u32 %v723, 7
      %v725 = vsub.s32 %v722, %v724
      %v726 = vrot.slane %v719, %v725
      %v731 = vunpack.c.l.b16 %v708
      %v732 = vunpack.c.l.b16 %v709
      %v733 = vunpack.c.l.b16 %v710
      %v734 = vunpack.c.l.b16 %v711
      %v735 = vpack.c.b16 %v732, %v731
      %v736 = vpack.c.b16 %v734, %v733
      %v740 = vsel %vm374, %v726, 0
      %742 = vmatprep.subr.bf16.mxu0 0
      %743 = vmatpush1.bf16.msra.mxu0 0
      %744 = vmatprep.subr.bf16.mxu0 0
      %745 = vmatpush1.bf16.msra.mxu0 0
      %746 = vmatprep.subr.bf16.mxu0 0
      %747 = vmatpush1.bf16.msra.mxu0 0
      %748 = vmatprep.subr.bf16.mxu0 0
      %749 = vmatpush1.bf16.msra.mxu0 0
      %750 = vmatprep.subr.bf16.mxu0 0
      %751 = vmatpush1.bf16.msra.mxu0 0
      %752 = vmatprep.subr.bf16.mxu0 0
      %753 = vmatpush1.bf16.msra.mxu0 0
      %754 = vmatprep.subr.bf16.mxu0 0
      %755 = vmatpush1.bf16.msra.mxu0 %v736
      %756 = vmatprep.subr.bf16.mxu0 0
      %757 = vmatpush1.bf16.msra.mxu0 %v735
      %758 = vmatprep.subr.bf16.mxu0 0
      %759 = vmatpush2.bf16.msra.mxu0 0
      %760 = vmatprep.subr.bf16.mxu0 0
      %761 = vmatpush2.bf16.msra.mxu0 0
      %762 = vmatprep.subr.bf16.mxu0 0
      %763 = vmatpush2.bf16.msra.mxu0 0
      %764 = vmatprep.subr.bf16.mxu0 0
      %765 = vmatpush2.bf16.msra.mxu0 0
      %766 = vmatprep.subr.bf16.mxu0 0
      %767 = vmatpush2.bf16.msra.mxu0 0
      %768 = vmatprep.subr.bf16.mxu0 0
      %769 = vmatpush2.bf16.msra.mxu0 0
      %770 = vmatprep.subr.bf16.mxu0 0
      %771 = vmatpush2.bf16.msra.mxu0 0
      %772 = vmatprep.subr.bf16.mxu0 0
      %773 = vmatpush2.bf16.msra.mxu0 0
      %774 = vmatprep.mubr.bf16.mxu0 0
      %775 = vmatmul.mubr.bf16.gmra.mxu0 %v740
      %v776 = vpop.f32.mrf.mxu0
      %v777 = vadd.f32 0.0, %v776
      %v778 = vpop.f32.mrf.mxu0
      %v779 = vpop.f32.mrf.mxu0
      %v780 = vpop.f32.mrf.mxu0
      %781 = vdwg.mxu0
      %v782 = vadd.f32 %v668, %v777
      %v783 = vld [vmem:[%s588] sm:$0x2]
      %v784 = vld [vmem:[%s588 + $0x2] sm:$0x2]
      %v788 = vunpack.c.l.s4 1966171168
      %v789 = vunpack.c.0.s8 %v788
      %v790 = vlaneseq
      %v791 = vshrl.u32 %v790, 7
      %v792 = vsub.s32 %v789, %v791
      %v793 = vrot.slane %v783, %v792
      %v794 = vcombine.high %v793, %v793
      %v796 = vunpack.c.l.s4 1966171168
      %v797 = vunpack.c.0.s8 %v796
      %v798 = vlaneseq
      %v799 = vshrl.u32 %v798, 7
      %v800 = vsub.s32 %v797, %v799
      %v801 = vrot.slane %v784, %v800
      %v802 = vcombine.high %v801, %v801
      %s803 = scalar_lea.vmem %s1, 80
      %v804 = vld [vmem:[%s803] sm:$0xf]
      %v805 = vld [vmem:[%s803 + $0x4] sm:$0xf]
      %v806 = vld [vmem:[%s803 + $0x8] sm:$0xf]
      %v807 = vld [vmem:[%s803 + $0xc] sm:$0xf]
      %v808 = vcombine.low %v794, %v802
      %v810 = vunpack.c.l.s4 1966171168
      %v811 = vunpack.c.0.s8 %v810
      %v812 = vlaneseq
      %v813 = vshrl.u32 %v812, 7
      %v814 = vsub.s32 %v811, %v813
      %v815 = vrot.slane %v808, %v814
      %v817 = vunpack.c.l.s4 1966171168
      %v818 = vunpack.c.0.s8 %v817
      %v819 = vlaneseq
      %v820 = vshrl.u32 %v819, 7
      %v821 = vsub.s32 %v818, %v820
      %v822 = vrot.slane %v815, %v821
      %v827 = vunpack.c.l.b16 %v804
      %v828 = vunpack.c.l.b16 %v805
      %v829 = vunpack.c.l.b16 %v806
      %v830 = vunpack.c.l.b16 %v807
      %v831 = vpack.c.b16 %v828, %v827
      %v832 = vpack.c.b16 %v830, %v829
      %v836 = vsel %vm374, %v822, 0
      %838 = vmatprep.subr.bf16.mxu0 0
      %839 = vmatpush1.bf16.msra.mxu0 0
      %840 = vmatprep.subr.bf16.mxu0 0
      %841 = vmatpush1.bf16.msra.mxu0 0
      %842 = vmatprep.subr.bf16.mxu0 0
      %843 = vmatpush1.bf16.msra.mxu0 0
      %844 = vmatprep.subr.bf16.mxu0 0
      %845 = vmatpush1.bf16.msra.mxu0 0
      %846 = vmatprep.subr.bf16.mxu0 0
      %847 = vmatpush1.bf16.msra.mxu0 0
      %848 = vmatprep.subr.bf16.mxu0 0
      %849 = vmatpush1.bf16.msra.mxu0 0
      %850 = vmatprep.subr.bf16.mxu0 0
      %851 = vmatpush1.bf16.msra.mxu0 %v832
      %852 = vmatprep.subr.bf16.mxu0 0
      %853 = vmatpush1.bf16.msra.mxu0 %v831
      %854 = vmatprep.subr.bf16.mxu0 0
      %855 = vmatpush2.bf16.msra.mxu0 0
      %856 = vmatprep.subr.bf16.mxu0 0
      %857 = vmatpush2.bf16.msra.mxu0 0
      %858 = vmatprep.subr.bf16.mxu0 0
      %859 = vmatpush2.bf16.msra.mxu0 0
      %860 = vmatprep.subr.bf16.mxu0 0
      %861 = vmatpush2.bf16.msra.mxu0 0
      %862 = vmatprep.subr.bf16.mxu0 0
      %863 = vmatpush2.bf16.msra.mxu0 0
      %864 = vmatprep.subr.bf16.mxu0 0
      %865 = vmatpush2.bf16.msra.mxu0 0
      %866 = vmatprep.subr.bf16.mxu0 0
      %867 = vmatpush2.bf16.msra.mxu0 0
      %868 = vmatprep.subr.bf16.mxu0 0
      %869 = vmatpush2.bf16.msra.mxu0 0
      %870 = vmatprep.mubr.bf16.mxu0 0
      %871 = vmatmul.mubr.bf16.gmra.mxu0 %v836
      %v872 = vpop.f32.mrf.mxu0
      %v873 = vadd.f32 0.0, %v872
      %v874 = vpop.f32.mrf.mxu0
      %v875 = vpop.f32.mrf.mxu0
      %v876 = vpop.f32.mrf.mxu0
      %877 = vdwg.mxu0
      %v878 = vadd.f32 %v782, %v873
      %s879 = sadd.s32 %s280, 2
      %s880 = smul.addr %s879, 2
      %s881 = scalar_lea.vmem %s260, %s880
      %v882 = vld [vmem:[%s881] sm:$0x1]
      %v883 = vld [vmem:[%s881 + $0x2] sm:$0x1]
      %s884 = scalar_lea.vmem %s1, 96
      %v885 = vld [vmem:[%s884] sm:$0xf]
      %v886 = vld [vmem:[%s884 + $0x4] sm:$0xf]
      %v887 = vld [vmem:[%s884 + $0x8] sm:$0xf]
      %v888 = vld [vmem:[%s884 + $0xc] sm:$0xf]
      %v891 = vcombine.low %v882, %v883
      %v893 = vunpack.c.l.s4 1966171168
      %v894 = vunpack.c.0.s8 %v893
      %v895 = vlaneseq
      %v896 = vshrl.u32 %v895, 7
      %v897 = vsub.s32 %v894, %v896
      %v898 = vrot.slane %v891, %v897
      %v900 = vunpack.c.l.s4 1966171168
      %v901 = vunpack.c.0.s8 %v900
      %v902 = vlaneseq
      %v903 = vshrl.u32 %v902, 7
      %v904 = vsub.s32 %v901, %v903
      %v905 = vrot.slane %v898, %v904
      %v910 = vunpack.c.l.b16 %v885
      %v911 = vunpack.c.l.b16 %v886
      %v912 = vunpack.c.l.b16 %v887
      %v913 = vunpack.c.l.b16 %v888
      %v914 = vpack.c.b16 %v911, %v910
      %v915 = vpack.c.b16 %v913, %v912
      %v919 = vsel %vm374, %v905, 0
      %921 = vmatprep.subr.bf16.mxu0 0
      %922 = vmatpush1.bf16.msra.mxu0 0
      %923 = vmatprep.subr.bf16.mxu0 0
      %924 = vmatpush1.bf16.msra.mxu0 0
      %925 = vmatprep.subr.bf16.mxu0 0
      %926 = vmatpush1.bf16.msra.mxu0 0
      %927 = vmatprep.subr.bf16.mxu0 0
      %928 = vmatpush1.bf16.msra.mxu0 0
      %929 = vmatprep.subr.bf16.mxu0 0
      %930 = vmatpush1.bf16.msra.mxu0 0
      %931 = vmatprep.subr.bf16.mxu0 0
      %932 = vmatpush1.bf16.msra.mxu0 0
      %933 = vmatprep.subr.bf16.mxu0 0
      %934 = vmatpush1.bf16.msra.mxu0 %v915
      %935 = vmatprep.subr.bf16.mxu0 0
      %936 = vmatpush1.bf16.msra.mxu0 %v914
      %937 = vmatprep.subr.bf16.mxu0 0
      %938 = vmatpush2.bf16.msra.mxu0 0
      %939 = vmatprep.subr.bf16.mxu0 0
      %940 = vmatpush2.bf16.msra.mxu0 0
      %941 = vmatprep.subr.bf16.mxu0 0
      %942 = vmatpush2.bf16.msra.mxu0 0
      %943 = vmatprep.subr.bf16.mxu0 0
      %944 = vmatpush2.bf16.msra.mxu0 0
      %945 = vmatprep.subr.bf16.mxu0 0
      %946 = vmatpush2.bf16.msra.mxu0 0
      %947 = vmatprep.subr.bf16.mxu0 0
      %948 = vmatpush2.bf16.msra.mxu0 0
      %949 = vmatprep.subr.bf16.mxu0 0
      %950 = vmatpush2.bf16.msra.mxu0 0
      %951 = vmatprep.subr.bf16.mxu0 0
      %952 = vmatpush2.bf16.msra.mxu0 0
      %953 = vmatprep.mubr.bf16.mxu0 0
      %954 = vmatmul.mubr.bf16.gmra.mxu0 %v919
      %v955 = vpop.f32.mrf.mxu0
      %v956 = vadd.f32 0.0, %v955
      %v957 = vpop.f32.mrf.mxu0
      %v958 = vpop.f32.mrf.mxu0
      %v959 = vpop.f32.mrf.mxu0
      %960 = vdwg.mxu0
      %v961 = vadd.f32 %v878, %v956
      %v962 = vld [vmem:[%s881] sm:$0x3]
      %v963 = vld [vmem:[%s881 + $0x2] sm:$0x3]
      %v967 = vunpack.c.l.s4 1966171168
      %v968 = vunpack.c.0.s8 %v967
      %v969 = vlaneseq
      %v970 = vshrl.u32 %v969, 7
      %v971 = vsub.s32 %v968, %v970
      %v972 = vrot.slane %v962, %v971
      %v973 = vcombine.high %v972, %v972
      %v975 = vunpack.c.l.s4 1966171168
      %v976 = vunpack.c.0.s8 %v975
      %v977 = vlaneseq
      %v978 = vshrl.u32 %v977, 7
      %v979 = vsub.s32 %v976, %v978
      %v980 = vrot.slane %v963, %v979
      %v981 = vcombine.high %v980, %v980
      %v983 = vshrl.u32 %v972, 16
      %v985 = vrot.slane %v983, 7
      %v986 = vrot.slane %v985, 1
      %v988 = vshll.u32 %v973, 16
      %v990 = vsel %vm323, %v986, %v988
      %v992 = vshrl.u32 %v980, 16
      %v994 = vrot.slane %v992, 7
      %v995 = vrot.slane %v994, 1
      %v997 = vshll.u32 %v981, 16
      %v999 = vsel %vm323, %v995, %v997
      %s1000 = scalar_lea.vmem %s1, 112
      %v1001 = vld [vmem:[%s1000] sm:$0xf]
      %v1002 = vld [vmem:[%s1000 + $0x4] sm:$0xf]
      %v1003 = vld [vmem:[%s1000 + $0x8] sm:$0xf]
      %v1004 = vld [vmem:[%s1000 + $0xc] sm:$0xf]
      %v1005 = vcombine.low %v990, %v999
      %v1007 = vunpack.c.l.s4 1966171168
      %v1008 = vunpack.c.0.s8 %v1007
      %v1009 = vlaneseq
      %v1010 = vshrl.u32 %v1009, 7
      %v1011 = vsub.s32 %v1008, %v1010
      %v1012 = vrot.slane %v1005, %v1011
      %v1014 = vunpack.c.l.s4 1966171168
      %v1015 = vunpack.c.0.s8 %v1014
      %v1016 = vlaneseq
      %v1017 = vshrl.u32 %v1016, 7
      %v1018 = vsub.s32 %v1015, %v1017
      %v1019 = vrot.slane %v1012, %v1018
      %v1024 = vunpack.c.l.b16 %v1001
      %v1025 = vunpack.c.l.b16 %v1002
      %v1026 = vunpack.c.l.b16 %v1003
      %v1027 = vunpack.c.l.b16 %v1004
      %v1028 = vpack.c.b16 %v1025, %v1024
      %v1029 = vpack.c.b16 %v1027, %v1026
      %v1033 = vsel %vm374, %v1019, 0
      %1035 = vmatprep.subr.bf16.mxu0 0
      %1036 = vmatpush1.bf16.msra.mxu0 0
      %1037 = vmatprep.subr.bf16.mxu0 0
      %1038 = vmatpush1.bf16.msra.mxu0 0
      %1039 = vmatprep.subr.bf16.mxu0 0
      %1040 = vmatpush1.bf16.msra.mxu0 0
      %1041 = vmatprep.subr.bf16.mxu0 0
      %1042 = vmatpush1.bf16.msra.mxu0 0
      %1043 = vmatprep.subr.bf16.mxu0 0
      %1044 = vmatpush1.bf16.msra.mxu0 0
      %1045 = vmatprep.subr.bf16.mxu0 0
      %1046 = vmatpush1.bf16.msra.mxu0 0
      %1047 = vmatprep.subr.bf16.mxu0 0
      %1048 = vmatpush1.bf16.msra.mxu0 %v1029
      %1049 = vmatprep.subr.bf16.mxu0 0
      %1050 = vmatpush1.bf16.msra.mxu0 %v1028
      %1051 = vmatprep.subr.bf16.mxu0 0
      %1052 = vmatpush2.bf16.msra.mxu0 0
      %1053 = vmatprep.subr.bf16.mxu0 0
      %1054 = vmatpush2.bf16.msra.mxu0 0
      %1055 = vmatprep.subr.bf16.mxu0 0
      %1056 = vmatpush2.bf16.msra.mxu0 0
      %1057 = vmatprep.subr.bf16.mxu0 0
      %1058 = vmatpush2.bf16.msra.mxu0 0
      %1059 = vmatprep.subr.bf16.mxu0 0
      %1060 = vmatpush2.bf16.msra.mxu0 0
      %1061 = vmatprep.subr.bf16.mxu0 0
      %1062 = vmatpush2.bf16.msra.mxu0 0
      %1063 = vmatprep.subr.bf16.mxu0 0
      %1064 = vmatpush2.bf16.msra.mxu0 0
      %1065 = vmatprep.subr.bf16.mxu0 0
      %1066 = vmatpush2.bf16.msra.mxu0 0
      %1067 = vmatprep.mubr.bf16.mxu0 0
      %1068 = vmatmul.mubr.bf16.gmra.mxu0 %v1033
      %v1069 = vpop.f32.mrf.mxu0
      %v1070 = vadd.f32 0.0, %v1069
      %v1071 = vpop.f32.mrf.mxu0
      %v1072 = vpop.f32.mrf.mxu0
      %v1073 = vpop.f32.mrf.mxu0
      %1074 = vdwg.mxu0
      %v1075 = vadd.f32 %v961, %v1070
      %v1076 = vld [vmem:[%s881] sm:$0x2]
      %v1077 = vld [vmem:[%s881 + $0x2] sm:$0x2]
      %v1081 = vunpack.c.l.s4 1966171168
      %v1082 = vunpack.c.0.s8 %v1081
      %v1083 = vlaneseq
      %v1084 = vshrl.u32 %v1083, 7
      %v1085 = vsub.s32 %v1082, %v1084
      %v1086 = vrot.slane %v1076, %v1085
      %v1087 = vcombine.high %v1086, %v1086
      %v1089 = vunpack.c.l.s4 1966171168
      %v1090 = vunpack.c.0.s8 %v1089
      %v1091 = vlaneseq
      %v1092 = vshrl.u32 %v1091, 7
      %v1093 = vsub.s32 %v1090, %v1092
      %v1094 = vrot.slane %v1077, %v1093
      %v1095 = vcombine.high %v1094, %v1094
      %s1096 = scalar_lea.vmem %s1, 128
      %v1097 = vld [vmem:[%s1096] sm:$0xf]
      %v1098 = vld [vmem:[%s1096 + $0x4] sm:$0xf]
      %v1099 = vld [vmem:[%s1096 + $0x8] sm:$0xf]
      %v1100 = vld [vmem:[%s1096 + $0xc] sm:$0xf]
      %v1101 = vcombine.low %v1087, %v1095
      %v1103 = vunpack.c.l.s4 1966171168
      %v1104 = vunpack.c.0.s8 %v1103
      %v1105 = vlaneseq
      %v1106 = vshrl.u32 %v1105, 7
      %v1107 = vsub.s32 %v1104, %v1106
      %v1108 = vrot.slane %v1101, %v1107
      %v1110 = vunpack.c.l.s4 1966171168
      %v1111 = vunpack.c.0.s8 %v1110
      %v1112 = vlaneseq
      %v1113 = vshrl.u32 %v1112, 7
      %v1114 = vsub.s32 %v1111, %v1113
      %v1115 = vrot.slane %v1108, %v1114
      %v1120 = vunpack.c.l.b16 %v1097
      %v1121 = vunpack.c.l.b16 %v1098
      %v1122 = vunpack.c.l.b16 %v1099
      %v1123 = vunpack.c.l.b16 %v1100
      %v1124 = vpack.c.b16 %v1121, %v1120
      %v1125 = vpack.c.b16 %v1123, %v1122
      %v1129 = vsel %vm374, %v1115, 0
      %1131 = vmatprep.subr.bf16.mxu0 0
      %1132 = vmatpush1.bf16.msra.mxu0 0
      %1133 = vmatprep.subr.bf16.mxu0 0
      %1134 = vmatpush1.bf16.msra.mxu0 0
      %1135 = vmatprep.subr.bf16.mxu0 0
      %1136 = vmatpush1.bf16.msra.mxu0 0
      %1137 = vmatprep.subr.bf16.mxu0 0
      %1138 = vmatpush1.bf16.msra.mxu0 0
      %1139 = vmatprep.subr.bf16.mxu0 0
      %1140 = vmatpush1.bf16.msra.mxu0 0
      %1141 = vmatprep.subr.bf16.mxu0 0
      %1142 = vmatpush1.bf16.msra.mxu0 0
      %1143 = vmatprep.subr.bf16.mxu0 0
      %1144 = vmatpush1.bf16.msra.mxu0 %v1125
      %1145 = vmatprep.subr.bf16.mxu0 0
      %1146 = vmatpush1.bf16.msra.mxu0 %v1124
      %1147 = vmatprep.subr.bf16.mxu0 0
      %1148 = vmatpush2.bf16.msra.mxu0 0
      %1149 = vmatprep.subr.bf16.mxu0 0
      %1150 = vmatpush2.bf16.msra.mxu0 0
      %1151 = vmatprep.subr.bf16.mxu0 0
      %1152 = vmatpush2.bf16.msra.mxu0 0
      %1153 = vmatprep.subr.bf16.mxu0 0
      %1154 = vmatpush2.bf16.msra.mxu0 0
      %1155 = vmatprep.subr.bf16.mxu0 0
      %1156 = vmatpush2.bf16.msra.mxu0 0
      %1157 = vmatprep.subr.bf16.mxu0 0
      %1158 = vmatpush2.bf16.msra.mxu0 0
      %1159 = vmatprep.subr.bf16.mxu0 0
      %1160 = vmatpush2.bf16.msra.mxu0 0
      %1161 = vmatprep.subr.bf16.mxu0 0
      %1162 = vmatpush2.bf16.msra.mxu0 0
      %1163 = vmatprep.mubr.bf16.mxu0 0
      %1164 = vmatmul.mubr.bf16.gmra.mxu0 %v1129
      %v1165 = vpop.f32.mrf.mxu0
      %v1166 = vadd.f32 0.0, %v1165
      %v1167 = vpop.f32.mrf.mxu0
      %v1168 = vpop.f32.mrf.mxu0
      %v1169 = vpop.f32.mrf.mxu0
      %1170 = vdwg.mxu0
      %v1171 = vadd.f32 %v1075, %v1166
      %v1172 = vld [vmem:[%s2] sm:$0x1]
      %v1174 = vlaneseq
      %v1175 = vshrl.u32 %v1174, 7
      %v1176 = vsub.s32 0, %v1175
      %v1177 = vrot.slane %v1172, %v1176
      %v1179 = vadd.f32 %v1171, %v1177
      %vm1180 = vcmp.ge.f32.partialorder %v1179, 0.0
      %v1181 = vld [vmem:[%s3] sm:$0x1]
      %v1183 = vlaneseq
      %v1184 = vshrl.u32 %v1183, 7
      %v1185 = vsub.s32 0, %v1184
      %v1186 = vrot.slane %v1181, %v1185
      %v1188 = vmul.f32 %v1186, %v1179
      %v1189 = vsel %vm1180, %v1179, %v1188
      %v1190 = vld [vmem:[%s268] sm:$0x1]
      %v1191 = vld [vmem:[%s268 + $0x1] sm:$0x1]
      %v1192 = vunpack.c.l.bf16 %v1190
      %v1193 = vunpack.c.l.bf16 %v1191
      %v1196 = vcombine.low %v1192, %v1193
      %v1198 = vunpack.c.l.s4 1983009808
      %v1199 = vunpack.c.0.s8 %v1198
      %v1200 = vlaneseq
      %v1201 = vshrl.u32 %v1200, 7
      %v1202 = vsub.s32 %v1199, %v1201
      %v1203 = vrot.slane %v1196, %v1202
      %v1205 = vadd.f32 %v1189, %v1203
      %v1208 = vunpack.c.l.s4 1983009808
      %v1209 = vunpack.c.0.s8 %v1208
      %v1210 = vlaneseq
      %v1211 = vshrl.u32 %v1210, 7
      %v1212 = vsub.s32 %v1209, %v1211
      %v1213 = vrot.slane %v1205, %v1212
      %v1214 = vcombine.high %v1213, %v1213
      %v1217 = vpack.c.bf16 %v1213, %v1213
      %v1218 = vpack.c.bf16 %v1214, %v1214
      %vm1219 = vcmask 253952
      %1220 = vst.msk [vmem:[%s277] sm:$0x1] %vm1219, %v1217
      %1221 = vst.msk [vmem:[%s277 + $0x1] sm:$0x1] %vm1219, %v1218
      %s1222 = smul.u32 2, %s21
      %p1223 = scmp.lt.s32.totalorder %s20, 1
      %s1224 = scalar_select %p1223, %s20, 1
      %p1225 = scmp.lt.s32.totalorder %s1222, 1
      %s1226 = scalar_select %p1225, %s1222, 1
      %s1227 = smul.addr %s1224, 2
      %s1228 = sadd.s32 %s1226, %s1227
      %s1229 = scalar_lea.vmem %s5, %s1228
      // Predicated region
      $region41: #{_lambda_.15} parent=39 // pred_check
        %p1230 = pneg %p165
      $region42: #{_lambda_.15} parent=39 // pred_check_branch
        %1232 = sbr.rel (%p1230) target = $region44
      $region43: #{_lambda_.15} parent=39 // pred_region
        %s1233 = smul.u32 2, %s21
      $region44: #{_lambda_.15} parent=39 // pred_fallthru
        _
    $region40: #{_lambda_.15} parent=5 // pred_fallthru
      _
    %p1234 = scmp.le.s32.totalorder 2, %s11
    // Predicated region
    $region45: #{_lambda_.15} parent=5 // pred_check
      %p1235 = pneg %p1234
    $region46: #{_lambda_.15} parent=5 // pred_check_branch
      %1237 = sbr.rel (%p1235) target = $region48
    $region47: #{_lambda_.15} parent=5 // pred_region
      %s1238 = ssub.s32 %s11, 2
      // Predicated region
      $region49: #{_lambda_.15} parent=47 // pred_check
        %p1239 = pneg %p171
      $region50: #{_lambda_.15} parent=47 // pred_check_branch
        %1241 = sbr.rel (%p1239) target = $region52
      $region51: #{_lambda_.15} parent=47 // pred_region
        %s1242 = smul.u32 2, %s23
        %p1243 = scmp.lt.s32.totalorder %s22, 1
        %s1244 = scalar_select %p1243, %s22, 1
        %p1245 = scmp.lt.s32.totalorder %s1242, 1
        %s1246 = scalar_select %p1245, %s1242, 1
        %s1247 = smul.addr %s1244, 2
        %s1248 = sadd.s32 %s1246, %s1247
        %s1249 = scalar_lea.vmem %s5, %s1248
      $region52: #{_lambda_.15} parent=47 // pred_fallthru
        _
    $region48: #{_lambda_.15} parent=5 // pred_fallthru
      _
  $region6: #{_lambda_.15} parent=0 // loop_footer
    %s15 = sadd.s32 1, %s11
  $region7: #{_lambda_.15} parent=0 // loop_footer_branch
    %10 = sbr.rel target = $region3
  $region8: #{_lambda_.15} parent=0 // loop_exit
    _

// kernel: _lambda_.22
$region0: #{_lambda_.22}
  #allocation0 [shape = 'u32[]', space=smem, size = 0x4, offset = 0x4, fixed_abs, tag = 'smem constant byte address 0x4 - core index']
  #allocation1 [shape = 'u32[144,128]{1,0:T(1,128)}', space=vmem, size = 0x12000, scoped, tag = 'internal scratch']
  %s0 = inlined_call_operand.vmem [shape: bf16[2,4,4,32], index: 0, kind: input, shape index: {}]
  %s1 = inlined_call_operand.vmem [shape: bf16[9,32,128], index: 1, kind: input, shape index: {}]
  %s2 = inlined_call_operand.vmem [shape: f32[1,128], index: 2, kind: input, shape index: {}]
  %s3 = inlined_call_operand.vmem [shape: f32[1,128], index: 3, kind: input, shape index: {}]
  %s4 = inlined_call_operand.vmem [shape: bf16[2,2,2,128], index: 4, kind: output, shape index: {}]
  %s5 = sld [smem:[#allocation0]]
  $region49: #{_lambda_.22} parent=0
    _
  %s7 = ssub.s32 1, %s5
  %s8 = scalar_select 0, %s7, %s5
  loop: start=0, step=1, limit=4
  $region2: #{_lambda_.22} parent=0 // loop_pre_header
    _
  $region3: #{_lambda_.22} parent=0 // loop_header
    %s10 = sphi 0, %s14
    %p11 = scmp.ge.s32.totalorder %s10, 4
    %s17 = sphi 0, %s29
    %s18 = sphi 0, %s25
    %s19 = sphi 0, %s17
    %s20 = sphi 0, %s18
    %s21 = sphi 0, %s19
    %s22 = sphi 0, %s20
    %s32 = sphi 0, %s34
    %s35 = sphi 0, %s32
    %s36 = sphi 0, %s35
    %s52 = sphi 0, %s36
    %s56 = sphi 0, %s56
    %s58 = sphi 0, %s56
    %s59 = sphi 0, %s58
    %s73 = sphi 0, %s59
    %s77 = sphi 0, %s77
    %s79 = sphi 0, %s77
    %s80 = sphi 0, %s79
    %s94 = sphi 0, %s80
    %s98 = sphi 0, %s98
    %s100 = sphi 0, %s98
    %s101 = sphi 0, %s100
    %s115 = sphi 0, %s101
    %s123 = sphi 0, %s125
    %s126 = sphi 0, %s123
    %s127 = sphi 0, %s126
    %s143 = sphi 0, %s127
  $region4: #{_lambda_.22} parent=0 // loop_header_branch
    %13 = sbr.rel (%p11) target = $region8
  $region5: #{_lambda_.22} parent=0 // loop_body
    %s15 = ssub.s32 %s10, 1
    %s16 = ssub.s32 %s10, 2
    %s23 = sadd.s32 1, %s18
    %p24 = scmp.ge.s32.totalorder %s23, 1
    %s25 = scalar_select %p24, 0, %s23
    %s26 = sadd.s32 1, %s17
    %s27 = scalar_select %p24, %s26, %s17
    %p28 = scmp.ge.s32.totalorder %s27, 2
    %s29 = scalar_select %p28, 0, %s27
    %s30 = ssub.s32 %s17, %s29
    %p31 = scmp.eq.s32.totalorder %s30, 0
    %s33 = sadd.s32 %s32, 1
    %s34 = scalar_select %p31, %s32, %s33
    %p37 = pneg %p31
    %p38 = scmp.eq.s32.totalorder %s10, 1
    %p39 = por %p37, %p38
    %p40 = scmp.ne.s32.totalorder %s32, %s35
    %p41 = scmp.eq.s32.totalorder %s10, 0
    %p42 = por %p40, %p41
    %p43 = scmp.ne.s32.totalorder %s32, %s35
    %p44 = scmp.eq.s32.totalorder %s15, 1
    %p45 = por %p43, %p44
    %p46 = scmp.ne.s32.totalorder %s35, %s36
    %p47 = scmp.eq.s32.totalorder %s15, 0
    %p48 = por %p46, %p47
    %p49 = scmp.ne.s32.totalorder %s35, %s36
    %p50 = scmp.eq.s32.totalorder %s16, 1
    %p51 = por %p49, %p50
    %p53 = scmp.ne.s32.totalorder %s36, %s52
    %p54 = scmp.eq.s32.totalorder %s16, 0
    %p55 = por %p53, %p54
    %s57 = sadd.s32 %s56, 1
    %p60 = scmp.eq.s32.totalorder %s10, 1
    %p61 = scmp.ne.s32.totalorder %s56, %s58
    %p62 = scmp.eq.s32.totalorder %s10, 0
    %p63 = por %p61, %p62
    %p64 = scmp.ne.s32.totalorder %s56, %s58
    %p65 = scmp.eq.s32.totalorder %s15, 1
    %p66 = por %p64, %p65
    %p67 = scmp.ne.s32.totalorder %s58, %s59
    %p68 = scmp.eq.s32.totalorder %s15, 0
    %p69 = por %p67, %p68
    %p70 = scmp.ne.s32.totalorder %s58, %s59
    %p71 = scmp.eq.s32.totalorder %s16, 1
    %p72 = por %p70, %p71
    %p74 = scmp.ne.s32.totalorder %s59, %s73
    %p75 = scmp.eq.s32.totalorder %s16, 0
    %p76 = por %p74, %p75
    %s78 = sadd.s32 %s77, 1
    %p81 = scmp.eq.s32.totalorder %s10, 1
    %p82 = scmp.ne.s32.totalorder %s77, %s79
    %p83 = scmp.eq.s32.totalorder %s10, 0
    %p84 = por %p82, %p83
    %p85 = scmp.ne.s32.totalorder %s77, %s79
    %p86 = scmp.eq.s32.totalorder %s15, 1
    %p87 = por %p85, %p86
    %p88 = scmp.ne.s32.totalorder %s79, %s80
    %p89 = scmp.eq.s32.totalorder %s15, 0
    %p90 = por %p88, %p89
    %p91 = scmp.ne.s32.totalorder %s79, %s80
    %p92 = scmp.eq.s32.totalorder %s16, 1
    %p93 = por %p91, %p92
    %p95 = scmp.ne.s32.totalorder %s80, %s94
    %p96 = scmp.eq.s32.totalorder %s16, 0
    %p97 = por %p95, %p96
    %s99 = sadd.s32 %s98, 1
    %p102 = scmp.eq.s32.totalorder %s10, 1
    %p103 = scmp.ne.s32.totalorder %s98, %s100
    %p104 = scmp.eq.s32.totalorder %s10, 0
    %p105 = por %p103, %p104
    %p106 = scmp.ne.s32.totalorder %s98, %s100
    %p107 = scmp.eq.s32.totalorder %s15, 1
    %p108 = por %p106, %p107
    %p109 = scmp.ne.s32.totalorder %s100, %s101
    %p110 = scmp.eq.s32.totalorder %s15, 0
    %p111 = por %p109, %p110
    %p112 = scmp.ne.s32.totalorder %s100, %s101
    %p113 = scmp.eq.s32.totalorder %s16, 1
    %p114 = por %p112, %p113
    %p116 = scmp.ne.s32.totalorder %s101, %s115
    %p117 = scmp.eq.s32.totalorder %s16, 0
    %p118 = por %p116, %p117
    %s119 = ssub.s32 %s17, %s29
    %s120 = ssub.s32 %s18, %s25
    %s121 = sor.u32 %s119, %s120
    %p122 = scmp.eq.s32.totalorder %s121, 0
    %s124 = sadd.s32 %s123, 1
    %s125 = scalar_select %p122, %s123, %s124
    %p128 = pneg %p122
    %p129 = scmp.eq.s32.totalorder %s10, 1
    %p130 = por %p128, %p129
    %p131 = scmp.ne.s32.totalorder %s123, %s126
    %p132 = scmp.eq.s32.totalorder %s10, 0
    %p133 = por %p131, %p132
    %p134 = scmp.ne.s32.totalorder %s123, %s126
    %p135 = scmp.eq.s32.totalorder %s15, 1
    %p136 = por %p134, %p135
    %p137 = scmp.ne.s32.totalorder %s126, %s127
    %p138 = scmp.eq.s32.totalorder %s15, 0
    %p139 = por %p137, %p138
    %p140 = scmp.ne.s32.totalorder %s126, %s127
    %p141 = scmp.eq.s32.totalorder %s16, 1
    %p142 = por %p140, %p141
    %p144 = scmp.ne.s32.totalorder %s127, %s143
    %p145 = scmp.eq.s32.totalorder %s16, 0
    %p146 = por %p144, %p145
    %p147 = scmp.le.s32.totalorder 1, %s10
    %p148 = scmp.lt.s32.totalorder %s10, 3
    %p149 = pnand %p147, %p148
    %p150 = pneg %p149
    // Predicated region
    $region9: #{_lambda_.22} parent=5 // pred_check
      _
    $region10: #{_lambda_.22} parent=5 // pred_check_branch
      %152 = sbr.rel (%p149) target = $region12
    $region11: #{_lambda_.22} parent=5 // pred_region
      %s153 = ssub.s32 %s10, 1
      // Predicated region
      $region13: #{_lambda_.22} parent=11 // pred_check
        %p154 = pneg %p69
      $region14: #{_lambda_.22} parent=11 // pred_check_branch
        %156 = sbr.rel (%p154) target = $region16
      $region15: #{_lambda_.22} parent=11 // pred_region
        _
      $region16: #{_lambda_.22} parent=11 // pred_fallthru
        _
      // Predicated region
      $region17: #{_lambda_.22} parent=11 // pred_check
        %p157 = pneg %p90
      $region18: #{_lambda_.22} parent=11 // pred_check_branch
        %159 = sbr.rel (%p157) target = $region20
      $region19: #{_lambda_.22} parent=11 // pred_region
        _
      $region20: #{_lambda_.22} parent=11 // pred_fallthru
        _
      // Predicated region
      $region21: #{_lambda_.22} parent=11 // pred_check
        %p160 = pneg %p111
      $region22: #{_lambda_.22} parent=11 // pred_check_branch
        %162 = sbr.rel (%p160) target = $region24
      $region23: #{_lambda_.22} parent=11 // pred_region
        _
      $region24: #{_lambda_.22} parent=11 // pred_fallthru
        _
    $region12: #{_lambda_.22} parent=5 // pred_fallthru
      _
    %p163 = scmp.lt.s32.totalorder %s10, 2
    // Predicated region
    $region25: #{_lambda_.22} parent=5 // pred_check
      %p164 = pneg %p163
    $region26: #{_lambda_.22} parent=5 // pred_check_branch
      %166 = sbr.rel (%p164) target = $region28
    $region27: #{_lambda_.22} parent=5 // pred_region
      // Predicated region
      $region29: #{_lambda_.22} parent=27 // pred_check
        %p167 = pneg %p42
      $region30: #{_lambda_.22} parent=27 // pred_check_branch
        %169 = sbr.rel (%p167) target = $region32
      $region31: #{_lambda_.22} parent=27 // pred_region
        %p170 = scmp.lt.s32.totalorder %s17, 1
        %s171 = scalar_select %p170, %s17, 1
        %s172 = smul.addr %s171, 4
        %s173 = smul.addr %s172, 2
        %s174 = scalar_lea.vmem %s0, %s173
      $region32: #{_lambda_.22} parent=27 // pred_fallthru
        _
    $region28: #{_lambda_.22} parent=5 // pred_fallthru
      _
    %p175 = scmp.le.s32.totalorder 1, %s10
    %p176 = scmp.lt.s32.totalorder %s10, 3
    %p177 = pnand %p175, %p176
    %p178 = pneg %p177
    // Predicated region
    $region33: #{_lambda_.22} parent=5 // pred_check
      _
    $region34: #{_lambda_.22} parent=5 // pred_check_branch
      %180 = sbr.rel (%p177) target = $region36
    $region35: #{_lambda_.22} parent=5 // pred_region
      %s181 = ssub.s32 %s10, 1
      %p182 = scmp.lt.s32.totalorder %s19, 1
      %s183 = scalar_select %p182, %s19, 1
      %s184 = smul.addr %s183, 4
      %s185 = smul.addr %s184, 2
      %s186 = scalar_lea.vmem %s0, %s185
      %p187 = pneg %p48
      %p188 = pneg %p45
      %p189 = pneg %p69
      %p190 = pneg %p66
      %p191 = pneg %p90
      %p192 = pneg %p87
      %p193 = pneg %p111
      %p194 = pneg %p108
      %p195 = pneg %p139
      %p196 = pneg %p136
      %s197 = smul.u32 2, %s20
      %p198 = scmp.lt.s32.totalorder %s19, 1
      %s199 = scalar_select %p198, %s19, 1
      %p200 = scmp.lt.s32.totalorder %s197, 1
      %s201 = scalar_select %p200, %s197, 1
      %s202 = smul.addr %s199, 2
      %s203 = sadd.s32 %s201, %s202
      %s204 = scalar_lea.vmem %s4, %s203
      %p205 = scmp.lt.s32.totalorder %s19, 1
      %s206 = scalar_select %p205, %s19, 1
      %s207 = smul.addr %s206, 4
      %s208 = smul.addr %s207, 2
      %s209 = scalar_lea.vmem %s0, %s208
      %s210 = smul.u32 2, %s20
      %p211 = scmp.lt.s32.totalorder %s19, 1
      %s212 = scalar_select %p211, %s19, 1
      %p213 = scmp.lt.s32.totalorder %s210, 1
      %s214 = scalar_select %p213, %s210, 1
      %s215 = smul.addr %s212, 2
      %s216 = sadd.s32 %s214, %s215
      %s217 = scalar_lea.vmem %s4, %s216
      %s218 = smul.u32 2, %s20
      %s220 = smul.u32 %s20, 2
      %s221 = smul.addr %s220, 2
      %s222 = scalar_lea.vmem %s209, %s221
      %v223 = vld [vmem:[%s222] sm:$0x1]
      %v224 = vld [vmem:[%s222 + $0x2] sm:$0x1]
      %v225 = vld [vmem:[%s1] sm:$0xf]
      %v226 = vld [vmem:[%s1 + $0x4] sm:$0xf]
      %v227 = vld [vmem:[%s1 + $0x8] sm:$0xf]
      %v228 = vld [vmem:[%s1 + $0xc] sm:$0xf]
      %v229 = vld [vmem:[%s222] sm:$0x3]
      %v230 = vld [vmem:[%s222 + $0x2] sm:$0x3]
      %v234 = vunpack.c.l.s4 1966171168
      %v235 = vunpack.c.0.s8 %v234
      %v236 = vlaneseq
      %v237 = vshrl.u32 %v236, 7
      %v238 = vsub.s32 %v235, %v237
      %v239 = vrot.slane %v229, %v238
      %v240 = vcombine.high %v239, %v239
      %v242 = vunpack.c.l.s4 1966171168
      %v243 = vunpack.c.0.s8 %v242
      %v244 = vlaneseq
      %v245 = vshrl.u32 %v244, 7
      %v246 = vsub.s32 %v243, %v245
      %v247 = vrot.slane %v230, %v246
      %v248 = vcombine.high %v247, %v247
      %vm249 = vsmask.f32 256
      %vm250 = vsmask.f32 1284
      %vm251 = vmor %vm249, %vm250
      %vm252 = vsmask.f32 2312
      %vm253 = vmor %vm251, %vm252
      %vm254 = vsmask.f32 3340
      %vm255 = vmor %vm253, %vm254
      %vm256 = vsmask.f32 4368
      %vm257 = vmor %vm255, %vm256
      %vm258 = vsmask.f32 5396
      %vm259 = vmor %vm257, %vm258
      %vm260 = vsmask.f32 6424
      %vm261 = vmor %vm259, %vm260
      %vm262 = vsmask.f32 7452
      %vm263 = vmor %vm261, %vm262
      %v265 = vshrl.u32 %v239, 16
      %v267 = vrot.slane %v265, 7
      %v268 = vrot.slane %v267, 1
      %v270 = vshll.u32 %v240, 16
      %v272 = vsel %vm263, %v268, %v270
      %v274 = vshrl.u32 %v247, 16
      %v276 = vrot.slane %v274, 7
      %v277 = vrot.slane %v276, 1
      %v279 = vshll.u32 %v248, 16
      %v281 = vsel %vm263, %v277, %v279
      %s282 = scalar_lea.vmem %s1, 16
      %v283 = vld [vmem:[%s282] sm:$0xf]
      %v284 = vld [vmem:[%s282 + $0x4] sm:$0xf]
      %v285 = vld [vmem:[%s282 + $0x8] sm:$0xf]
      %v286 = vld [vmem:[%s282 + $0xc] sm:$0xf]
      %v287 = vcombine.low %v272, %v281
      %v289 = vunpack.c.l.s4 1966171168
      %v290 = vunpack.c.0.s8 %v289
      %v291 = vlaneseq
      %v292 = vshrl.u32 %v291, 7
      %v293 = vsub.s32 %v290, %v292
      %v294 = vrot.slane %v287, %v293
      %v296 = vunpack.c.l.s4 1966171168
      %v297 = vunpack.c.0.s8 %v296
      %v298 = vlaneseq
      %v299 = vshrl.u32 %v298, 7
      %v300 = vsub.s32 %v297, %v299
      %v301 = vrot.slane %v294, %v300
      %v306 = vunpack.c.l.b16 %v283
      %v307 = vunpack.c.l.b16 %v284
      %v308 = vunpack.c.l.b16 %v285
      %v309 = vunpack.c.l.b16 %v286
      %v310 = vpack.c.b16 %v307, %v306
      %v311 = vpack.c.b16 %v309, %v308
      %vm314 = vcmask 261120
      %v316 = vsel %vm314, %v301, 0
      %318 = vmatprep.subr.bf16.mxu0 0
      %319 = vmatpush1.bf16.msra.mxu0 0
      %320 = vmatprep.subr.bf16.mxu0 0
      %321 = vmatpush1.bf16.msra.mxu0 0
      %322 = vmatprep.subr.bf16.mxu0 0
      %323 = vmatpush1.bf16.msra.mxu0 0
      %324 = vmatprep.subr.bf16.mxu0 0
      %325 = vmatpush1.bf16.msra.mxu0 0
      %326 = vmatprep.subr.bf16.mxu0 0
      %327 = vmatpush1.bf16.msra.mxu0 0
      %328 = vmatprep.subr.bf16.mxu0 0
      %329 = vmatpush1.bf16.msra.mxu0 0
      %330 = vmatprep.subr.bf16.mxu0 0
      %331 = vmatpush1.bf16.msra.mxu0 %v311
      %332 = vmatprep.subr.bf16.mxu0 0
      %333 = vmatpush1.bf16.msra.mxu0 %v310
      %334 = vmatprep.subr.bf16.mxu0 0
      %335 = vmatpush2.bf16.msra.mxu0 0
      %336 = vmatprep.subr.bf16.mxu0 0
      %337 = vmatpush2.bf16.msra.mxu0 0
      %338 = vmatprep.subr.bf16.mxu0 0
      %339 = vmatpush2.bf16.msra.mxu0 0
      %340 = vmatprep.subr.bf16.mxu0 0
      %341 = vmatpush2.bf16.msra.mxu0 0
      %342 = vmatprep.subr.bf16.mxu0 0
      %343 = vmatpush2.bf16.msra.mxu0 0
      %344 = vmatprep.subr.bf16.mxu0 0
      %345 = vmatpush2.bf16.msra.mxu0 0
      %346 = vmatprep.subr.bf16.mxu0 0
      %347 = vmatpush2.bf16.msra.mxu0 0
      %348 = vmatprep.subr.bf16.mxu0 0
      %349 = vmatpush2.bf16.msra.mxu0 0
      %350 = vmatprep.mubr.bf16.mxu0 0
      %351 = vmatmul.mubr.bf16.gmra.mxu0 %v316
      %v352 = vpop.f32.mrf.mxu0
      %v353 = vadd.f32 0.0, %v352
      %v354 = vpop.f32.mrf.mxu0
      %v355 = vpop.f32.mrf.mxu0
      %v356 = vpop.f32.mrf.mxu0
      %357 = vdwg.mxu0
      %v360 = vcombine.low %v223, %v224
      %v362 = vunpack.c.l.s4 1966171168
      %v363 = vunpack.c.0.s8 %v362
      %v364 = vlaneseq
      %v365 = vshrl.u32 %v364, 7
      %v366 = vsub.s32 %v363, %v365
      %v367 = vrot.slane %v360, %v366
      %v369 = vunpack.c.l.s4 1966171168
      %v370 = vunpack.c.0.s8 %v369
      %v371 = vlaneseq
      %v372 = vshrl.u32 %v371, 7
      %v373 = vsub.s32 %v370, %v372
      %v374 = vrot.slane %v367, %v373
      %v379 = vunpack.c.l.b16 %v225
      %v380 = vunpack.c.l.b16 %v226
      %v381 = vunpack.c.l.b16 %v227
      %v382 = vunpack.c.l.b16 %v228
      %v383 = vpack.c.b16 %v380, %v379
      %v384 = vpack.c.b16 %v382, %v381
      %v388 = vsel %vm314, %v374, 0
      %390 = vmatprep.subr.bf16.mxu0 0
      %391 = vmatpush1.bf16.msra.mxu0 0
      %392 = vmatprep.subr.bf16.mxu0 0
      %393 = vmatpush1.bf16.msra.mxu0 0
      %394 = vmatprep.subr.bf16.mxu0 0
      %395 = vmatpush1.bf16.msra.mxu0 0
      %396 = vmatprep.subr.bf16.mxu0 0
      %397 = vmatpush1.bf16.msra.mxu0 0
      %398 = vmatprep.subr.bf16.mxu0 0
      %399 = vmatpush1.bf16.msra.mxu0 0
      %400 = vmatprep.subr.bf16.mxu0 0
      %401 = vmatpush1.bf16.msra.mxu0 0
      %402 = vmatprep.subr.bf16.mxu0 0
      %403 = vmatpush1.bf16.msra.mxu0 %v384
      %404 = vmatprep.subr.bf16.mxu0 0
      %405 = vmatpush1.bf16.msra.mxu0 %v383
      %406 = vmatprep.subr.bf16.mxu0 0
      %407 = vmatpush2.bf16.msra.mxu0 0
      %408 = vmatprep.subr.bf16.mxu0 0
      %409 = vmatpush2.bf16.msra.mxu0 0
      %410 = vmatprep.subr.bf16.mxu0 0
      %411 = vmatpush2.bf16.msra.mxu0 0
      %412 = vmatprep.subr.bf16.mxu0 0
      %413 = vmatpush2.bf16.msra.mxu0 0
      %414 = vmatprep.subr.bf16.mxu0 0
      %415 = vmatpush2.bf16.msra.mxu0 0
      %416 = vmatprep.subr.bf16.mxu0 0
      %417 = vmatpush2.bf16.msra.mxu0 0
      %418 = vmatprep.subr.bf16.mxu0 0
      %419 = vmatpush2.bf16.msra.mxu0 0
      %420 = vmatprep.subr.bf16.mxu0 0
      %421 = vmatpush2.bf16.msra.mxu0 0
      %422 = vmatprep.mubr.bf16.mxu0 0
      %423 = vmatmul.mubr.bf16.gmra.mxu0 %v388
      %v424 = vpop.f32.mrf.mxu0
      %v425 = vadd.f32 %v353, %v424
      %v426 = vpop.f32.mrf.mxu0
      %v427 = vpop.f32.mrf.mxu0
      %v428 = vpop.f32.mrf.mxu0
      %429 = vdwg.mxu0
      %v430 = vld [vmem:[%s222] sm:$0x2]
      %v431 = vld [vmem:[%s222 + $0x2] sm:$0x2]
      %v435 = vunpack.c.l.s4 1966171168
      %v436 = vunpack.c.0.s8 %v435
      %v437 = vlaneseq
      %v438 = vshrl.u32 %v437, 7
      %v439 = vsub.s32 %v436, %v438
      %v440 = vrot.slane %v430, %v439
      %v441 = vcombine.high %v440, %v440
      %v443 = vunpack.c.l.s4 1966171168
      %v444 = vunpack.c.0.s8 %v443
      %v445 = vlaneseq
      %v446 = vshrl.u32 %v445, 7
      %v447 = vsub.s32 %v444, %v446
      %v448 = vrot.slane %v431, %v447
      %v449 = vcombine.high %v448, %v448
      %s450 = scalar_lea.vmem %s1, 32
      %v451 = vld [vmem:[%s450] sm:$0xf]
      %v452 = vld [vmem:[%s450 + $0x4] sm:$0xf]
      %v453 = vld [vmem:[%s450 + $0x8] sm:$0xf]
      %v454 = vld [vmem:[%s450 + $0xc] sm:$0xf]
      %v455 = vcombine.low %v441, %v449
      %v457 = vunpack.c.l.s4 1966171168
      %v458 = vunpack.c.0.s8 %v457
      %v459 = vlaneseq
      %v460 = vshrl.u32 %v459, 7
      %v461 = vsub.s32 %v458, %v460
      %v462 = vrot.slane %v455, %v461
      %v464 = vunpack.c.l.s4 1966171168
      %v465 = vunpack.c.0.s8 %v464
      %v466 = vlaneseq
      %v467 = vshrl.u32 %v466, 7
      %v468 = vsub.s32 %v465, %v467
      %v469 = vrot.slane %v462, %v468
      %v474 = vunpack.c.l.b16 %v451
      %v475 = vunpack.c.l.b16 %v452
      %v476 = vunpack.c.l.b16 %v453
      %v477 = vunpack.c.l.b16 %v454
      %v478 = vpack.c.b16 %v475, %v474
      %v479 = vpack.c.b16 %v477, %v476
      %v483 = vsel %vm314, %v469, 0
      %485 = vmatprep.subr.bf16.mxu0 0
      %486 = vmatpush1.bf16.msra.mxu0 0
      %487 = vmatprep.subr.bf16.mxu0 0
      %488 = vmatpush1.bf16.msra.mxu0 0
      %489 = vmatprep.subr.bf16.mxu0 0
      %490 = vmatpush1.bf16.msra.mxu0 0
      %491 = vmatprep.subr.bf16.mxu0 0
      %492 = vmatpush1.bf16.msra.mxu0 0
      %493 = vmatprep.subr.bf16.mxu0 0
      %494 = vmatpush1.bf16.msra.mxu0 0
      %495 = vmatprep.subr.bf16.mxu0 0
      %496 = vmatpush1.bf16.msra.mxu0 0
      %497 = vmatprep.subr.bf16.mxu0 0
      %498 = vmatpush1.bf16.msra.mxu0 %v479
      %499 = vmatprep.subr.bf16.mxu0 0
      %500 = vmatpush1.bf16.msra.mxu0 %v478
      %501 = vmatprep.subr.bf16.mxu0 0
      %502 = vmatpush2.bf16.msra.mxu0 0
      %503 = vmatprep.subr.bf16.mxu0 0
      %504 = vmatpush2.bf16.msra.mxu0 0
      %505 = vmatprep.subr.bf16.mxu0 0
      %506 = vmatpush2.bf16.msra.mxu0 0
      %507 = vmatprep.subr.bf16.mxu0 0
      %508 = vmatpush2.bf16.msra.mxu0 0
      %509 = vmatprep.subr.bf16.mxu0 0
      %510 = vmatpush2.bf16.msra.mxu0 0
      %511 = vmatprep.subr.bf16.mxu0 0
      %512 = vmatpush2.bf16.msra.mxu0 0
      %513 = vmatprep.subr.bf16.mxu0 0
      %514 = vmatpush2.bf16.msra.mxu0 0
      %515 = vmatprep.subr.bf16.mxu0 0
      %516 = vmatpush2.bf16.msra.mxu0 0
      %517 = vmatprep.mubr.bf16.mxu0 0
      %518 = vmatmul.mubr.bf16.gmra.mxu0 %v483
      %v519 = vpop.f32.mrf.mxu0
      %v520 = vadd.f32 0.0, %v519
      %v521 = vpop.f32.mrf.mxu0
      %v522 = vpop.f32.mrf.mxu0
      %v523 = vpop.f32.mrf.mxu0
      %524 = vdwg.mxu0
      %v525 = vadd.f32 %v425, %v520
      %s526 = sadd.s32 %s220, 1
      %s527 = smul.addr %s526, 2
      %s528 = scalar_lea.vmem %s209, %s527
      %v529 = vld [vmem:[%s528] sm:$0x1]
      %v530 = vld [vmem:[%s528 + $0x2] sm:$0x1]
      %s531 = scalar_lea.vmem %s1, 48
      %v532 = vld [vmem:[%s531] sm:$0xf]
      %v533 = vld [vmem:[%s531 + $0x4] sm:$0xf]
      %v534 = vld [vmem:[%s531 + $0x8] sm:$0xf]
      %v535 = vld [vmem:[%s531 + $0xc] sm:$0xf]
      %v538 = vcombine.low %v529, %v530
      %v540 = vunpack.c.l.s4 1966171168
      %v541 = vunpack.c.0.s8 %v540
      %v542 = vlaneseq
      %v543 = vshrl.u32 %v542, 7
      %v544 = vsub.s32 %v541, %v543
      %v545 = vrot.slane %v538, %v544
      %v547 = vunpack.c.l.s4 1966171168
      %v548 = vunpack.c.0.s8 %v547
      %v549 = vlaneseq
      %v550 = vshrl.u32 %v549, 7
      %v551 = vsub.s32 %v548, %v550
      %v552 = vrot.slane %v545, %v551
      %v557 = vunpack.c.l.b16 %v532
      %v558 = vunpack.c.l.b16 %v533
      %v559 = vunpack.c.l.b16 %v534
      %v560 = vunpack.c.l.b16 %v535
      %v561 = vpack.c.b16 %v558, %v557
      %v562 = vpack.c.b16 %v560, %v559
      %v566 = vsel %vm314, %v552, 0
      %568 = vmatprep.subr.bf16.mxu0 0
      %569 = vmatpush1.bf16.msra.mxu0 0
      %570 = vmatprep.subr.bf16.mxu0 0
      %571 = vmatpush1.bf16.msra.mxu0 0
      %572 = vmatprep.subr.bf16.mxu0 0
      %573 = vmatpush1.bf16.msra.mxu0 0
      %574 = vmatprep.subr.bf16.mxu0 0
      %575 = vmatpush1.bf16.msra.mxu0 0
      %576 = vmatprep.subr.bf16.mxu0 0
      %577 = vmatpush1.bf16.msra.mxu0 0
      %578 = vmatprep.subr.bf16.mxu0 0
      %579 = vmatpush1.bf16.msra.mxu0 0
      %580 = vmatprep.subr.bf16.mxu0 0
      %581 = vmatpush1.bf16.msra.mxu0 %v562
      %582 = vmatprep.subr.bf16.mxu0 0
      %583 = vmatpush1.bf16.msra.mxu0 %v561
      %584 = vmatprep.subr.bf16.mxu0 0
      %585 = vmatpush2.bf16.msra.mxu0 0
      %586 = vmatprep.subr.bf16.mxu0 0
      %587 = vmatpush2.bf16.msra.mxu0 0
      %588 = vmatprep.subr.bf16.mxu0 0
      %589 = vmatpush2.bf16.msra.mxu0 0
      %590 = vmatprep.subr.bf16.mxu0 0
      %591 = vmatpush2.bf16.msra.mxu0 0
      %592 = vmatprep.subr.bf16.mxu0 0
      %593 = vmatpush2.bf16.msra.mxu0 0
      %594 = vmatprep.subr.bf16.mxu0 0
      %595 = vmatpush2.bf16.msra.mxu0 0
      %596 = vmatprep.subr.bf16.mxu0 0
      %597 = vmatpush2.bf16.msra.mxu0 0
      %598 = vmatprep.subr.bf16.mxu0 0
      %599 = vmatpush2.bf16.msra.mxu0 0
      %600 = vmatprep.mubr.bf16.mxu0 0
      %601 = vmatmul.mubr.bf16.gmra.mxu0 %v566
      %v602 = vpop.f32.mrf.mxu0
      %v603 = vadd.f32 0.0, %v602
      %v604 = vpop.f32.mrf.mxu0
      %v605 = vpop.f32.mrf.mxu0
      %v606 = vpop.f32.mrf.mxu0
      %607 = vdwg.mxu0
      %v608 = vadd.f32 %v525, %v603
      %v609 = vld [vmem:[%s528] sm:$0x3]
      %v610 = vld [vmem:[%s528 + $0x2] sm:$0x3]
      %v614 = vunpack.c.l.s4 1966171168
      %v615 = vunpack.c.0.s8 %v614
      %v616 = vlaneseq
      %v617 = vshrl.u32 %v616, 7
      %v618 = vsub.s32 %v615, %v617
      %v619 = vrot.slane %v609, %v618
      %v620 = vcombine.high %v619, %v619
      %v622 = vunpack.c.l.s4 1966171168
      %v623 = vunpack.c.0.s8 %v622
      %v624 = vlaneseq
      %v625 = vshrl.u32 %v624, 7
      %v626 = vsub.s32 %v623, %v625
      %v627 = vrot.slane %v610, %v626
      %v628 = vcombine.high %v627, %v627
      %v630 = vshrl.u32 %v619, 16
      %v632 = vrot.slane %v630, 7
      %v633 = vrot.slane %v632, 1
      %v635 = vshll.u32 %v620, 16
      %v637 = vsel %vm263, %v633, %v635
      %v639 = vshrl.u32 %v627, 16
      %v641 = vrot.slane %v639, 7
      %v642 = vrot.slane %v641, 1
      %v644 = vshll.u32 %v628, 16
      %v646 = vsel %vm263, %v642, %v644
      %s647 = scalar_lea.vmem %s1, 64
      %v648 = vld [vmem:[%s647] sm:$0xf]
      %v649 = vld [vmem:[%s647 + $0x4] sm:$0xf]
      %v650 = vld [vmem:[%s647 + $0x8] sm:$0xf]
      %v651 = vld [vmem:[%s647 + $0xc] sm:$0xf]
      %v652 = vcombine.low %v637, %v646
      %v654 = vunpack.c.l.s4 1966171168
      %v655 = vunpack.c.0.s8 %v654
      %v656 = vlaneseq
      %v657 = vshrl.u32 %v656, 7
      %v658 = vsub.s32 %v655, %v657
      %v659 = vrot.slane %v652, %v658
      %v661 = vunpack.c.l.s4 1966171168
      %v662 = vunpack.c.0.s8 %v661
      %v663 = vlaneseq
      %v664 = vshrl.u32 %v663, 7
      %v665 = vsub.s32 %v662, %v664
      %v666 = vrot.slane %v659, %v665
      %v671 = vunpack.c.l.b16 %v648
      %v672 = vunpack.c.l.b16 %v649
      %v673 = vunpack.c.l.b16 %v650
      %v674 = vunpack.c.l.b16 %v651
      %v675 = vpack.c.b16 %v672, %v671
      %v676 = vpack.c.b16 %v674, %v673
      %v680 = vsel %vm314, %v666, 0
      %682 = vmatprep.subr.bf16.mxu0 0
      %683 = vmatpush1.bf16.msra.mxu0 0
      %684 = vmatprep.subr.bf16.mxu0 0
      %685 = vmatpush1.bf16.msra.mxu0 0
      %686 = vmatprep.subr.bf16.mxu0 0
      %687 = vmatpush1.bf16.msra.mxu0 0
      %688 = vmatprep.subr.bf16.mxu0 0
      %689 = vmatpush1.bf16.msra.mxu0 0
      %690 = vmatprep.subr.bf16.mxu0 0
      %691 = vmatpush1.bf16.msra.mxu0 0
      %692 = vmatprep.subr.bf16.mxu0 0
      %693 = vmatpush1.bf16.msra.mxu0 0
      %694 = vmatprep.subr.bf16.mxu0 0
      %695 = vmatpush1.bf16.msra.mxu0 %v676
      %696 = vmatprep.subr.bf16.mxu0 0
      %697 = vmatpush1.bf16.msra.mxu0 %v675
      %698 = vmatprep.subr.bf16.mxu0 0
      %699 = vmatpush2.bf16.msra.mxu0 0
      %700 = vmatprep.subr.bf16.mxu0 0
      %701 = vmatpush2.bf16.msra.mxu0 0
      %702 = vmatprep.subr.bf16.mxu0 0
      %703 = vmatpush2.bf16.msra.mxu0 0
      %704 = vmatprep.subr.bf16.mxu0 0
      %705 = vmatpush2.bf16.msra.mxu0 0
      %706 = vmatprep.subr.bf16.mxu0 0
      %707 = vmatpush2.bf16.msra.mxu0 0
      %708 = vmatprep.subr.bf16.mxu0 0
      %709 = vmatpush2.bf16.msra.mxu0 0
      %710 = vmatprep.subr.bf16.mxu0 0
      %711 = vmatpush2.bf16.msra.mxu0 0
      %712 = vmatprep.subr.bf16.mxu0 0
      %713 = vmatpush2.bf16.msra.mxu0 0
      %714 = vmatprep.mubr.bf16.mxu0 0
      %715 = vmatmul.mubr.bf16.gmra.mxu0 %v680
      %v716 = vpop.f32.mrf.mxu0
      %v717 = vadd.f32 0.0, %v716
      %v718 = vpop.f32.mrf.mxu0
      %v719 = vpop.f32.mrf.mxu0
      %v720 = vpop.f32.mrf.mxu0
      %721 = vdwg.mxu0
      %v722 = vadd.f32 %v608, %v717
      %v723 = vld [vmem:[%s528] sm:$0x2]
      %v724 = vld [vmem:[%s528 + $0x2] sm:$0x2]
      %v728 = vunpack.c.l.s4 1966171168
      %v729 = vunpack.c.0.s8 %v728
      %v730 = vlaneseq
      %v731 = vshrl.u32 %v730, 7
      %v732 = vsub.s32 %v729, %v731
      %v733 = vrot.slane %v723, %v732
      %v734 = vcombine.high %v733, %v733
      %v736 = vunpack.c.l.s4 1966171168
      %v737 = vunpack.c.0.s8 %v736
      %v738 = vlaneseq
      %v739 = vshrl.u32 %v738, 7
      %v740 = vsub.s32 %v737, %v739
      %v741 = vrot.slane %v724, %v740
      %v742 = vcombine.high %v741, %v741
      %s743 = scalar_lea.vmem %s1, 80
      %v744 = vld [vmem:[%s743] sm:$0xf]
      %v745 = vld [vmem:[%s743 + $0x4] sm:$0xf]
      %v746 = vld [vmem:[%s743 + $0x8] sm:$0xf]
      %v747 = vld [vmem:[%s743 + $0xc] sm:$0xf]
      %v748 = vcombine.low %v734, %v742
      %v750 = vunpack.c.l.s4 1966171168
      %v751 = vunpack.c.0.s8 %v750
      %v752 = vlaneseq
      %v753 = vshrl.u32 %v752, 7
      %v754 = vsub.s32 %v751, %v753
      %v755 = vrot.slane %v748, %v754
      %v757 = vunpack.c.l.s4 1966171168
      %v758 = vunpack.c.0.s8 %v757
      %v759 = vlaneseq
      %v760 = vshrl.u32 %v759, 7
      %v761 = vsub.s32 %v758, %v760
      %v762 = vrot.slane %v755, %v761
      %v767 = vunpack.c.l.b16 %v744
      %v768 = vunpack.c.l.b16 %v745
      %v769 = vunpack.c.l.b16 %v746
      %v770 = vunpack.c.l.b16 %v747
      %v771 = vpack.c.b16 %v768, %v767
      %v772 = vpack.c.b16 %v770, %v769
      %v776 = vsel %vm314, %v762, 0
      %778 = vmatprep.subr.bf16.mxu0 0
      %779 = vmatpush1.bf16.msra.mxu0 0
      %780 = vmatprep.subr.bf16.mxu0 0
      %781 = vmatpush1.bf16.msra.mxu0 0
      %782 = vmatprep.subr.bf16.mxu0 0
      %783 = vmatpush1.bf16.msra.mxu0 0
      %784 = vmatprep.subr.bf16.mxu0 0
      %785 = vmatpush1.bf16.msra.mxu0 0
      %786 = vmatprep.subr.bf16.mxu0 0
      %787 = vmatpush1.bf16.msra.mxu0 0
      %788 = vmatprep.subr.bf16.mxu0 0
      %789 = vmatpush1.bf16.msra.mxu0 0
      %790 = vmatprep.subr.bf16.mxu0 0
      %791 = vmatpush1.bf16.msra.mxu0 %v772
      %792 = vmatprep.subr.bf16.mxu0 0
      %793 = vmatpush1.bf16.msra.mxu0 %v771
      %794 = vmatprep.subr.bf16.mxu0 0
      %795 = vmatpush2.bf16.msra.mxu0 0
      %796 = vmatprep.subr.bf16.mxu0 0
      %797 = vmatpush2.bf16.msra.mxu0 0
      %798 = vmatprep.subr.bf16.mxu0 0
      %799 = vmatpush2.bf16.msra.mxu0 0
      %800 = vmatprep.subr.bf16.mxu0 0
      %801 = vmatpush2.bf16.msra.mxu0 0
      %802 = vmatprep.subr.bf16.mxu0 0
      %803 = vmatpush2.bf16.msra.mxu0 0
      %804 = vmatprep.subr.bf16.mxu0 0
      %805 = vmatpush2.bf16.msra.mxu0 0
      %806 = vmatprep.subr.bf16.mxu0 0
      %807 = vmatpush2.bf16.msra.mxu0 0
      %808 = vmatprep.subr.bf16.mxu0 0
      %809 = vmatpush2.bf16.msra.mxu0 0
      %810 = vmatprep.mubr.bf16.mxu0 0
      %811 = vmatmul.mubr.bf16.gmra.mxu0 %v776
      %v812 = vpop.f32.mrf.mxu0
      %v813 = vadd.f32 0.0, %v812
      %v814 = vpop.f32.mrf.mxu0
      %v815 = vpop.f32.mrf.mxu0
      %v816 = vpop.f32.mrf.mxu0
      %817 = vdwg.mxu0
      %v818 = vadd.f32 %v722, %v813
      %s819 = sadd.s32 %s220, 2
      %s820 = smul.addr %s819, 2
      %s821 = scalar_lea.vmem %s209, %s820
      %v822 = vld [vmem:[%s821] sm:$0x1]
      %v823 = vld [vmem:[%s821 + $0x2] sm:$0x1]
      %s824 = scalar_lea.vmem %s1, 96
      %v825 = vld [vmem:[%s824] sm:$0xf]
      %v826 = vld [vmem:[%s824 + $0x4] sm:$0xf]
      %v827 = vld [vmem:[%s824 + $0x8] sm:$0xf]
      %v828 = vld [vmem:[%s824 + $0xc] sm:$0xf]
      %v831 = vcombine.low %v822, %v823
      %v833 = vunpack.c.l.s4 1966171168
      %v834 = vunpack.c.0.s8 %v833
      %v835 = vlaneseq
      %v836 = vshrl.u32 %v835, 7
      %v837 = vsub.s32 %v834, %v836
      %v838 = vrot.slane %v831, %v837
      %v840 = vunpack.c.l.s4 1966171168
      %v841 = vunpack.c.0.s8 %v840
      %v842 = vlaneseq
      %v843 = vshrl.u32 %v842, 7
      %v844 = vsub.s32 %v841, %v843
      %v845 = vrot.slane %v838, %v844
      %v850 = vunpack.c.l.b16 %v825
      %v851 = vunpack.c.l.b16 %v826
      %v852 = vunpack.c.l.b16 %v827
      %v853 = vunpack.c.l.b16 %v828
      %v854 = vpack.c.b16 %v851, %v850
      %v855 = vpack.c.b16 %v853, %v852
      %v859 = vsel %vm314, %v845, 0
      %861 = vmatprep.subr.bf16.mxu0 0
      %862 = vmatpush1.bf16.msra.mxu0 0
      %863 = vmatprep.subr.bf16.mxu0 0
      %864 = vmatpush1.bf16.msra.mxu0 0
      %865 = vmatprep.subr.bf16.mxu0 0
      %866 = vmatpush1.bf16.msra.mxu0 0
      %867 = vmatprep.subr.bf16.mxu0 0
      %868 = vmatpush1.bf16.msra.mxu0 0
      %869 = vmatprep.subr.bf16.mxu0 0
      %870 = vmatpush1.bf16.msra.mxu0 0
      %871 = vmatprep.subr.bf16.mxu0 0
      %872 = vmatpush1.bf16.msra.mxu0 0
      %873 = vmatprep.subr.bf16.mxu0 0
      %874 = vmatpush1.bf16.msra.mxu0 %v855
      %875 = vmatprep.subr.bf16.mxu0 0
      %876 = vmatpush1.bf16.msra.mxu0 %v854
      %877 = vmatprep.subr.bf16.mxu0 0
      %878 = vmatpush2.bf16.msra.mxu0 0
      %879 = vmatprep.subr.bf16.mxu0 0
      %880 = vmatpush2.bf16.msra.mxu0 0
      %881 = vmatprep.subr.bf16.mxu0 0
      %882 = vmatpush2.bf16.msra.mxu0 0
      %883 = vmatprep.subr.bf16.mxu0 0
      %884 = vmatpush2.bf16.msra.mxu0 0
      %885 = vmatprep.subr.bf16.mxu0 0
      %886 = vmatpush2.bf16.msra.mxu0 0
      %887 = vmatprep.subr.bf16.mxu0 0
      %888 = vmatpush2.bf16.msra.mxu0 0
      %889 = vmatprep.subr.bf16.mxu0 0
      %890 = vmatpush2.bf16.msra.mxu0 0
      %891 = vmatprep.subr.bf16.mxu0 0
      %892 = vmatpush2.bf16.msra.mxu0 0
      %893 = vmatprep.mubr.bf16.mxu0 0
      %894 = vmatmul.mubr.bf16.gmra.mxu0 %v859
      %v895 = vpop.f32.mrf.mxu0
      %v896 = vadd.f32 0.0, %v895
      %v897 = vpop.f32.mrf.mxu0
      %v898 = vpop.f32.mrf.mxu0
      %v899 = vpop.f32.mrf.mxu0
      %900 = vdwg.mxu0
      %v901 = vadd.f32 %v818, %v896
      %v902 = vld [vmem:[%s821] sm:$0x3]
      %v903 = vld [vmem:[%s821 + $0x2] sm:$0x3]
      %v907 = vunpack.c.l.s4 1966171168
      %v908 = vunpack.c.0.s8 %v907
      %v909 = vlaneseq
      %v910 = vshrl.u32 %v909, 7
      %v911 = vsub.s32 %v908, %v910
      %v912 = vrot.slane %v902, %v911
      %v913 = vcombine.high %v912, %v912
      %v915 = vunpack.c.l.s4 1966171168
      %v916 = vunpack.c.0.s8 %v915
      %v917 = vlaneseq
      %v918 = vshrl.u32 %v917, 7
      %v919 = vsub.s32 %v916, %v918
      %v920 = vrot.slane %v903, %v919
      %v921 = vcombine.high %v920, %v920
      %v923 = vshrl.u32 %v912, 16
      %v925 = vrot.slane %v923, 7
      %v926 = vrot.slane %v925, 1
      %v928 = vshll.u32 %v913, 16
      %v930 = vsel %vm263, %v926, %v928
      %v932 = vshrl.u32 %v920, 16
      %v934 = vrot.slane %v932, 7
      %v935 = vrot.slane %v934, 1
      %v937 = vshll.u32 %v921, 16
      %v939 = vsel %vm263, %v935, %v937
      %s940 = scalar_lea.vmem %s1, 112
      %v941 = vld [vmem:[%s940] sm:$0xf]
      %v942 = vld [vmem:[%s940 + $0x4] sm:$0xf]
      %v943 = vld [vmem:[%s940 + $0x8] sm:$0xf]
      %v944 = vld [vmem:[%s940 + $0xc] sm:$0xf]
      %v945 = vcombine.low %v930, %v939
      %v947 = vunpack.c.l.s4 1966171168
      %v948 = vunpack.c.0.s8 %v947
      %v949 = vlaneseq
      %v950 = vshrl.u32 %v949, 7
      %v951 = vsub.s32 %v948, %v950
      %v952 = vrot.slane %v945, %v951
      %v954 = vunpack.c.l.s4 1966171168
      %v955 = vunpack.c.0.s8 %v954
      %v956 = vlaneseq
      %v957 = vshrl.u32 %v956, 7
      %v958 = vsub.s32 %v955, %v957
      %v959 = vrot.slane %v952, %v958
      %v964 = vunpack.c.l.b16 %v941
      %v965 = vunpack.c.l.b16 %v942
      %v966 = vunpack.c.l.b16 %v943
      %v967 = vunpack.c.l.b16 %v944
      %v968 = vpack.c.b16 %v965, %v964
      %v969 = vpack.c.b16 %v967, %v966
      %v973 = vsel %vm314, %v959, 0
      %975 = vmatprep.subr.bf16.mxu0 0
      %976 = vmatpush1.bf16.msra.mxu0 0
      %977 = vmatprep.subr.bf16.mxu0 0
      %978 = vmatpush1.bf16.msra.mxu0 0
      %979 = vmatprep.subr.bf16.mxu0 0
      %980 = vmatpush1.bf16.msra.mxu0 0
      %981 = vmatprep.subr.bf16.mxu0 0
      %982 = vmatpush1.bf16.msra.mxu0 0
      %983 = vmatprep.subr.bf16.mxu0 0
      %984 = vmatpush1.bf16.msra.mxu0 0
      %985 = vmatprep.subr.bf16.mxu0 0
      %986 = vmatpush1.bf16.msra.mxu0 0
      %987 = vmatprep.subr.bf16.mxu0 0
      %988 = vmatpush1.bf16.msra.mxu0 %v969
      %989 = vmatprep.subr.bf16.mxu0 0
      %990 = vmatpush1.bf16.msra.mxu0 %v968
      %991 = vmatprep.subr.bf16.mxu0 0
      %992 = vmatpush2.bf16.msra.mxu0 0
      %993 = vmatprep.subr.bf16.mxu0 0
      %994 = vmatpush2.bf16.msra.mxu0 0
      %995 = vmatprep.subr.bf16.mxu0 0
      %996 = vmatpush2.bf16.msra.mxu0 0
      %997 = vmatprep.subr.bf16.mxu0 0
      %998 = vmatpush2.bf16.msra.mxu0 0
      %999 = vmatprep.subr.bf16.mxu0 0
      %1000 = vmatpush2.bf16.msra.mxu0 0
      %1001 = vmatprep.subr.bf16.mxu0 0
      %1002 = vmatpush2.bf16.msra.mxu0 0
      %1003 = vmatprep.subr.bf16.mxu0 0
      %1004 = vmatpush2.bf16.msra.mxu0 0
      %1005 = vmatprep.subr.bf16.mxu0 0
      %1006 = vmatpush2.bf16.msra.mxu0 0
      %1007 = vmatprep.mubr.bf16.mxu0 0
      %1008 = vmatmul.mubr.bf16.gmra.mxu0 %v973
      %v1009 = vpop.f32.mrf.mxu0
      %v1010 = vadd.f32 0.0, %v1009
      %v1011 = vpop.f32.mrf.mxu0
      %v1012 = vpop.f32.mrf.mxu0
      %v1013 = vpop.f32.mrf.mxu0
      %1014 = vdwg.mxu0
      %v1015 = vadd.f32 %v901, %v1010
      %v1016 = vld [vmem:[%s821] sm:$0x2]
      %v1017 = vld [vmem:[%s821 + $0x2] sm:$0x2]
      %v1021 = vunpack.c.l.s4 1966171168
      %v1022 = vunpack.c.0.s8 %v1021
      %v1023 = vlaneseq
      %v1024 = vshrl.u32 %v1023, 7
      %v1025 = vsub.s32 %v1022, %v1024
      %v1026 = vrot.slane %v1016, %v1025
      %v1027 = vcombine.high %v1026, %v1026
      %v1029 = vunpack.c.l.s4 1966171168
      %v1030 = vunpack.c.0.s8 %v1029
      %v1031 = vlaneseq
      %v1032 = vshrl.u32 %v1031, 7
      %v1033 = vsub.s32 %v1030, %v1032
      %v1034 = vrot.slane %v1017, %v1033
      %v1035 = vcombine.high %v1034, %v1034
      %s1036 = scalar_lea.vmem %s1, 128
      %v1037 = vld [vmem:[%s1036] sm:$0xf]
      %v1038 = vld [vmem:[%s1036 + $0x4] sm:$0xf]
      %v1039 = vld [vmem:[%s1036 + $0x8] sm:$0xf]
      %v1040 = vld [vmem:[%s1036 + $0xc] sm:$0xf]
      %v1041 = vcombine.low %v1027, %v1035
      %v1043 = vunpack.c.l.s4 1966171168
      %v1044 = vunpack.c.0.s8 %v1043
      %v1045 = vlaneseq
      %v1046 = vshrl.u32 %v1045, 7
      %v1047 = vsub.s32 %v1044, %v1046
      %v1048 = vrot.slane %v1041, %v1047
      %v1050 = vunpack.c.l.s4 1966171168
      %v1051 = vunpack.c.0.s8 %v1050
      %v1052 = vlaneseq
      %v1053 = vshrl.u32 %v1052, 7
      %v1054 = vsub.s32 %v1051, %v1053
      %v1055 = vrot.slane %v1048, %v1054
      %v1060 = vunpack.c.l.b16 %v1037
      %v1061 = vunpack.c.l.b16 %v1038
      %v1062 = vunpack.c.l.b16 %v1039
      %v1063 = vunpack.c.l.b16 %v1040
      %v1064 = vpack.c.b16 %v1061, %v1060
      %v1065 = vpack.c.b16 %v1063, %v1062
      %v1069 = vsel %vm314, %v1055, 0
      %1071 = vmatprep.subr.bf16.mxu0 0
      %1072 = vmatpush1.bf16.msra.mxu0 0
      %1073 = vmatprep.subr.bf16.mxu0 0
      %1074 = vmatpush1.bf16.msra.mxu0 0
      %1075 = vmatprep.subr.bf16.mxu0 0
      %1076 = vmatpush1.bf16.msra.mxu0 0
      %1077 = vmatprep.subr.bf16.mxu0 0
      %1078 = vmatpush1.bf16.msra.mxu0 0
      %1079 = vmatprep.subr.bf16.mxu0 0
      %1080 = vmatpush1.bf16.msra.mxu0 0
      %1081 = vmatprep.subr.bf16.mxu0 0
      %1082 = vmatpush1.bf16.msra.mxu0 0
      %1083 = vmatprep.subr.bf16.mxu0 0
      %1084 = vmatpush1.bf16.msra.mxu0 %v1065
      %1085 = vmatprep.subr.bf16.mxu0 0
      %1086 = vmatpush1.bf16.msra.mxu0 %v1064
      %1087 = vmatprep.subr.bf16.mxu0 0
      %1088 = vmatpush2.bf16.msra.mxu0 0
      %1089 = vmatprep.subr.bf16.mxu0 0
      %1090 = vmatpush2.bf16.msra.mxu0 0
      %1091 = vmatprep.subr.bf16.mxu0 0
      %1092 = vmatpush2.bf16.msra.mxu0 0
      %1093 = vmatprep.subr.bf16.mxu0 0
      %1094 = vmatpush2.bf16.msra.mxu0 0
      %1095 = vmatprep.subr.bf16.mxu0 0
      %1096 = vmatpush2.bf16.msra.mxu0 0
      %1097 = vmatprep.subr.bf16.mxu0 0
      %1098 = vmatpush2.bf16.msra.mxu0 0
      %1099 = vmatprep.subr.bf16.mxu0 0
      %1100 = vmatpush2.bf16.msra.mxu0 0
      %1101 = vmatprep.subr.bf16.mxu0 0
      %1102 = vmatpush2.bf16.msra.mxu0 0
      %1103 = vmatprep.mubr.bf16.mxu0 0
      %1104 = vmatmul.mubr.bf16.gmra.mxu0 %v1069
      %v1105 = vpop.f32.mrf.mxu0
      %v1106 = vadd.f32 0.0, %v1105
      %v1107 = vpop.f32.mrf.mxu0
      %v1108 = vpop.f32.mrf.mxu0
      %v1109 = vpop.f32.mrf.mxu0
      %1110 = vdwg.mxu0
      %v1111 = vadd.f32 %v1015, %v1106
      %v1112 = vld [vmem:[%s2] sm:$0x1]
      %v1114 = vlaneseq
      %v1115 = vshrl.u32 %v1114, 7
      %v1116 = vsub.s32 0, %v1115
      %v1117 = vrot.slane %v1112, %v1116
      %v1119 = vadd.f32 %v1111, %v1117
      %vm1120 = vcmp.ge.f32.partialorder %v1119, 0.0
      %v1121 = vld [vmem:[%s3] sm:$0x1]
      %v1123 = vlaneseq
      %v1124 = vshrl.u32 %v1123, 7
      %v1125 = vsub.s32 0, %v1124
      %v1126 = vrot.slane %v1121, %v1125
      %v1128 = vmul.f32 %v1126, %v1119
      %v1129 = vsel %vm1120, %v1119, %v1128
      %v1132 = vunpack.c.l.s4 1983009808
      %v1133 = vunpack.c.0.s8 %v1132
      %v1134 = vlaneseq
      %v1135 = vshrl.u32 %v1134, 7
      %v1136 = vsub.s32 %v1133, %v1135
      %v1137 = vrot.slane %v1129, %v1136
      %v1138 = vcombine.high %v1137, %v1137
      %v1141 = vpack.c.bf16 %v1137, %v1137
      %v1142 = vpack.c.bf16 %v1138, %v1138
      %1143 = vst [vmem:[%s217] sm:$0x1] %v1141
      %1144 = vst [vmem:[%s217 + $0x1] sm:$0x1] %v1142
      %s1145 = smul.u32 2, %s20
      %p1146 = scmp.lt.s32.totalorder %s19, 1
      %s1147 = scalar_select %p1146, %s19, 1
      %p1148 = scmp.lt.s32.totalorder %s1145, 1
      %s1149 = scalar_select %p1148, %s1145, 1
      %s1150 = smul.addr %s1147, 2
      %s1151 = sadd.s32 %s1149, %s1150
      %s1152 = scalar_lea.vmem %s4, %s1151
      // Predicated region
      $region37: #{_lambda_.22} parent=35 // pred_check
        %p1153 = pneg %p136
      $region38: #{_lambda_.22} parent=35 // pred_check_branch
        %1155 = sbr.rel (%p1153) target = $region40
      $region39: #{_lambda_.22} parent=35 // pred_region
        %s1156 = smul.u32 2, %s20
      $region40: #{_lambda_.22} parent=35 // pred_fallthru
        _
    $region36: #{_lambda_.22} parent=5 // pred_fallthru
      _
    %p1157 = scmp.le.s32.totalorder 2, %s10
    // Predicated region
    $region41: #{_lambda_.22} parent=5 // pred_check
      %p1158 = pneg %p1157
    $region42: #{_lambda_.22} parent=5 // pred_check_branch
      %1160 = sbr.rel (%p1158) target = $region44
    $region43: #{_lambda_.22} parent=5 // pred_region
      %s1161 = ssub.s32 %s10, 2
      // Predicated region
      $region45: #{_lambda_.22} parent=43 // pred_check
        %p1162 = pneg %p142
      $region46: #{_lambda_.22} parent=43 // pred_check_branch
        %1164 = sbr.rel (%p1162) target = $region48
      $region47: #{_lambda_.22} parent=43 // pred_region
        %s1165 = smul.u32 2, %s22
        %p1166 = scmp.lt.s32.totalorder %s21, 1
        %s1167 = scalar_select %p1166, %s21, 1
        %p1168 = scmp.lt.s32.totalorder %s1165, 1
        %s1169 = scalar_select %p1168, %s1165, 1
        %s1170 = smul.addr %s1167, 2
        %s1171 = sadd.s32 %s1169, %s1170
        %s1172 = scalar_lea.vmem %s4, %s1171
      $region48: #{_lambda_.22} parent=43 // pred_fallthru
        _
    $region44: #{_lambda_.22} parent=5 // pred_fallthru
      _
  $region6: #{_lambda_.22} parent=0 // loop_footer
    %s14 = sadd.s32 1, %s10
  $region7: #{_lambda_.22} parent=0 // loop_footer_branch
    %9 = sbr.rel target = $region3
  $region8: #{_lambda_.22} parent=0 // loop_exit
    _

// kernel: tile.28
$region0: #{tile.28}
  #allocation0 [shape = 's32[1]{0}', space=sflag, size = 0x4, scoped, tag = 'scoped memory for tile.28']
  %s0 = inlined_call_operand.vmem [shape: f32[5], index: 0, kind: input, shape index: {}]
  %s1 = inlined_call_operand.vmem [shape: f32[4,5], index: 1, kind: output, shape index: {}]
  // Predicated region
  $region2: #{tile.28} parent=0 // pred_check
    _
  $region3: #{tile.28} parent=0 // pred_check_branch
    %3 = sbr.rel (0) target = $region5
  $region4: #{tile.28} parent=0 // pred_region
    _
  $region5: #{tile.28} parent=0 // pred_fallthru
    _
  %v4 = vld [vmem:[%s0] ss:$0 sm:$0xff]
  %5 = vst [vmem:[%s1] sm:$0xf] %v4

// kernel: tile.29
$region0: #{tile.29}
  %s0 = inlined_call_operand.vmem [shape: f32[4,5], index: 0, kind: input, shape index: {}]
  %s1 = inlined_call_operand.vmem [shape: f32[1,20], index: 1, kind: output, shape index: {}]
  $region1: #{tile.29} parent=0
    #allocation0 [shape = 'u8[4096]{0}', space=vmem, size = 0x1000, scoped, tag = 'scoped mem for output reshape']
    #allocation1 [shape = 'u8[4096]{0}', space=vmem, size = 0x1000, scoped, tag = 'scoped mem for input reshape']
    %s3 = sshll.u32 1, 4
    %s4 = ssub.s32 %s3, 1
    %v5 = vld [vmem:[%s0] sm:%s4]
    %6 = vst [vmem:[#allocation1] sm:%s4] %v5
    %v7 = vld [vmem:[#allocation1] sm:$0x1]
    %vm8 = vcmask 39936
    %9 = vst.msk [vmem:[#allocation0] sm:$0x1] %vm8, %v7
    %s10 = scalar_lea.vmem [#allocation1], 3
    %v11 = vld [vmem:[%s10] sm:$0x1]
    %12 = vrot.lane.b32.xlu0 %v11, 15
    %v13 = vpop.permute.xlu0 %12
    %vm14 = vcmask 162936
    %15 = vst.msk [vmem:[#allocation0] sm:$0x1] %vm14, %v13
    %s16 = scalar_lea.vmem [#allocation1], 2
    %v17 = vld [vmem:[%s16] sm:$0x1]
    %18 = vrot.lane.b32.xlu0 %v17, 10
    %v19 = vpop.permute.xlu0 %18
    %vm20 = vcmask 121936
    %21 = vst.msk [vmem:[#allocation0] sm:$0x1] %vm20, %v19
    %s22 = scalar_lea.vmem [#allocation1], 1
    %v23 = vld [vmem:[%s22] sm:$0x1]
    %24 = vrot.lane.b32.xlu0 %v23, 5
    %v25 = vpop.permute.xlu0 %24
    %vm26 = vcmask 80936
    %27 = vst.msk [vmem:[#allocation0] sm:$0x1] %vm26, %v25
    %s29 = sshll.u32 1, 1
    %s30 = ssub.s32 %s29, 1
    %v32 = vld [vmem:[#allocation0] sm:%s30]
    %s33 = sshll.u32 1, 1
    %s34 = ssub.s32 %s33, 1
    %35 = vst [vmem:[%s1] sm:%s34] %v32

// kernel: _lambda_.23
$region0: #{_lambda_.23}
  #allocation0 [shape = 'u32[]', space=smem, size = 0x4, offset = 0x4, fixed_abs, tag = 'smem constant byte address 0x4 - core index']
  #allocation1 [shape = 'u32[144,128]{1,0:T(1,128)}', space=vmem, size = 0x12000, scoped, tag = 'internal scratch']
  %s0 = inlined_call_operand.vmem [shape: bf16[2,6,6,32], index: 0, kind: input, shape index: {}]
  %s1 = inlined_call_operand.vmem [shape: bf16[9,32,20], index: 1, kind: input, shape index: {}]
  %s2 = inlined_call_operand.vmem [shape: f32[1,20], index: 2, kind: input, shape index: {}]
  %s3 = inlined_call_operand.vmem [shape: bf16[2,4,4,20], index: 3, kind: output, shape index: {}]
  %s4 = sld [smem:[#allocation0]]
  $region45: #{_lambda_.23} parent=0
    _
  %s6 = ssub.s32 1, %s4
  %s7 = scalar_select 0, %s6, %s4
  loop: start=0, step=1, limit=4
  $region2: #{_lambda_.23} parent=0 // loop_pre_header
    _
  $region3: #{_lambda_.23} parent=0 // loop_header
    %s9 = sphi 0, %s13
    %p10 = scmp.ge.s32.totalorder %s9, 4
    %s16 = sphi 0, %s28
    %s17 = sphi 0, %s24
    %s18 = sphi 0, %s16
    %s19 = sphi 0, %s17
    %s20 = sphi 0, %s18
    %s21 = sphi 0, %s19
    %s31 = sphi 0, %s33
    %s34 = sphi 0, %s31
    %s35 = sphi 0, %s34
    %s51 = sphi 0, %s35
    %s55 = sphi 0, %s55
    %s57 = sphi 0, %s55
    %s58 = sphi 0, %s57
    %s72 = sphi 0, %s58
    %s76 = sphi 0, %s76
    %s78 = sphi 0, %s76
    %s79 = sphi 0, %s78
    %s93 = sphi 0, %s79
    %s101 = sphi 0, %s103
    %s104 = sphi 0, %s101
    %s105 = sphi 0, %s104
    %s121 = sphi 0, %s105
  $region4: #{_lambda_.23} parent=0 // loop_header_branch
    %12 = sbr.rel (%p10) target = $region8
  $region5: #{_lambda_.23} parent=0 // loop_body
    %s14 = ssub.s32 %s9, 1
    %s15 = ssub.s32 %s9, 2
    %s22 = sadd.s32 1, %s17
    %p23 = scmp.ge.s32.totalorder %s22, 1
    %s24 = scalar_select %p23, 0, %s22
    %s25 = sadd.s32 1, %s16
    %s26 = scalar_select %p23, %s25, %s16
    %p27 = scmp.ge.s32.totalorder %s26, 2
    %s28 = scalar_select %p27, 0, %s26
    %s29 = ssub.s32 %s16, %s28
    %p30 = scmp.eq.s32.totalorder %s29, 0
    %s32 = sadd.s32 %s31, 1
    %s33 = scalar_select %p30, %s31, %s32
    %p36 = pneg %p30
    %p37 = scmp.eq.s32.totalorder %s9, 1
    %p38 = por %p36, %p37
    %p39 = scmp.ne.s32.totalorder %s31, %s34
    %p40 = scmp.eq.s32.totalorder %s9, 0
    %p41 = por %p39, %p40
    %p42 = scmp.ne.s32.totalorder %s31, %s34
    %p43 = scmp.eq.s32.totalorder %s14, 1
    %p44 = por %p42, %p43
    %p45 = scmp.ne.s32.totalorder %s34, %s35
    %p46 = scmp.eq.s32.totalorder %s14, 0
    %p47 = por %p45, %p46
    %p48 = scmp.ne.s32.totalorder %s34, %s35
    %p49 = scmp.eq.s32.totalorder %s15, 1
    %p50 = por %p48, %p49
    %p52 = scmp.ne.s32.totalorder %s35, %s51
    %p53 = scmp.eq.s32.totalorder %s15, 0
    %p54 = por %p52, %p53
    %s56 = sadd.s32 %s55, 1
    %p59 = scmp.eq.s32.totalorder %s9, 1
    %p60 = scmp.ne.s32.totalorder %s55, %s57
    %p61 = scmp.eq.s32.totalorder %s9, 0
    %p62 = por %p60, %p61
    %p63 = scmp.ne.s32.totalorder %s55, %s57
    %p64 = scmp.eq.s32.totalorder %s14, 1
    %p65 = por %p63, %p64
    %p66 = scmp.ne.s32.totalorder %s57, %s58
    %p67 = scmp.eq.s32.totalorder %s14, 0
    %p68 = por %p66, %p67
    %p69 = scmp.ne.s32.totalorder %s57, %s58
    %p70 = scmp.eq.s32.totalorder %s15, 1
    %p71 = por %p69, %p70
    %p73 = scmp.ne.s32.totalorder %s58, %s72
    %p74 = scmp.eq.s32.totalorder %s15, 0
    %p75 = por %p73, %p74
    %s77 = sadd.s32 %s76, 1
    %p80 = scmp.eq.s32.totalorder %s9, 1
    %p81 = scmp.ne.s32.totalorder %s76, %s78
    %p82 = scmp.eq.s32.totalorder %s9, 0
    %p83 = por %p81, %p82
    %p84 = scmp.ne.s32.totalorder %s76, %s78
    %p85 = scmp.eq.s32.totalorder %s14, 1
    %p86 = por %p84, %p85
    %p87 = scmp.ne.s32.totalorder %s78, %s79
    %p88 = scmp.eq.s32.totalorder %s14, 0
    %p89 = por %p87, %p88
    %p90 = scmp.ne.s32.totalorder %s78, %s79
    %p91 = scmp.eq.s32.totalorder %s15, 1
    %p92 = por %p90, %p91
    %p94 = scmp.ne.s32.totalorder %s79, %s93
    %p95 = scmp.eq.s32.totalorder %s15, 0
    %p96 = por %p94, %p95
    %s97 = ssub.s32 %s16, %s28
    %s98 = ssub.s32 %s17, %s24
    %s99 = sor.u32 %s97, %s98
    %p100 = scmp.eq.s32.totalorder %s99, 0
    %s102 = sadd.s32 %s101, 1
    %s103 = scalar_select %p100, %s101, %s102
    %p106 = pneg %p100
    %p107 = scmp.eq.s32.totalorder %s9, 1
    %p108 = por %p106, %p107
    %p109 = scmp.ne.s32.totalorder %s101, %s104
    %p110 = scmp.eq.s32.totalorder %s9, 0
    %p111 = por %p109, %p110
    %p112 = scmp.ne.s32.totalorder %s101, %s104
    %p113 = scmp.eq.s32.totalorder %s14, 1
    %p114 = por %p112, %p113
    %p115 = scmp.ne.s32.totalorder %s104, %s105
    %p116 = scmp.eq.s32.totalorder %s14, 0
    %p117 = por %p115, %p116
    %p118 = scmp.ne.s32.totalorder %s104, %s105
    %p119 = scmp.eq.s32.totalorder %s15, 1
    %p120 = por %p118, %p119
    %p122 = scmp.ne.s32.totalorder %s105, %s121
    %p123 = scmp.eq.s32.totalorder %s15, 0
    %p124 = por %p122, %p123
    %p125 = scmp.le.s32.totalorder 1, %s9
    %p126 = scmp.lt.s32.totalorder %s9, 3
    %p127 = pnand %p125, %p126
    %p128 = pneg %p127
    // Predicated region
    $region9: #{_lambda_.23} parent=5 // pred_check
      _
    $region10: #{_lambda_.23} parent=5 // pred_check_branch
      %130 = sbr.rel (%p127) target = $region12
    $region11: #{_lambda_.23} parent=5 // pred_region
      %s131 = ssub.s32 %s9, 1
      // Predicated region
      $region13: #{_lambda_.23} parent=11 // pred_check
        %p132 = pneg %p68
      $region14: #{_lambda_.23} parent=11 // pred_check_branch
        %134 = sbr.rel (%p132) target = $region16
      $region15: #{_lambda_.23} parent=11 // pred_region
        _
      $region16: #{_lambda_.23} parent=11 // pred_fallthru
        _
      // Predicated region
      $region17: #{_lambda_.23} parent=11 // pred_check
        %p135 = pneg %p89
      $region18: #{_lambda_.23} parent=11 // pred_check_branch
        %137 = sbr.rel (%p135) target = $region20
      $region19: #{_lambda_.23} parent=11 // pred_region
        _
      $region20: #{_lambda_.23} parent=11 // pred_fallthru
        _
    $region12: #{_lambda_.23} parent=5 // pred_fallthru
      _
    %p138 = scmp.lt.s32.totalorder %s9, 2
    // Predicated region
    $region21: #{_lambda_.23} parent=5 // pred_check
      %p139 = pneg %p138
    $region22: #{_lambda_.23} parent=5 // pred_check_branch
      %141 = sbr.rel (%p139) target = $region24
    $region23: #{_lambda_.23} parent=5 // pred_region
      // Predicated region
      $region25: #{_lambda_.23} parent=23 // pred_check
        %p142 = pneg %p41
      $region26: #{_lambda_.23} parent=23 // pred_check_branch
        %144 = sbr.rel (%p142) target = $region28
      $region27: #{_lambda_.23} parent=23 // pred_region
        %p145 = scmp.lt.s32.totalorder %s16, 1
        %s146 = scalar_select %p145, %s16, 1
        %s147 = smul.addr %s146, 6
        %s148 = smul.addr %s147, 4
        %s149 = scalar_lea.vmem %s0, %s148
      $region28: #{_lambda_.23} parent=23 // pred_fallthru
        _
    $region24: #{_lambda_.23} parent=5 // pred_fallthru
      _
    %p150 = scmp.le.s32.totalorder 1, %s9
    %p151 = scmp.lt.s32.totalorder %s9, 3
    %p152 = pnand %p150, %p151
    %p153 = pneg %p152
    // Predicated region
    $region29: #{_lambda_.23} parent=5 // pred_check
      _
    $region30: #{_lambda_.23} parent=5 // pred_check_branch
      %155 = sbr.rel (%p152) target = $region32
    $region31: #{_lambda_.23} parent=5 // pred_region
      %s156 = ssub.s32 %s9, 1
      %p157 = scmp.lt.s32.totalorder %s18, 1
      %s158 = scalar_select %p157, %s18, 1
      %s159 = smul.addr %s158, 6
      %s160 = smul.addr %s159, 4
      %s161 = scalar_lea.vmem %s0, %s160
      %p162 = pneg %p47
      %p163 = pneg %p44
      %p164 = pneg %p68
      %p165 = pneg %p65
      %p166 = pneg %p89
      %p167 = pneg %p86
      %p168 = pneg %p117
      %p169 = pneg %p114
      %s170 = smul.u32 4, %s19
      %p171 = scmp.lt.s32.totalorder %s18, 1
      %s172 = scalar_select %p171, %s18, 1
      %p173 = scmp.lt.s32.totalorder %s170, 3
      %s174 = scalar_select %p173, %s170, 3
      %s175 = smul.addr %s172, 4
      %s176 = sadd.s32 %s174, %s175
      %s177 = smul.addr %s176, 2
      %s178 = scalar_lea.vmem %s3, %s177
      %p179 = scmp.lt.s32.totalorder %s18, 1
      %s180 = scalar_select %p179, %s18, 1
      %s181 = smul.addr %s180, 6
      %s182 = smul.addr %s181, 4
      %s183 = scalar_lea.vmem %s0, %s182
      %s184 = smul.u32 4, %s19
      %p185 = scmp.lt.s32.totalorder %s18, 1
      %s186 = scalar_select %p185, %s18, 1
      %p187 = scmp.lt.s32.totalorder %s184, 3
      %s188 = scalar_select %p187, %s184, 3
      %s189 = smul.addr %s186, 4
      %s190 = sadd.s32 %s188, %s189
      %s191 = smul.addr %s190, 2
      %s192 = scalar_lea.vmem %s3, %s191
      %s193 = smul.u32 4, %s19
      %s195 = smul.u32 %s19, 4
      %s196 = smul.addr %s195, 4
      %s197 = scalar_lea.vmem %s183, %s196
      %v198 = vld [vmem:[%s197] sm:$0x3]
      %v199 = vld [vmem:[%s197 + $0x4] sm:$0x3]
      %v200 = vld [vmem:[%s197 + $0x8] sm:$0x3]
      %v201 = vld [vmem:[%s197 + $0xc] sm:$0x3]
      %v202 = vld [vmem:[%s1] sm:$0xf]
      %v203 = vld [vmem:[%s1 + $0x4] sm:$0xf]
      %v204 = vld [vmem:[%s1 + $0x8] sm:$0xf]
      %v205 = vld [vmem:[%s1 + $0xc] sm:$0xf]
      %v206 = vld [vmem:[%s197] sm:$0x7]
      %v207 = vld [vmem:[%s197 + $0x4] sm:$0x7]
      %v208 = vld [vmem:[%s197 + $0x8] sm:$0x7]
      %v209 = vld [vmem:[%s197 + $0xc] sm:$0x7]
      %v215 = vunpack.c.l.s4 1983009808
      %v216 = vunpack.c.0.s8 %v215
      %v217 = vlaneseq
      %v218 = vshrl.u32 %v217, 7
      %v219 = vsub.s32 %v216, %v218
      %v220 = vrot.slane %v206, %v219
      %v221 = vcombine.high %v220, %v220
      %v223 = vunpack.c.l.s4 1983009808
      %v224 = vunpack.c.0.s8 %v223
      %v225 = vlaneseq
      %v226 = vshrl.u32 %v225, 7
      %v227 = vsub.s32 %v224, %v226
      %v228 = vrot.slane %v207, %v227
      %v229 = vcombine.high %v228, %v228
      %v231 = vunpack.c.l.s4 1983009808
      %v232 = vunpack.c.0.s8 %v231
      %v233 = vlaneseq
      %v234 = vshrl.u32 %v233, 7
      %v235 = vsub.s32 %v232, %v234
      %v236 = vrot.slane %v208, %v235
      %v237 = vcombine.high %v236, %v236
      %v239 = vunpack.c.l.s4 1983009808
      %v240 = vunpack.c.0.s8 %v239
      %v241 = vlaneseq
      %v242 = vshrl.u32 %v241, 7
      %v243 = vsub.s32 %v240, %v242
      %v244 = vrot.slane %v209, %v243
      %v245 = vcombine.high %v244, %v244
      %vm246 = vsmask.f32 1280
      %vm247 = vsmask.f32 3336
      %vm248 = vmor %vm246, %vm247
      %vm249 = vsmask.f32 5392
      %vm250 = vmor %vm248, %vm249
      %vm251 = vsmask.f32 7448
      %vm252 = vmor %vm250, %vm251
      %v254 = vshrl.u32 %v220, 16
      %v256 = vrot.slane %v254, 6
      %v257 = vshll.u32 %v220, 16
      %v259 = vrot.slane %v257, 7
      %v260 = vor.u32 %v256, %v259
      %v261 = vrot.slane %v260, 2
      %v263 = vshll.u32 %v221, 16
      %v265 = vrot.slane %v263, 7
      %v266 = vsel %vm252, %v261, %v265
      %v268 = vshrl.u32 %v228, 16
      %v270 = vrot.slane %v268, 6
      %v271 = vshll.u32 %v228, 16
      %v273 = vrot.slane %v271, 7
      %v274 = vor.u32 %v270, %v273
      %v275 = vrot.slane %v274, 2
      %v277 = vshll.u32 %v229, 16
      %v279 = vrot.slane %v277, 7
      %v280 = vsel %vm252, %v275, %v279
      %v282 = vshrl.u32 %v236, 16
      %v284 = vrot.slane %v282, 6
      %v285 = vshll.u32 %v236, 16
      %v287 = vrot.slane %v285, 7
      %v288 = vor.u32 %v284, %v287
      %v289 = vrot.slane %v288, 2
      %v291 = vshll.u32 %v237, 16
      %v293 = vrot.slane %v291, 7
      %v294 = vsel %vm252, %v289, %v293
      %v296 = vshrl.u32 %v244, 16
      %v298 = vrot.slane %v296, 6
      %v299 = vshll.u32 %v244, 16
      %v301 = vrot.slane %v299, 7
      %v302 = vor.u32 %v298, %v301
      %v303 = vrot.slane %v302, 2
      %v305 = vshll.u32 %v245, 16
      %v307 = vrot.slane %v305, 7
      %v308 = vsel %vm252, %v303, %v307
      %s309 = scalar_lea.vmem %s1, 16
      %v310 = vld [vmem:[%s309] sm:$0xf]
      %v311 = vld [vmem:[%s309 + $0x4] sm:$0xf]
      %v312 = vld [vmem:[%s309 + $0x8] sm:$0xf]
      %v313 = vld [vmem:[%s309 + $0xc] sm:$0xf]
      %v314 = vcombine.low %v266, %v280
      %v315 = vcombine.low %v294, %v308
      %v317 = vunpack.c.l.s4 1983009808
      %v318 = vunpack.c.0.s8 %v317
      %v319 = vlaneseq
      %v320 = vshrl.u32 %v319, 7
      %v321 = vsub.s32 %v318, %v320
      %v322 = vrot.slane %v314, %v321
      %v324 = vunpack.c.l.s4 1983009808
      %v325 = vunpack.c.0.s8 %v324
      %v326 = vlaneseq
      %v327 = vshrl.u32 %v326, 7
      %v328 = vsub.s32 %v325, %v327
      %v329 = vrot.slane %v315, %v328
      %v330 = vcombine.low %v322, %v329
      %v335 = vunpack.c.l.b16 %v310
      %v336 = vunpack.c.l.b16 %v311
      %v337 = vunpack.c.l.b16 %v312
      %v338 = vunpack.c.l.b16 %v313
      %v339 = vpack.c.b16 %v336, %v335
      %v340 = vpack.c.b16 %v338, %v337
      %vm343 = vcmask 261120
      %v345 = vsel %vm343, %v330, 0
      %347 = vmatprep.subr.bf16.mxu0 0
      %348 = vmatpush1.bf16.msra.mxu0 0
      %349 = vmatprep.subr.bf16.mxu0 0
      %350 = vmatpush1.bf16.msra.mxu0 0
      %351 = vmatprep.subr.bf16.mxu0 0
      %352 = vmatpush1.bf16.msra.mxu0 0
      %353 = vmatprep.subr.bf16.mxu0 0
      %354 = vmatpush1.bf16.msra.mxu0 0
      %355 = vmatprep.subr.bf16.mxu0 0
      %356 = vmatpush1.bf16.msra.mxu0 0
      %357 = vmatprep.subr.bf16.mxu0 0
      %358 = vmatpush1.bf16.msra.mxu0 0
      %359 = vmatprep.subr.bf16.mxu0 0
      %360 = vmatpush1.bf16.msra.mxu0 %v340
      %361 = vmatprep.subr.bf16.mxu0 0
      %362 = vmatpush1.bf16.msra.mxu0 %v339
      %363 = vmatprep.subr.bf16.mxu0 0
      %364 = vmatpush2.bf16.msra.mxu0 0
      %365 = vmatprep.subr.bf16.mxu0 0
      %366 = vmatpush2.bf16.msra.mxu0 0
      %367 = vmatprep.subr.bf16.mxu0 0
      %368 = vmatpush2.bf16.msra.mxu0 0
      %369 = vmatprep.subr.bf16.mxu0 0
      %370 = vmatpush2.bf16.msra.mxu0 0
      %371 = vmatprep.subr.bf16.mxu0 0
      %372 = vmatpush2.bf16.msra.mxu0 0
      %373 = vmatprep.subr.bf16.mxu0 0
      %374 = vmatpush2.bf16.msra.mxu0 0
      %375 = vmatprep.subr.bf16.mxu0 0
      %376 = vmatpush2.bf16.msra.mxu0 0
      %377 = vmatprep.subr.bf16.mxu0 0
      %378 = vmatpush2.bf16.msra.mxu0 0
      %379 = vmatprep.mubr.bf16.mxu0 0
      %380 = vmatmul.mubr.bf16.gmra.mxu0 %v345
      %v381 = vpop.f32.mrf.mxu0
      %v382 = vadd.f32 0.0, %v381
      %v383 = vpop.f32.mrf.mxu0
      %v384 = vpop.f32.mrf.mxu0
      %v385 = vadd.f32 0.0, %v384
      %v386 = vpop.f32.mrf.mxu0
      %387 = vdwg.mxu0
      %v392 = vcombine.low %v198, %v199
      %v393 = vcombine.low %v200, %v201
      %v395 = vunpack.c.l.s4 1983009808
      %v396 = vunpack.c.0.s8 %v395
      %v397 = vlaneseq
      %v398 = vshrl.u32 %v397, 7
      %v399 = vsub.s32 %v396, %v398
      %v400 = vrot.slane %v392, %v399
      %v402 = vunpack.c.l.s4 1983009808
      %v403 = vunpack.c.0.s8 %v402
      %v404 = vlaneseq
      %v405 = vshrl.u32 %v404, 7
      %v406 = vsub.s32 %v403, %v405
      %v407 = vrot.slane %v393, %v406
      %v408 = vcombine.low %v400, %v407
      %v413 = vunpack.c.l.b16 %v202
      %v414 = vunpack.c.l.b16 %v203
      %v415 = vunpack.c.l.b16 %v204
      %v416 = vunpack.c.l.b16 %v205
      %v417 = vpack.c.b16 %v414, %v413
      %v418 = vpack.c.b16 %v416, %v415
      %v422 = vsel %vm343, %v408, 0
      %424 = vmatprep.subr.bf16.mxu0 0
      %425 = vmatpush1.bf16.msra.mxu0 0
      %426 = vmatprep.subr.bf16.mxu0 0
      %427 = vmatpush1.bf16.msra.mxu0 0
      %428 = vmatprep.subr.bf16.mxu0 0
      %429 = vmatpush1.bf16.msra.mxu0 0
      %430 = vmatprep.subr.bf16.mxu0 0
      %431 = vmatpush1.bf16.msra.mxu0 0
      %432 = vmatprep.subr.bf16.mxu0 0
      %433 = vmatpush1.bf16.msra.mxu0 0
      %434 = vmatprep.subr.bf16.mxu0 0
      %435 = vmatpush1.bf16.msra.mxu0 0
      %436 = vmatprep.subr.bf16.mxu0 0
      %437 = vmatpush1.bf16.msra.mxu0 %v418
      %438 = vmatprep.subr.bf16.mxu0 0
      %439 = vmatpush1.bf16.msra.mxu0 %v417
      %440 = vmatprep.subr.bf16.mxu0 0
      %441 = vmatpush2.bf16.msra.mxu0 0
      %442 = vmatprep.subr.bf16.mxu0 0
      %443 = vmatpush2.bf16.msra.mxu0 0
      %444 = vmatprep.subr.bf16.mxu0 0
      %445 = vmatpush2.bf16.msra.mxu0 0
      %446 = vmatprep.subr.bf16.mxu0 0
      %447 = vmatpush2.bf16.msra.mxu0 0
      %448 = vmatprep.subr.bf16.mxu0 0
      %449 = vmatpush2.bf16.msra.mxu0 0
      %450 = vmatprep.subr.bf16.mxu0 0
      %451 = vmatpush2.bf16.msra.mxu0 0
      %452 = vmatprep.subr.bf16.mxu0 0
      %453 = vmatpush2.bf16.msra.mxu0 0
      %454 = vmatprep.subr.bf16.mxu0 0
      %455 = vmatpush2.bf16.msra.mxu0 0
      %456 = vmatprep.mubr.bf16.mxu0 0
      %457 = vmatmul.mubr.bf16.gmra.mxu0 %v422
      %v458 = vpop.f32.mrf.mxu0
      %v459 = vadd.f32 %v382, %v458
      %v460 = vpop.f32.mrf.mxu0
      %v461 = vpop.f32.mrf.mxu0
      %v462 = vadd.f32 %v385, %v461
      %v463 = vpop.f32.mrf.mxu0
      %464 = vdwg.mxu0
      %v465 = vld [vmem:[%s197] sm:$0x6]
      %v466 = vld [vmem:[%s197 + $0x4] sm:$0x6]
      %v467 = vld [vmem:[%s197 + $0x8] sm:$0x6]
      %v468 = vld [vmem:[%s197 + $0xc] sm:$0x6]
      %v474 = vunpack.c.l.s4 1983009808
      %v475 = vunpack.c.0.s8 %v474
      %v476 = vlaneseq
      %v477 = vshrl.u32 %v476, 7
      %v478 = vsub.s32 %v475, %v477
      %v479 = vrot.slane %v465, %v478
      %v480 = vcombine.high %v479, %v479
      %v482 = vunpack.c.l.s4 1983009808
      %v483 = vunpack.c.0.s8 %v482
      %v484 = vlaneseq
      %v485 = vshrl.u32 %v484, 7
      %v486 = vsub.s32 %v483, %v485
      %v487 = vrot.slane %v466, %v486
      %v488 = vcombine.high %v487, %v487
      %v490 = vunpack.c.l.s4 1983009808
      %v491 = vunpack.c.0.s8 %v490
      %v492 = vlaneseq
      %v493 = vshrl.u32 %v492, 7
      %v494 = vsub.s32 %v491, %v493
      %v495 = vrot.slane %v467, %v494
      %v496 = vcombine.high %v495, %v495
      %v498 = vunpack.c.l.s4 1983009808
      %v499 = vunpack.c.0.s8 %v498
      %v500 = vlaneseq
      %v501 = vshrl.u32 %v500, 7
      %v502 = vsub.s32 %v499, %v501
      %v503 = vrot.slane %v468, %v502
      %v504 = vcombine.high %v503, %v503
      %vm505 = vcmask 1040384
      %vm506 = vcmask 1042434
      %vm507 = vmor %vm505, %vm506
      %vm508 = vcmask 1044484
      %vm509 = vmor %vm507, %vm508
      %vm510 = vcmask 1046534
      %vm511 = vmor %vm509, %vm510
      %v512 = vrot.slane %v479, 7
      %v513 = vrot.slane %v512, 2
      %v514 = vrot.slane %v480, 7
      %v515 = vsel %vm511, %v513, %v514
      %v516 = vrot.slane %v487, 7
      %v517 = vrot.slane %v516, 2
      %v518 = vrot.slane %v488, 7
      %v519 = vsel %vm511, %v517, %v518
      %v520 = vrot.slane %v495, 7
      %v521 = vrot.slane %v520, 2
      %v522 = vrot.slane %v496, 7
      %v523 = vsel %vm511, %v521, %v522
      %v524 = vrot.slane %v503, 7
      %v525 = vrot.slane %v524, 2
      %v526 = vrot.slane %v504, 7
      %v527 = vsel %vm511, %v525, %v526
      %s528 = scalar_lea.vmem %s1, 32
      %v529 = vld [vmem:[%s528] sm:$0xf]
      %v530 = vld [vmem:[%s528 + $0x4] sm:$0xf]
      %v531 = vld [vmem:[%s528 + $0x8] sm:$0xf]
      %v532 = vld [vmem:[%s528 + $0xc] sm:$0xf]
      %v533 = vcombine.low %v515, %v519
      %v534 = vcombine.low %v523, %v527
      %v536 = vunpack.c.l.s4 1983009808
      %v537 = vunpack.c.0.s8 %v536
      %v538 = vlaneseq
      %v539 = vshrl.u32 %v538, 7
      %v540 = vsub.s32 %v537, %v539
      %v541 = vrot.slane %v533, %v540
      %v543 = vunpack.c.l.s4 1983009808
      %v544 = vunpack.c.0.s8 %v543
      %v545 = vlaneseq
      %v546 = vshrl.u32 %v545, 7
      %v547 = vsub.s32 %v544, %v546
      %v548 = vrot.slane %v534, %v547
      %v549 = vcombine.low %v541, %v548
      %v554 = vunpack.c.l.b16 %v529
      %v555 = vunpack.c.l.b16 %v530
      %v556 = vunpack.c.l.b16 %v531
      %v557 = vunpack.c.l.b16 %v532
      %v558 = vpack.c.b16 %v555, %v554
      %v559 = vpack.c.b16 %v557, %v556
      %v563 = vsel %vm343, %v549, 0
      %565 = vmatprep.subr.bf16.mxu0 0
      %566 = vmatpush1.bf16.msra.mxu0 0
      %567 = vmatprep.subr.bf16.mxu0 0
      %568 = vmatpush1.bf16.msra.mxu0 0
      %569 = vmatprep.subr.bf16.mxu0 0
      %570 = vmatpush1.bf16.msra.mxu0 0
      %571 = vmatprep.subr.bf16.mxu0 0
      %572 = vmatpush1.bf16.msra.mxu0 0
      %573 = vmatprep.subr.bf16.mxu0 0
      %574 = vmatpush1.bf16.msra.mxu0 0
      %575 = vmatprep.subr.bf16.mxu0 0
      %576 = vmatpush1.bf16.msra.mxu0 0
      %577 = vmatprep.subr.bf16.mxu0 0
      %578 = vmatpush1.bf16.msra.mxu0 %v559
      %579 = vmatprep.subr.bf16.mxu0 0
      %580 = vmatpush1.bf16.msra.mxu0 %v558
      %581 = vmatprep.subr.bf16.mxu0 0
      %582 = vmatpush2.bf16.msra.mxu0 0
      %583 = vmatprep.subr.bf16.mxu0 0
      %584 = vmatpush2.bf16.msra.mxu0 0
      %585 = vmatprep.subr.bf16.mxu0 0
      %586 = vmatpush2.bf16.msra.mxu0 0
      %587 = vmatprep.subr.bf16.mxu0 0
      %588 = vmatpush2.bf16.msra.mxu0 0
      %589 = vmatprep.subr.bf16.mxu0 0
      %590 = vmatpush2.bf16.msra.mxu0 0
      %591 = vmatprep.subr.bf16.mxu0 0
      %592 = vmatpush2.bf16.msra.mxu0 0
      %593 = vmatprep.subr.bf16.mxu0 0
      %594 = vmatpush2.bf16.msra.mxu0 0
      %595 = vmatprep.subr.bf16.mxu0 0
      %596 = vmatpush2.bf16.msra.mxu0 0
      %597 = vmatprep.mubr.bf16.mxu0 0
      %598 = vmatmul.mubr.bf16.gmra.mxu0 %v563
      %v599 = vpop.f32.mrf.mxu0
      %v600 = vadd.f32 0.0, %v599
      %v601 = vpop.f32.mrf.mxu0
      %v602 = vpop.f32.mrf.mxu0
      %v603 = vadd.f32 0.0, %v602
      %v604 = vpop.f32.mrf.mxu0
      %605 = vdwg.mxu0
      %v606 = vadd.f32 %v459, %v600
      %v607 = vadd.f32 %v462, %v603
      %s608 = sadd.s32 %s195, 1
      %s609 = smul.addr %s608, 4
      %s610 = scalar_lea.vmem %s183, %s609
      %v611 = vld [vmem:[%s610] sm:$0x3]
      %v612 = vld [vmem:[%s610 + $0x4] sm:$0x3]
      %v613 = vld [vmem:[%s610 + $0x8] sm:$0x3]
      %v614 = vld [vmem:[%s610 + $0xc] sm:$0x3]
      %s615 = scalar_lea.vmem %s1, 48
      %v616 = vld [vmem:[%s615] sm:$0xf]
      %v617 = vld [vmem:[%s615 + $0x4] sm:$0xf]
      %v618 = vld [vmem:[%s615 + $0x8] sm:$0xf]
      %v619 = vld [vmem:[%s615 + $0xc] sm:$0xf]
      %v624 = vcombine.low %v611, %v612
      %v625 = vcombine.low %v613, %v614
      %v627 = vunpack.c.l.s4 1983009808
      %v628 = vunpack.c.0.s8 %v627
      %v629 = vlaneseq
      %v630 = vshrl.u32 %v629, 7
      %v631 = vsub.s32 %v628, %v630
      %v632 = vrot.slane %v624, %v631
      %v634 = vunpack.c.l.s4 1983009808
      %v635 = vunpack.c.0.s8 %v634
      %v636 = vlaneseq
      %v637 = vshrl.u32 %v636, 7
      %v638 = vsub.s32 %v635, %v637
      %v639 = vrot.slane %v625, %v638
      %v640 = vcombine.low %v632, %v639
      %v645 = vunpack.c.l.b16 %v616
      %v646 = vunpack.c.l.b16 %v617
      %v647 = vunpack.c.l.b16 %v618
      %v648 = vunpack.c.l.b16 %v619
      %v649 = vpack.c.b16 %v646, %v645
      %v650 = vpack.c.b16 %v648, %v647
      %v654 = vsel %vm343, %v640, 0
      %656 = vmatprep.subr.bf16.mxu0 0
      %657 = vmatpush1.bf16.msra.mxu0 0
      %658 = vmatprep.subr.bf16.mxu0 0
      %659 = vmatpush1.bf16.msra.mxu0 0
      %660 = vmatprep.subr.bf16.mxu0 0
      %661 = vmatpush1.bf16.msra.mxu0 0
      %662 = vmatprep.subr.bf16.mxu0 0
      %663 = vmatpush1.bf16.msra.mxu0 0
      %664 = vmatprep.subr.bf16.mxu0 0
      %665 = vmatpush1.bf16.msra.mxu0 0
      %666 = vmatprep.subr.bf16.mxu0 0
      %667 = vmatpush1.bf16.msra.mxu0 0
      %668 = vmatprep.subr.bf16.mxu0 0
      %669 = vmatpush1.bf16.msra.mxu0 %v650
      %670 = vmatprep.subr.bf16.mxu0 0
      %671 = vmatpush1.bf16.msra.mxu0 %v649
      %672 = vmatprep.subr.bf16.mxu0 0
      %673 = vmatpush2.bf16.msra.mxu0 0
      %674 = vmatprep.subr.bf16.mxu0 0
      %675 = vmatpush2.bf16.msra.mxu0 0
      %676 = vmatprep.subr.bf16.mxu0 0
      %677 = vmatpush2.bf16.msra.mxu0 0
      %678 = vmatprep.subr.bf16.mxu0 0
      %679 = vmatpush2.bf16.msra.mxu0 0
      %680 = vmatprep.subr.bf16.mxu0 0
      %681 = vmatpush2.bf16.msra.mxu0 0
      %682 = vmatprep.subr.bf16.mxu0 0
      %683 = vmatpush2.bf16.msra.mxu0 0
      %684 = vmatprep.subr.bf16.mxu0 0
      %685 = vmatpush2.bf16.msra.mxu0 0
      %686 = vmatprep.subr.bf16.mxu0 0
      %687 = vmatpush2.bf16.msra.mxu0 0
      %688 = vmatprep.mubr.bf16.mxu0 0
      %689 = vmatmul.mubr.bf16.gmra.mxu0 %v654
      %v690 = vpop.f32.mrf.mxu0
      %v691 = vadd.f32 0.0, %v690
      %v692 = vpop.f32.mrf.mxu0
      %v693 = vpop.f32.mrf.mxu0
      %v694 = vadd.f32 0.0, %v693
      %v695 = vpop.f32.mrf.mxu0
      %696 = vdwg.mxu0
      %v697 = vadd.f32 %v606, %v691
      %v698 = vadd.f32 %v607, %v694
      %v699 = vld [vmem:[%s610] sm:$0x7]
      %v700 = vld [vmem:[%s610 + $0x4] sm:$0x7]
      %v701 = vld [vmem:[%s610 + $0x8] sm:$0x7]
      %v702 = vld [vmem:[%s610 + $0xc] sm:$0x7]
      %v708 = vunpack.c.l.s4 1983009808
      %v709 = vunpack.c.0.s8 %v708
      %v710 = vlaneseq
      %v711 = vshrl.u32 %v710, 7
      %v712 = vsub.s32 %v709, %v711
      %v713 = vrot.slane %v699, %v712
      %v714 = vcombine.high %v713, %v713
      %v716 = vunpack.c.l.s4 1983009808
      %v717 = vunpack.c.0.s8 %v716
      %v718 = vlaneseq
      %v719 = vshrl.u32 %v718, 7
      %v720 = vsub.s32 %v717, %v719
      %v721 = vrot.slane %v700, %v720
      %v722 = vcombine.high %v721, %v721
      %v724 = vunpack.c.l.s4 1983009808
      %v725 = vunpack.c.0.s8 %v724
      %v726 = vlaneseq
      %v727 = vshrl.u32 %v726, 7
      %v728 = vsub.s32 %v725, %v727
      %v729 = vrot.slane %v701, %v728
      %v730 = vcombine.high %v729, %v729
      %v732 = vunpack.c.l.s4 1983009808
      %v733 = vunpack.c.0.s8 %v732
      %v734 = vlaneseq
      %v735 = vshrl.u32 %v734, 7
      %v736 = vsub.s32 %v733, %v735
      %v737 = vrot.slane %v702, %v736
      %v738 = vcombine.high %v737, %v737
      %v740 = vshrl.u32 %v713, 16
      %v742 = vrot.slane %v740, 6
      %v743 = vshll.u32 %v713, 16
      %v745 = vrot.slane %v743, 7
      %v746 = vor.u32 %v742, %v745
      %v747 = vrot.slane %v746, 2
      %v749 = vshll.u32 %v714, 16
      %v751 = vrot.slane %v749, 7
      %v752 = vsel %vm252, %v747, %v751
      %v754 = vshrl.u32 %v721, 16
      %v756 = vrot.slane %v754, 6
      %v757 = vshll.u32 %v721, 16
      %v759 = vrot.slane %v757, 7
      %v760 = vor.u32 %v756, %v759
      %v761 = vrot.slane %v760, 2
      %v763 = vshll.u32 %v722, 16
      %v765 = vrot.slane %v763, 7
      %v766 = vsel %vm252, %v761, %v765
      %v768 = vshrl.u32 %v729, 16
      %v770 = vrot.slane %v768, 6
      %v771 = vshll.u32 %v729, 16
      %v773 = vrot.slane %v771, 7
      %v774 = vor.u32 %v770, %v773
      %v775 = vrot.slane %v774, 2
      %v777 = vshll.u32 %v730, 16
      %v779 = vrot.slane %v777, 7
      %v780 = vsel %vm252, %v775, %v779
      %v782 = vshrl.u32 %v737, 16
      %v784 = vrot.slane %v782, 6
      %v785 = vshll.u32 %v737, 16
      %v787 = vrot.slane %v785, 7
      %v788 = vor.u32 %v784, %v787
      %v789 = vrot.slane %v788, 2
      %v791 = vshll.u32 %v738, 16
      %v793 = vrot.slane %v791, 7
      %v794 = vsel %vm252, %v789, %v793
      %s795 = scalar_lea.vmem %s1, 64
      %v796 = vld [vmem:[%s795] sm:$0xf]
      %v797 = vld [vmem:[%s795 + $0x4] sm:$0xf]
      %v798 = vld [vmem:[%s795 + $0x8] sm:$0xf]
      %v799 = vld [vmem:[%s795 + $0xc] sm:$0xf]
      %v800 = vcombine.low %v752, %v766
      %v801 = vcombine.low %v780, %v794
      %v803 = vunpack.c.l.s4 1983009808
      %v804 = vunpack.c.0.s8 %v803
      %v805 = vlaneseq
      %v806 = vshrl.u32 %v805, 7
      %v807 = vsub.s32 %v804, %v806
      %v808 = vrot.slane %v800, %v807
      %v810 = vunpack.c.l.s4 1983009808
      %v811 = vunpack.c.0.s8 %v810
      %v812 = vlaneseq
      %v813 = vshrl.u32 %v812, 7
      %v814 = vsub.s32 %v811, %v813
      %v815 = vrot.slane %v801, %v814
      %v816 = vcombine.low %v808, %v815
      %v821 = vunpack.c.l.b16 %v796
      %v822 = vunpack.c.l.b16 %v797
      %v823 = vunpack.c.l.b16 %v798
      %v824 = vunpack.c.l.b16 %v799
      %v825 = vpack.c.b16 %v822, %v821
      %v826 = vpack.c.b16 %v824, %v823
      %v830 = vsel %vm343, %v816, 0
      %832 = vmatprep.subr.bf16.mxu0 0
      %833 = vmatpush1.bf16.msra.mxu0 0
      %834 = vmatprep.subr.bf16.mxu0 0
      %835 = vmatpush1.bf16.msra.mxu0 0
      %836 = vmatprep.subr.bf16.mxu0 0
      %837 = vmatpush1.bf16.msra.mxu0 0
      %838 = vmatprep.subr.bf16.mxu0 0
      %839 = vmatpush1.bf16.msra.mxu0 0
      %840 = vmatprep.subr.bf16.mxu0 0
      %841 = vmatpush1.bf16.msra.mxu0 0
      %842 = vmatprep.subr.bf16.mxu0 0
      %843 = vmatpush1.bf16.msra.mxu0 0
      %844 = vmatprep.subr.bf16.mxu0 0
      %845 = vmatpush1.bf16.msra.mxu0 %v826
      %846 = vmatprep.subr.bf16.mxu0 0
      %847 = vmatpush1.bf16.msra.mxu0 %v825
      %848 = vmatprep.subr.bf16.mxu0 0
      %849 = vmatpush2.bf16.msra.mxu0 0
      %850 = vmatprep.subr.bf16.mxu0 0
      %851 = vmatpush2.bf16.msra.mxu0 0
      %852 = vmatprep.subr.bf16.mxu0 0
      %853 = vmatpush2.bf16.msra.mxu0 0
      %854 = vmatprep.subr.bf16.mxu0 0
      %855 = vmatpush2.bf16.msra.mxu0 0
      %856 = vmatprep.subr.bf16.mxu0 0
      %857 = vmatpush2.bf16.msra.mxu0 0
      %858 = vmatprep.subr.bf16.mxu0 0
      %859 = vmatpush2.bf16.msra.mxu0 0
      %860 = vmatprep.subr.bf16.mxu0 0
      %861 = vmatpush2.bf16.msra.mxu0 0
      %862 = vmatprep.subr.bf16.mxu0 0
      %863 = vmatpush2.bf16.msra.mxu0 0
      %864 = vmatprep.mubr.bf16.mxu0 0
      %865 = vmatmul.mubr.bf16.gmra.mxu0 %v830
      %v866 = vpop.f32.mrf.mxu0
      %v867 = vadd.f32 0.0, %v866
      %v868 = vpop.f32.mrf.mxu0
      %v869 = vpop.f32.mrf.mxu0
      %v870 = vadd.f32 0.0, %v869
      %v871 = vpop.f32.mrf.mxu0
      %872 = vdwg.mxu0
      %v873 = vadd.f32 %v697, %v867
      %v874 = vadd.f32 %v698, %v870
      %v875 = vld [vmem:[%s610] sm:$0x6]
      %v876 = vld [vmem:[%s610 + $0x4] sm:$0x6]
      %v877 = vld [vmem:[%s610 + $0x8] sm:$0x6]
      %v878 = vld [vmem:[%s610 + $0xc] sm:$0x6]
      %v884 = vunpack.c.l.s4 1983009808
      %v885 = vunpack.c.0.s8 %v884
      %v886 = vlaneseq
      %v887 = vshrl.u32 %v886, 7
      %v888 = vsub.s32 %v885, %v887
      %v889 = vrot.slane %v875, %v888
      %v890 = vcombine.high %v889, %v889
      %v892 = vunpack.c.l.s4 1983009808
      %v893 = vunpack.c.0.s8 %v892
      %v894 = vlaneseq
      %v895 = vshrl.u32 %v894, 7
      %v896 = vsub.s32 %v893, %v895
      %v897 = vrot.slane %v876, %v896
      %v898 = vcombine.high %v897, %v897
      %v900 = vunpack.c.l.s4 1983009808
      %v901 = vunpack.c.0.s8 %v900
      %v902 = vlaneseq
      %v903 = vshrl.u32 %v902, 7
      %v904 = vsub.s32 %v901, %v903
      %v905 = vrot.slane %v877, %v904
      %v906 = vcombine.high %v905, %v905
      %v908 = vunpack.c.l.s4 1983009808
      %v909 = vunpack.c.0.s8 %v908
      %v910 = vlaneseq
      %v911 = vshrl.u32 %v910, 7
      %v912 = vsub.s32 %v909, %v911
      %v913 = vrot.slane %v878, %v912
      %v914 = vcombine.high %v913, %v913
      %v915 = vrot.slane %v889, 7
      %v916 = vrot.slane %v915, 2
      %v917 = vrot.slane %v890, 7
      %v918 = vsel %vm511, %v916, %v917
      %v919 = vrot.slane %v897, 7
      %v920 = vrot.slane %v919, 2
      %v921 = vrot.slane %v898, 7
      %v922 = vsel %vm511, %v920, %v921
      %v923 = vrot.slane %v905, 7
      %v924 = vrot.slane %v923, 2
      %v925 = vrot.slane %v906, 7
      %v926 = vsel %vm511, %v924, %v925
      %v927 = vrot.slane %v913, 7
      %v928 = vrot.slane %v927, 2
      %v929 = vrot.slane %v914, 7
      %v930 = vsel %vm511, %v928, %v929
      %s931 = scalar_lea.vmem %s1, 80
      %v932 = vld [vmem:[%s931] sm:$0xf]
      %v933 = vld [vmem:[%s931 + $0x4] sm:$0xf]
      %v934 = vld [vmem:[%s931 + $0x8] sm:$0xf]
      %v935 = vld [vmem:[%s931 + $0xc] sm:$0xf]
      %v936 = vcombine.low %v918, %v922
      %v937 = vcombine.low %v926, %v930
      %v939 = vunpack.c.l.s4 1983009808
      %v940 = vunpack.c.0.s8 %v939
      %v941 = vlaneseq
      %v942 = vshrl.u32 %v941, 7
      %v943 = vsub.s32 %v940, %v942
      %v944 = vrot.slane %v936, %v943
      %v946 = vunpack.c.l.s4 1983009808
      %v947 = vunpack.c.0.s8 %v946
      %v948 = vlaneseq
      %v949 = vshrl.u32 %v948, 7
      %v950 = vsub.s32 %v947, %v949
      %v951 = vrot.slane %v937, %v950
      %v952 = vcombine.low %v944, %v951
      %v957 = vunpack.c.l.b16 %v932
      %v958 = vunpack.c.l.b16 %v933
      %v959 = vunpack.c.l.b16 %v934
      %v960 = vunpack.c.l.b16 %v935
      %v961 = vpack.c.b16 %v958, %v957
      %v962 = vpack.c.b16 %v960, %v959
      %v966 = vsel %vm343, %v952, 0
      %968 = vmatprep.subr.bf16.mxu0 0
      %969 = vmatpush1.bf16.msra.mxu0 0
      %970 = vmatprep.subr.bf16.mxu0 0
      %971 = vmatpush1.bf16.msra.mxu0 0
      %972 = vmatprep.subr.bf16.mxu0 0
      %973 = vmatpush1.bf16.msra.mxu0 0
      %974 = vmatprep.subr.bf16.mxu0 0
      %975 = vmatpush1.bf16.msra.mxu0 0
      %976 = vmatprep.subr.bf16.mxu0 0
      %977 = vmatpush1.bf16.msra.mxu0 0
      %978 = vmatprep.subr.bf16.mxu0 0
      %979 = vmatpush1.bf16.msra.mxu0 0
      %980 = vmatprep.subr.bf16.mxu0 0
      %981 = vmatpush1.bf16.msra.mxu0 %v962
      %982 = vmatprep.subr.bf16.mxu0 0
      %983 = vmatpush1.bf16.msra.mxu0 %v961
      %984 = vmatprep.subr.bf16.mxu0 0
      %985 = vmatpush2.bf16.msra.mxu0 0
      %986 = vmatprep.subr.bf16.mxu0 0
      %987 = vmatpush2.bf16.msra.mxu0 0
      %988 = vmatprep.subr.bf16.mxu0 0
      %989 = vmatpush2.bf16.msra.mxu0 0
      %990 = vmatprep.subr.bf16.mxu0 0
      %991 = vmatpush2.bf16.msra.mxu0 0
      %992 = vmatprep.subr.bf16.mxu0 0
      %993 = vmatpush2.bf16.msra.mxu0 0
      %994 = vmatprep.subr.bf16.mxu0 0
      %995 = vmatpush2.bf16.msra.mxu0 0
      %996 = vmatprep.subr.bf16.mxu0 0
      %997 = vmatpush2.bf16.msra.mxu0 0
      %998 = vmatprep.subr.bf16.mxu0 0
      %999 = vmatpush2.bf16.msra.mxu0 0
      %1000 = vmatprep.mubr.bf16.mxu0 0
      %1001 = vmatmul.mubr.bf16.gmra.mxu0 %v966
      %v1002 = vpop.f32.mrf.mxu0
      %v1003 = vadd.f32 0.0, %v1002
      %v1004 = vpop.f32.mrf.mxu0
      %v1005 = vpop.f32.mrf.mxu0
      %v1006 = vadd.f32 0.0, %v1005
      %v1007 = vpop.f32.mrf.mxu0
      %1008 = vdwg.mxu0
      %v1009 = vadd.f32 %v873, %v1003
      %v1010 = vadd.f32 %v874, %v1006
      %s1011 = sadd.s32 %s195, 2
      %s1012 = smul.addr %s1011, 4
      %s1013 = scalar_lea.vmem %s183, %s1012
      %v1014 = vld [vmem:[%s1013] sm:$0x3]
      %v1015 = vld [vmem:[%s1013 + $0x4] sm:$0x3]
      %v1016 = vld [vmem:[%s1013 + $0x8] sm:$0x3]
      %v1017 = vld [vmem:[%s1013 + $0xc] sm:$0x3]
      %s1018 = scalar_lea.vmem %s1, 96
      %v1019 = vld [vmem:[%s1018] sm:$0xf]
      %v1020 = vld [vmem:[%s1018 + $0x4] sm:$0xf]
      %v1021 = vld [vmem:[%s1018 + $0x8] sm:$0xf]
      %v1022 = vld [vmem:[%s1018 + $0xc] sm:$0xf]
      %v1027 = vcombine.low %v1014, %v1015
      %v1028 = vcombine.low %v1016, %v1017
      %v1030 = vunpack.c.l.s4 1983009808
      %v1031 = vunpack.c.0.s8 %v1030
      %v1032 = vlaneseq
      %v1033 = vshrl.u32 %v1032, 7
      %v1034 = vsub.s32 %v1031, %v1033
      %v1035 = vrot.slane %v1027, %v1034
      %v1037 = vunpack.c.l.s4 1983009808
      %v1038 = vunpack.c.0.s8 %v1037
      %v1039 = vlaneseq
      %v1040 = vshrl.u32 %v1039, 7
      %v1041 = vsub.s32 %v1038, %v1040
      %v1042 = vrot.slane %v1028, %v1041
      %v1043 = vcombine.low %v1035, %v1042
      %v1048 = vunpack.c.l.b16 %v1019
      %v1049 = vunpack.c.l.b16 %v1020
      %v1050 = vunpack.c.l.b16 %v1021
      %v1051 = vunpack.c.l.b16 %v1022
      %v1052 = vpack.c.b16 %v1049, %v1048
      %v1053 = vpack.c.b16 %v1051, %v1050
      %v1057 = vsel %vm343, %v1043, 0
      %1059 = vmatprep.subr.bf16.mxu0 0
      %1060 = vmatpush1.bf16.msra.mxu0 0
      %1061 = vmatprep.subr.bf16.mxu0 0
      %1062 = vmatpush1.bf16.msra.mxu0 0
      %1063 = vmatprep.subr.bf16.mxu0 0
      %1064 = vmatpush1.bf16.msra.mxu0 0
      %1065 = vmatprep.subr.bf16.mxu0 0
      %1066 = vmatpush1.bf16.msra.mxu0 0
      %1067 = vmatprep.subr.bf16.mxu0 0
      %1068 = vmatpush1.bf16.msra.mxu0 0
      %1069 = vmatprep.subr.bf16.mxu0 0
      %1070 = vmatpush1.bf16.msra.mxu0 0
      %1071 = vmatprep.subr.bf16.mxu0 0
      %1072 = vmatpush1.bf16.msra.mxu0 %v1053
      %1073 = vmatprep.subr.bf16.mxu0 0
      %1074 = vmatpush1.bf16.msra.mxu0 %v1052
      %1075 = vmatprep.subr.bf16.mxu0 0
      %1076 = vmatpush2.bf16.msra.mxu0 0
      %1077 = vmatprep.subr.bf16.mxu0 0
      %1078 = vmatpush2.bf16.msra.mxu0 0
      %1079 = vmatprep.subr.bf16.mxu0 0
      %1080 = vmatpush2.bf16.msra.mxu0 0
      %1081 = vmatprep.subr.bf16.mxu0 0
      %1082 = vmatpush2.bf16.msra.mxu0 0
      %1083 = vmatprep.subr.bf16.mxu0 0
      %1084 = vmatpush2.bf16.msra.mxu0 0
      %1085 = vmatprep.subr.bf16.mxu0 0
      %1086 = vmatpush2.bf16.msra.mxu0 0
      %1087 = vmatprep.subr.bf16.mxu0 0
      %1088 = vmatpush2.bf16.msra.mxu0 0
      %1089 = vmatprep.subr.bf16.mxu0 0
      %1090 = vmatpush2.bf16.msra.mxu0 0
      %1091 = vmatprep.mubr.bf16.mxu0 0
      %1092 = vmatmul.mubr.bf16.gmra.mxu0 %v1057
      %v1093 = vpop.f32.mrf.mxu0
      %v1094 = vadd.f32 0.0, %v1093
      %v1095 = vpop.f32.mrf.mxu0
      %v1096 = vpop.f32.mrf.mxu0
      %v1097 = vadd.f32 0.0, %v1096
      %v1098 = vpop.f32.mrf.mxu0
      %1099 = vdwg.mxu0
      %v1100 = vadd.f32 %v1009, %v1094
      %v1101 = vadd.f32 %v1010, %v1097
      %v1102 = vld [vmem:[%s1013] sm:$0x7]
      %v1103 = vld [vmem:[%s1013 + $0x4] sm:$0x7]
      %v1104 = vld [vmem:[%s1013 + $0x8] sm:$0x7]
      %v1105 = vld [vmem:[%s1013 + $0xc] sm:$0x7]
      %v1111 = vunpack.c.l.s4 1983009808
      %v1112 = vunpack.c.0.s8 %v1111
      %v1113 = vlaneseq
      %v1114 = vshrl.u32 %v1113, 7
      %v1115 = vsub.s32 %v1112, %v1114
      %v1116 = vrot.slane %v1102, %v1115
      %v1117 = vcombine.high %v1116, %v1116
      %v1119 = vunpack.c.l.s4 1983009808
      %v1120 = vunpack.c.0.s8 %v1119
      %v1121 = vlaneseq
      %v1122 = vshrl.u32 %v1121, 7
      %v1123 = vsub.s32 %v1120, %v1122
      %v1124 = vrot.slane %v1103, %v1123
      %v1125 = vcombine.high %v1124, %v1124
      %v1127 = vunpack.c.l.s4 1983009808
      %v1128 = vunpack.c.0.s8 %v1127
      %v1129 = vlaneseq
      %v1130 = vshrl.u32 %v1129, 7
      %v1131 = vsub.s32 %v1128, %v1130
      %v1132 = vrot.slane %v1104, %v1131
      %v1133 = vcombine.high %v1132, %v1132
      %v1135 = vunpack.c.l.s4 1983009808
      %v1136 = vunpack.c.0.s8 %v1135
      %v1137 = vlaneseq
      %v1138 = vshrl.u32 %v1137, 7
      %v1139 = vsub.s32 %v1136, %v1138
      %v1140 = vrot.slane %v1105, %v1139
      %v1141 = vcombine.high %v1140, %v1140
      %v1143 = vshrl.u32 %v1116, 16
      %v1145 = vrot.slane %v1143, 6
      %v1146 = vshll.u32 %v1116, 16
      %v1148 = vrot.slane %v1146, 7
      %v1149 = vor.u32 %v1145, %v1148
      %v1150 = vrot.slane %v1149, 2
      %v1152 = vshll.u32 %v1117, 16
      %v1154 = vrot.slane %v1152, 7
      %v1155 = vsel %vm252, %v1150, %v1154
      %v1157 = vshrl.u32 %v1124, 16
      %v1159 = vrot.slane %v1157, 6
      %v1160 = vshll.u32 %v1124, 16
      %v1162 = vrot.slane %v1160, 7
      %v1163 = vor.u32 %v1159, %v1162
      %v1164 = vrot.slane %v1163, 2
      %v1166 = vshll.u32 %v1125, 16
      %v1168 = vrot.slane %v1166, 7
      %v1169 = vsel %vm252, %v1164, %v1168
      %v1171 = vshrl.u32 %v1132, 16
      %v1173 = vrot.slane %v1171, 6
      %v1174 = vshll.u32 %v1132, 16
      %v1176 = vrot.slane %v1174, 7
      %v1177 = vor.u32 %v1173, %v1176
      %v1178 = vrot.slane %v1177, 2
      %v1180 = vshll.u32 %v1133, 16
      %v1182 = vrot.slane %v1180, 7
      %v1183 = vsel %vm252, %v1178, %v1182
      %v1185 = vshrl.u32 %v1140, 16
      %v1187 = vrot.slane %v1185, 6
      %v1188 = vshll.u32 %v1140, 16
      %v1190 = vrot.slane %v1188, 7
      %v1191 = vor.u32 %v1187, %v1190
      %v1192 = vrot.slane %v1191, 2
      %v1194 = vshll.u32 %v1141, 16
      %v1196 = vrot.slane %v1194, 7
      %v1197 = vsel %vm252, %v1192, %v1196
      %s1198 = scalar_lea.vmem %s1, 112
      %v1199 = vld [vmem:[%s1198] sm:$0xf]
      %v1200 = vld [vmem:[%s1198 + $0x4] sm:$0xf]
      %v1201 = vld [vmem:[%s1198 + $0x8] sm:$0xf]
      %v1202 = vld [vmem:[%s1198 + $0xc] sm:$0xf]
      %v1203 = vcombine.low %v1155, %v1169
      %v1204 = vcombine.low %v1183, %v1197
      %v1206 = vunpack.c.l.s4 1983009808
      %v1207 = vunpack.c.0.s8 %v1206
      %v1208 = vlaneseq
      %v1209 = vshrl.u32 %v1208, 7
      %v1210 = vsub.s32 %v1207, %v1209
      %v1211 = vrot.slane %v1203, %v1210
      %v1213 = vunpack.c.l.s4 1983009808
      %v1214 = vunpack.c.0.s8 %v1213
      %v1215 = vlaneseq
      %v1216 = vshrl.u32 %v1215, 7
      %v1217 = vsub.s32 %v1214, %v1216
      %v1218 = vrot.slane %v1204, %v1217
      %v1219 = vcombine.low %v1211, %v1218
      %v1224 = vunpack.c.l.b16 %v1199
      %v1225 = vunpack.c.l.b16 %v1200
      %v1226 = vunpack.c.l.b16 %v1201
      %v1227 = vunpack.c.l.b16 %v1202
      %v1228 = vpack.c.b16 %v1225, %v1224
      %v1229 = vpack.c.b16 %v1227, %v1226
      %v1233 = vsel %vm343, %v1219, 0
      %1235 = vmatprep.subr.bf16.mxu0 0
      %1236 = vmatpush1.bf16.msra.mxu0 0
      %1237 = vmatprep.subr.bf16.mxu0 0
      %1238 = vmatpush1.bf16.msra.mxu0 0
      %1239 = vmatprep.subr.bf16.mxu0 0
      %1240 = vmatpush1.bf16.msra.mxu0 0
      %1241 = vmatprep.subr.bf16.mxu0 0
      %1242 = vmatpush1.bf16.msra.mxu0 0
      %1243 = vmatprep.subr.bf16.mxu0 0
      %1244 = vmatpush1.bf16.msra.mxu0 0
      %1245 = vmatprep.subr.bf16.mxu0 0
      %1246 = vmatpush1.bf16.msra.mxu0 0
      %1247 = vmatprep.subr.bf16.mxu0 0
      %1248 = vmatpush1.bf16.msra.mxu0 %v1229
      %1249 = vmatprep.subr.bf16.mxu0 0
      %1250 = vmatpush1.bf16.msra.mxu0 %v1228
      %1251 = vmatprep.subr.bf16.mxu0 0
      %1252 = vmatpush2.bf16.msra.mxu0 0
      %1253 = vmatprep.subr.bf16.mxu0 0
      %1254 = vmatpush2.bf16.msra.mxu0 0
      %1255 = vmatprep.subr.bf16.mxu0 0
      %1256 = vmatpush2.bf16.msra.mxu0 0
      %1257 = vmatprep.subr.bf16.mxu0 0
      %1258 = vmatpush2.bf16.msra.mxu0 0
      %1259 = vmatprep.subr.bf16.mxu0 0
      %1260 = vmatpush2.bf16.msra.mxu0 0
      %1261 = vmatprep.subr.bf16.mxu0 0
      %1262 = vmatpush2.bf16.msra.mxu0 0
      %1263 = vmatprep.subr.bf16.mxu0 0
      %1264 = vmatpush2.bf16.msra.mxu0 0
      %1265 = vmatprep.subr.bf16.mxu0 0
      %1266 = vmatpush2.bf16.msra.mxu0 0
      %1267 = vmatprep.mubr.bf16.mxu0 0
      %1268 = vmatmul.mubr.bf16.gmra.mxu0 %v1233
      %v1269 = vpop.f32.mrf.mxu0
      %v1270 = vadd.f32 0.0, %v1269
      %v1271 = vpop.f32.mrf.mxu0
      %v1272 = vpop.f32.mrf.mxu0
      %v1273 = vadd.f32 0.0, %v1272
      %v1274 = vpop.f32.mrf.mxu0
      %1275 = vdwg.mxu0
      %v1276 = vadd.f32 %v1100, %v1270
      %v1277 = vadd.f32 %v1101, %v1273
      %v1278 = vld [vmem:[%s1013] sm:$0x6]
      %v1279 = vld [vmem:[%s1013 + $0x4] sm:$0x6]
      %v1280 = vld [vmem:[%s1013 + $0x8] sm:$0x6]
      %v1281 = vld [vmem:[%s1013 + $0xc] sm:$0x6]
      %v1287 = vunpack.c.l.s4 1983009808
      %v1288 = vunpack.c.0.s8 %v1287
      %v1289 = vlaneseq
      %v1290 = vshrl.u32 %v1289, 7
      %v1291 = vsub.s32 %v1288, %v1290
      %v1292 = vrot.slane %v1278, %v1291
      %v1293 = vcombine.high %v1292, %v1292
      %v1295 = vunpack.c.l.s4 1983009808
      %v1296 = vunpack.c.0.s8 %v1295
      %v1297 = vlaneseq
      %v1298 = vshrl.u32 %v1297, 7
      %v1299 = vsub.s32 %v1296, %v1298
      %v1300 = vrot.slane %v1279, %v1299
      %v1301 = vcombine.high %v1300, %v1300
      %v1303 = vunpack.c.l.s4 1983009808
      %v1304 = vunpack.c.0.s8 %v1303
      %v1305 = vlaneseq
      %v1306 = vshrl.u32 %v1305, 7
      %v1307 = vsub.s32 %v1304, %v1306
      %v1308 = vrot.slane %v1280, %v1307
      %v1309 = vcombine.high %v1308, %v1308
      %v1311 = vunpack.c.l.s4 1983009808
      %v1312 = vunpack.c.0.s8 %v1311
      %v1313 = vlaneseq
      %v1314 = vshrl.u32 %v1313, 7
      %v1315 = vsub.s32 %v1312, %v1314
      %v1316 = vrot.slane %v1281, %v1315
      %v1317 = vcombine.high %v1316, %v1316
      %v1318 = vrot.slane %v1292, 7
      %v1319 = vrot.slane %v1318, 2
      %v1320 = vrot.slane %v1293, 7
      %v1321 = vsel %vm511, %v1319, %v1320
      %v1322 = vrot.slane %v1300, 7
      %v1323 = vrot.slane %v1322, 2
      %v1324 = vrot.slane %v1301, 7
      %v1325 = vsel %vm511, %v1323, %v1324
      %v1326 = vrot.slane %v1308, 7
      %v1327 = vrot.slane %v1326, 2
      %v1328 = vrot.slane %v1309, 7
      %v1329 = vsel %vm511, %v1327, %v1328
      %v1330 = vrot.slane %v1316, 7
      %v1331 = vrot.slane %v1330, 2
      %v1332 = vrot.slane %v1317, 7
      %v1333 = vsel %vm511, %v1331, %v1332
      %s1334 = scalar_lea.vmem %s1, 128
      %v1335 = vld [vmem:[%s1334] sm:$0xf]
      %v1336 = vld [vmem:[%s1334 + $0x4] sm:$0xf]
      %v1337 = vld [vmem:[%s1334 + $0x8] sm:$0xf]
      %v1338 = vld [vmem:[%s1334 + $0xc] sm:$0xf]
      %v1339 = vcombine.low %v1321, %v1325
      %v1340 = vcombine.low %v1329, %v1333
      %v1342 = vunpack.c.l.s4 1983009808
      %v1343 = vunpack.c.0.s8 %v1342
      %v1344 = vlaneseq
      %v1345 = vshrl.u32 %v1344, 7
      %v1346 = vsub.s32 %v1343, %v1345
      %v1347 = vrot.slane %v1339, %v1346
      %v1349 = vunpack.c.l.s4 1983009808
      %v1350 = vunpack.c.0.s8 %v1349
      %v1351 = vlaneseq
      %v1352 = vshrl.u32 %v1351, 7
      %v1353 = vsub.s32 %v1350, %v1352
      %v1354 = vrot.slane %v1340, %v1353
      %v1355 = vcombine.low %v1347, %v1354
      %v1360 = vunpack.c.l.b16 %v1335
      %v1361 = vunpack.c.l.b16 %v1336
      %v1362 = vunpack.c.l.b16 %v1337
      %v1363 = vunpack.c.l.b16 %v1338
      %v1364 = vpack.c.b16 %v1361, %v1360
      %v1365 = vpack.c.b16 %v1363, %v1362
      %v1369 = vsel %vm343, %v1355, 0
      %1371 = vmatprep.subr.bf16.mxu0 0
      %1372 = vmatpush1.bf16.msra.mxu0 0
      %1373 = vmatprep.subr.bf16.mxu0 0
      %1374 = vmatpush1.bf16.msra.mxu0 0
      %1375 = vmatprep.subr.bf16.mxu0 0
      %1376 = vmatpush1.bf16.msra.mxu0 0
      %1377 = vmatprep.subr.bf16.mxu0 0
      %1378 = vmatpush1.bf16.msra.mxu0 0
      %1379 = vmatprep.subr.bf16.mxu0 0
      %1380 = vmatpush1.bf16.msra.mxu0 0
      %1381 = vmatprep.subr.bf16.mxu0 0
      %1382 = vmatpush1.bf16.msra.mxu0 0
      %1383 = vmatprep.subr.bf16.mxu0 0
      %1384 = vmatpush1.bf16.msra.mxu0 %v1365
      %1385 = vmatprep.subr.bf16.mxu0 0
      %1386 = vmatpush1.bf16.msra.mxu0 %v1364
      %1387 = vmatprep.subr.bf16.mxu0 0
      %1388 = vmatpush2.bf16.msra.mxu0 0
      %1389 = vmatprep.subr.bf16.mxu0 0
      %1390 = vmatpush2.bf16.msra.mxu0 0
      %1391 = vmatprep.subr.bf16.mxu0 0
      %1392 = vmatpush2.bf16.msra.mxu0 0
      %1393 = vmatprep.subr.bf16.mxu0 0
      %1394 = vmatpush2.bf16.msra.mxu0 0
      %1395 = vmatprep.subr.bf16.mxu0 0
      %1396 = vmatpush2.bf16.msra.mxu0 0
      %1397 = vmatprep.subr.bf16.mxu0 0
      %1398 = vmatpush2.bf16.msra.mxu0 0
      %1399 = vmatprep.subr.bf16.mxu0 0
      %1400 = vmatpush2.bf16.msra.mxu0 0
      %1401 = vmatprep.subr.bf16.mxu0 0
      %1402 = vmatpush2.bf16.msra.mxu0 0
      %1403 = vmatprep.mubr.bf16.mxu0 0
      %1404 = vmatmul.mubr.bf16.gmra.mxu0 %v1369
      %v1405 = vpop.f32.mrf.mxu0
      %v1406 = vadd.f32 0.0, %v1405
      %v1407 = vpop.f32.mrf.mxu0
      %v1408 = vpop.f32.mrf.mxu0
      %v1409 = vadd.f32 0.0, %v1408
      %v1410 = vpop.f32.mrf.mxu0
      %1411 = vdwg.mxu0
      %v1412 = vadd.f32 %v1276, %v1406
      %v1413 = vadd.f32 %v1277, %v1409
      %v1414 = vld [vmem:[%s2] sm:$0x1]
      %v1416 = vlaneseq
      %v1417 = vshrl.u32 %v1416, 7
      %v1418 = vsub.s32 0, %v1417
      %v1419 = vrot.slane %v1414, %v1418
      %v1421 = vadd.f32 %v1412, %v1419
      %v1422 = vadd.f32 %v1413, %v1419
      %v1425 = vcombine.high %v1421, %v1421
      %v1426 = vcombine.high %v1422, %v1422
      %v1429 = vpack.c.bf16 %v1421, %v1421
      %v1430 = vpack.c.bf16 %v1425, %v1425
      %v1431 = vpack.c.bf16 %v1422, %v1422
      %v1432 = vpack.c.bf16 %v1426, %v1426
      %vm1433 = vcmask 156672
      %1434 = vst.msk [vmem:[%s192] sm:$0x3] %vm1433, %v1429
      %1435 = vst.msk [vmem:[%s192 + $0x2] sm:$0x3] %vm1433, %v1430
      %1436 = vst.msk [vmem:[%s192 + $0x4] sm:$0x3] %vm1433, %v1431
      %1437 = vst.msk [vmem:[%s192 + $0x6] sm:$0x3] %vm1433, %v1432
      %s1438 = smul.u32 4, %s19
      %p1439 = scmp.lt.s32.totalorder %s18, 1
      %s1440 = scalar_select %p1439, %s18, 1
      %p1441 = scmp.lt.s32.totalorder %s1438, 3
      %s1442 = scalar_select %p1441, %s1438, 3
      %s1443 = smul.addr %s1440, 4
      %s1444 = sadd.s32 %s1442, %s1443
      %s1445 = smul.addr %s1444, 2
      %s1446 = scalar_lea.vmem %s3, %s1445
      // Predicated region
      $region33: #{_lambda_.23} parent=31 // pred_check
        %p1447 = pneg %p114
      $region34: #{_lambda_.23} parent=31 // pred_check_branch
        %1449 = sbr.rel (%p1447) target = $region36
      $region35: #{_lambda_.23} parent=31 // pred_region
        %s1450 = smul.u32 4, %s19
      $region36: #{_lambda_.23} parent=31 // pred_fallthru
        _
    $region32: #{_lambda_.23} parent=5 // pred_fallthru
      _
    %p1451 = scmp.le.s32.totalorder 2, %s9
    // Predicated region
    $region37: #{_lambda_.23} parent=5 // pred_check
      %p1452 = pneg %p1451
    $region38: #{_lambda_.23} parent=5 // pred_check_branch
      %1454 = sbr.rel (%p1452) target = $region40
    $region39: #{_lambda_.23} parent=5 // pred_region
      %s1455 = ssub.s32 %s9, 2
      // Predicated region
      $region41: #{_lambda_.23} parent=39 // pred_check
        %p1456 = pneg %p120
      $region42: #{_lambda_.23} parent=39 // pred_check_branch
        %1458 = sbr.rel (%p1456) target = $region44
      $region43: #{_lambda_.23} parent=39 // pred_region
        %s1459 = smul.u32 4, %s21
        %p1460 = scmp.lt.s32.totalorder %s20, 1
        %s1461 = scalar_select %p1460, %s20, 1
        %p1462 = scmp.lt.s32.totalorder %s1459, 3
        %s1463 = scalar_select %p1462, %s1459, 3
        %s1464 = smul.addr %s1461, 4
        %s1465 = sadd.s32 %s1463, %s1464
        %s1466 = smul.addr %s1465, 2
        %s1467 = scalar_lea.vmem %s3, %s1466
      $region44: #{_lambda_.23} parent=39 // pred_fallthru
        _
    $region40: #{_lambda_.23} parent=5 // pred_fallthru
      _
  $region6: #{_lambda_.23} parent=0 // loop_footer
    %s13 = sadd.s32 1, %s9
  $region7: #{_lambda_.23} parent=0 // loop_footer_branch
    %8 = sbr.rel target = $region3
  $region8: #{_lambda_.23} parent=0 // loop_exit
    _

</llo_original>
